<compile_context>
chip_gen: v7x
topology: tpu7x:2x2x1
jax: 0.10.0
libtpu: 0.0.40
codegen_flags: <defaults>
</compile_context>

<pallas_src>
import functools

import jax
import jax.numpy as jnp
from jax import lax
from jax.experimental import pallas as pl
from jax.experimental.pallas import tpu as pltpu


# ----------------------------------------------------------------------------
# Pallas kernel: conv1 (1x1) -> irnn1 -> conv2 (1x1 over 4C) -> irnn2
#                -> conv3 (1x1 over 4C) -> relu -> conv_out (C->1) -> sigmoid
# One grid step processes one batch image; activations are (H*W, C).
# ----------------------------------------------------------------------------
def sam_kernel(x_ref, w1_ref, b1_ref, s1_ref, t1_ref, w2_ref, b2_ref,
               s2_ref, t2_ref, w3_ref, b3_ref, wout_ref, out_ref, pad_s,
               *, H, W):
    _, HW, C = x_ref.shape

    # Shift masks, computed once and reused by both irnn layers.
    rr = lax.broadcasted_iota(jnp.int32, (HW, C), 0)              # flat row id
    jj = lax.broadcasted_iota(jnp.int32, (W, C), 0)               # column id
    jj = jnp.broadcast_to(jj[None], (H, W, C)).reshape(HW, C)
    masks = (rr >= W,                # up    : row i >= 1
             jj < W - 1,             # right : col j <= W-2
             rr < (H - 1) * W,       # down  : row i <= H-2
             jj >= 1)                # left  : col j >= 1
    # Read offsets into the (H+2, W+2, C) padded scratch that holds h at
    # [1:H+1, 1:W+1]; boundary garbage is never selected by the masks.
    offs = ((0, 1), (1, 2), (2, 1), (1, 0))   # up, right, down, left

    # conv1: 1x1 conv with bias (C -> C); bf16 operands, f32 accumulation.
    x2d = x_ref[0]                                                # (HW, C) f32
    h = jnp.dot(x2d.astype(jnp.bfloat16), w1_ref[...],
                preferred_element_type=jnp.float32) + b1_ref[...]

    def irnn_then_conv(h2d, s_ref, t_ref, w_ref, b_ref):
        """irnn_layer + the 1x1 conv over the channel-concat of 4 directions.
        cat([up,right,down,left]) @ W == sum_k dir_k @ W_k, done as a single
        batched bf16 matmul."""
        # Single scratch store of h so each direction can read a full-size
        # shifted view (no per-direction tensor copies).
        pad_s[1:H + 1, 1:W + 1, :] = h2d.reshape(H, W, C)
        dirs = []
        for k in range(4):
            oi, oj = offs[k]
            shifted = pad_s[oi:oi + H, oj:oj + W, :].reshape(HW, C)
            scale = s_ref[k:k + 1, :]                             # (1, C)
            bias = t_ref[k:k + 1, :]                              # (1, C)
            # depthwise 1x1 conv fused into the shifted ReLU.
            d = jnp.where(masks[k],
                          jnp.maximum(shifted * scale + bias + h2d, 0.0),
                          h2d)
            dirs.append(d.astype(jnp.bfloat16))
        stack = jnp.stack(dirs, axis=0)                           # (4, HW, C)
        prod = jnp.matmul(stack, w_ref[...],                      # (4, HW, C)
                          preferred_element_type=jnp.float32)
        return prod[0] + prod[1] + prod[2] + prod[3] + b_ref[...]  # (HW, C)

    h2 = irnn_then_conv(h, s1_ref, t1_ref, w2_ref, b2_ref)
    h3 = jnp.maximum(irnn_then_conv(h2, s2_ref, t2_ref, w3_ref, b3_ref), 0.0)

    # conv_out (C -> 1, no bias), computed transposed so the result is the
    # lane-dense (1, HW) layout that matches the output block, then sigmoid.
    logits = lax.dot_general(wout_ref[...], h3,
                             (((1,), (1,)), ((), ())),
                             preferred_element_type=jnp.float32)  # (1, HW)
    out_ref[...] = (1.0 / (1.0 + jnp.exp(-logits))).reshape(1, 1, HW)


# ----------------------------------------------------------------------------
# Parameters
# ----------------------------------------------------------------------------
def make_sam_params(key, in_channels, out_channels):
    assert in_channels == out_channels, "PyTorch forward requires in_channels == out_channels"
    C = out_channels
    ks = jax.random.split(key, 16)
    bf16 = jnp.bfloat16

    def init(k, shape, scale):
        return jax.random.normal(k, shape, jnp.float32) * scale

    return dict(
        # conv1 (1x1, C->C, bias); weight stored bf16 for the MXU
        w1=init(ks[0], (C, C), 0.2).astype(bf16), b1=init(ks[1], (1, C), 0.1),
        # irnn1 depthwise weights/biases, rows = [up, right, down, left]
        s1=init(ks[2], (4, C), 0.5), t1=init(ks[3], (4, C), 0.1),
        # conv2 (1x1, 4C->C, bias), weight split per direction: (4, C, C) bf16
        w2=init(ks[4], (4, C, C), 0.1).astype(bf16), b2=init(ks[5], (1, C), 0.1),
        # irnn2
        s2=init(ks[6], (4, C), 0.5), t2=init(ks[7], (4, C), 0.1),
        # conv3 (1x1, 4C->C, bias)
        w3=init(ks[8], (4, C, C), 0.1).astype(bf16), b3=init(ks[9], (1, C), 0.1),
        # conv_out (1x1, C->1, no bias), stored as (1, C) f32
        wout=init(ks[10], (1, C), 0.2),
        # attention branch (computed but its output never reaches the mask)
        aw1=init(ks[11], (3, 3, in_channels, in_channels // 2), 0.1),
        ab1=init(ks[12], (in_channels // 2,), 0.05),
        aw2=init(ks[13], (3, 3, in_channels // 2, in_channels // 2), 0.1),
        ab2=init(ks[14], (in_channels // 2,), 0.05),
        aw3=init(ks[15], (1, 1, in_channels // 2, 4), 0.1),
        ab3=jnp.zeros((4,), jnp.float32),
    )


def attention_forward(x_nhwc, p):
    """Attention sub-module (plain JAX glue; dead code w.r.t. the output mask,
    exactly like the non-in-place `.mul(...)` calls in the PyTorch forward)."""
    dn = ("NHWC", "HWIO", "NHWC")
    y = lax.conv_general_dilated(x_nhwc, p["aw1"], (1, 1), "SAME", dimension_numbers=dn) + p["ab1"]
    y = jnp.maximum(y, 0.0)
    y = lax.conv_general_dilated(y, p["aw2"], (1, 1), "SAME", dimension_numbers=dn) + p["ab2"]
    y = jnp.maximum(y, 0.0)
    y = lax.conv_general_dilated(y, p["aw3"], (1, 1), "SAME", dimension_numbers=dn) + p["ab3"]
    return 1.0 / (1.0 + jnp.exp(-y))


# ----------------------------------------------------------------------------
# Wrapper
# ----------------------------------------------------------------------------
def sam_forward(x_nchw, params, attention=True):
    x = jnp.transpose(x_nchw, (0, 2, 3, 1)).astype(jnp.float32)   # NCHW -> NHWC
    B, H, W, C = x.shape
    HW = H * W

    if attention:
        # Matches PyTorch: computed, then discarded (Tensor.mul is not in-place).
        _ = attention_forward(x, params)

    x_flat = x.reshape(B, HW, C)          # channels stay on the lane dim

    args = (x_flat, params["w1"], params["b1"], params["s1"], params["t1"],
            params["w2"], params["b2"], params["s2"], params["t2"],
            params["w3"], params["b3"], params["wout"])

    def rep_spec(a):
        nd = a.ndim
        return pl.BlockSpec(a.shape, lambda b, nd=nd: (0,) * nd)

    in_specs = ([pl.BlockSpec((1, HW, C), lambda b: (b, 0, 0))]
                + [rep_spec(a) for a in args[1:]])

    # Explicit scoped-VMEM budget: double-buffered blocks + scratch + headroom
    # for live temporaries, clamped to a safe range across v5e/v6e/v7x.
    est = 4 * (2 * HW * C + (H + 2) * (W + 2) * C + 2 * HW) + 10 * 4 * HW * C
    vmem_limit = int(min(96 * 1024 * 1024, max(32 * 1024 * 1024, est)))

    out = pl.pallas_call(
        functools.partial(sam_kernel, H=H, W=W),
        out_shape=jax.ShapeDtypeStruct((B, 1, HW), jnp.float32),
        grid=(B,),
        in_specs=in_specs,
        out_specs=pl.BlockSpec((1, 1, HW), lambda b: (b, 0, 0)),
        scratch_shapes=[pltpu.VMEM((H + 2, W + 2, C), jnp.float32)],
        compiler_params=pltpu.CompilerParams(
            dimension_semantics=("parallel",),
            vmem_limit_bytes=vmem_limit),
    )(*args)

    return out.reshape(B, 1, H, W)                                # NCHW mask


# ----------------------------------------------------------------------------
# Pure-JAX f32 reference (mirrors the PyTorch forward semantics)
# ----------------------------------------------------------------------------
def sam_reference(x_nchw, params):
    x = jnp.transpose(x_nchw, (0, 2, 3, 1)).astype(jnp.float32)
    B, H, W, C = x.shape
    hi = lax.Precision.HIGHEST
    f32 = jnp.float32

    def c1x1(h, w, b=None):
        y = jnp.einsum("bhwc,cd->bhwd", h, w.astype(f32), precision=hi)
        return y if b is None else y + b.reshape(1, 1, 1, -1)

    def irnn_ref(h, s, t):
        def dw(i):
            return h * s[i].reshape(1, 1, 1, C) + t[i].reshape(1, 1, 1, C)
        yu, yr, yd, yl = dw(0), dw(1), dw(2), dw(3)
        tu = h.at[:, 1:, :, :].set(jnp.maximum(yu[:, :H - 1] + h[:, 1:], 0.0))
        tr = h.at[:, :, :W - 1, :].set(jnp.maximum(yr[:, :, 1:] + h[:, :, :W - 1], 0.0))
        td = h.at[:, :H - 1, :, :].set(jnp.maximum(yd[:, 1:] + h[:, :H - 1], 0.0))
        tl = h.at[:, :, 1:, :].set(jnp.maximum(yl[:, :, :W - 1] + h[:, :, 1:], 0.0))
        return tu, tr, td, tl

    h = c1x1(x, params["w1"], params["b1"][0])
    cat1 = jnp.concatenate(irnn_ref(h, params["s1"], params["t1"]), axis=-1)
    w2 = jnp.concatenate([params["w2"][i].astype(f32) for i in range(4)], axis=0)
    h2 = c1x1(cat1, w2, params["b2"][0])
    cat2 = jnp.concatenate(irnn_ref(h2, params["s2"], params["t2"]), axis=-1)
    w3 = jnp.concatenate([params["w3"][i].astype(f32) for i in range(4)], axis=0)
    h3 = jnp.maximum(c1x1(cat2, w3, params["b3"][0]), 0.0)
    logits = c1x1(h3, params["wout"].T)
    return jnp.transpose(1.0 / (1.0 + jnp.exp(-logits)), (0, 3, 1, 2))


if __name__ == "__main__":
    key = jax.random.PRNGKey(0)
    kx, kp = jax.random.split(key)

    B, H, W = 2, 16, 16
    in_channels = out_channels = 16          # forward() requires them equal
    x = jax.random.normal(kx, (B, in_channels, H, W), jnp.float32)
    params = make_sam_params(kp, in_channels, out_channels)

    mask = jax.block_until_ready(sam_forward(x, params, attention=True))
    assert mask.shape == (B, 1, H, W), mask.shape

    ref = sam_reference(x, params)
    max_err = float(jnp.max(jnp.abs(mask - ref)))
    # bf16 matmul operands (f32 accumulation) -> relaxed tolerance vs f32 ref.
    if not jnp.allclose(mask, ref, atol=2e-2, rtol=2e-2):
        raise AssertionError(f"Pallas SAM kernel mismatch, max abs err {max_err}")

    print("KERNEL_OK")
</pallas_src>

<mosaic_0001>
module attributes {stable_mosaic.version = 11 : i64} {
  func.func @sam_kernel(%arg0: i32, %arg1: memref<1x256x16xf32, #tpu.memory_space<vmem>>, %arg2: memref<16x16xbf16, #tpu.memory_space<vmem>>, %arg3: memref<1x16xf32, #tpu.memory_space<vmem>>, %arg4: memref<4x16xf32, #tpu.memory_space<vmem>>, %arg5: memref<4x16xf32, #tpu.memory_space<vmem>>, %arg6: memref<4x16x16xbf16, #tpu.memory_space<vmem>>, %arg7: memref<1x16xf32, #tpu.memory_space<vmem>>, %arg8: memref<4x16xf32, #tpu.memory_space<vmem>>, %arg9: memref<4x16xf32, #tpu.memory_space<vmem>>, %arg10: memref<4x16x16xbf16, #tpu.memory_space<vmem>>, %arg11: memref<1x16xf32, #tpu.memory_space<vmem>>, %arg12: memref<1x16xf32, #tpu.memory_space<vmem>>, %arg13: memref<1x1x256xf32, #tpu.memory_space<vmem>>, %arg14: memref<18x18x16xf32, #tpu.memory_space<vmem>>) attributes {dimension_semantics = [#tpu.dimension_semantics<parallel>], iteration_bounds = array<i64: 2>, scalar_prefetch = 0 : i64, scratch_operands = 1 : i64, tpu.core_type = #tpu.core_type<tc>, window_params = [{transform_indices = @transform_0, window_bounds = array<i64: 1, 256, 16>}, {pipeline_mode = #tpu.pipeline_mode<synchronous>, transform_indices = @transform_1, window_bounds = array<i64: 16, 16>}, {pipeline_mode = #tpu.pipeline_mode<synchronous>, transform_indices = @transform_2, window_bounds = array<i64: 1, 16>}, {pipeline_mode = #tpu.pipeline_mode<synchronous>, transform_indices = @transform_3, window_bounds = array<i64: 4, 16>}, {pipeline_mode = #tpu.pipeline_mode<synchronous>, transform_indices = @transform_4, window_bounds = array<i64: 4, 16>}, {pipeline_mode = #tpu.pipeline_mode<synchronous>, transform_indices = @transform_5, window_bounds = array<i64: 4, 16, 16>}, {pipeline_mode = #tpu.pipeline_mode<synchronous>, transform_indices = @transform_6, window_bounds = array<i64: 1, 16>}, {pipeline_mode = #tpu.pipeline_mode<synchronous>, transform_indices = @transform_7, window_bounds = array<i64: 4, 16>}, {pipeline_mode = #tpu.pipeline_mode<synchronous>, transform_indices = @transform_8, window_bounds = array<i64: 4, 16>}, {pipeline_mode = #tpu.pipeline_mode<synchronous>, transform_indices = @transform_9, window_bounds = array<i64: 4, 16, 16>}, {pipeline_mode = #tpu.pipeline_mode<synchronous>, transform_indices = @transform_10, window_bounds = array<i64: 1, 16>}, {pipeline_mode = #tpu.pipeline_mode<synchronous>, transform_indices = @transform_11, window_bounds = array<i64: 1, 16>}, {transform_indices = @transform_12, window_bounds = array<i64: 1, 1, 256>}]} {
    %0 = tpu.iota {dimensions = array<i32: 0>} : vector<256x16xi32>
    %1 = tpu.iota {dimensions = array<i32: 0>} : vector<16x16xi32>
    %2 = vector.shape_cast %1 : vector<16x16xi32> to vector<1x16x16xi32>
    %3 = vector.shape_cast %2 : vector<1x16x16xi32> to vector<1x16x16xi32>
    %4 = vector.broadcast %3 : vector<1x16x16xi32> to vector<16x16x16xi32>
    %5 = vector.shape_cast %4 : vector<16x16x16xi32> to vector<256x16xi32>
    %c16_i32 = arith.constant 16 : i32
    %6 = vector.broadcast %c16_i32 : i32 to vector<256x16xi32>
    %7 = arith.cmpi sge, %0, %6 : vector<256x16xi32>
    %c15_i32 = arith.constant 15 : i32
    %8 = vector.broadcast %c15_i32 : i32 to vector<256x16xi32>
    %9 = arith.cmpi slt, %5, %8 : vector<256x16xi32>
    %c240_i32 = arith.constant 240 : i32
    %10 = vector.broadcast %c240_i32 : i32 to vector<256x16xi32>
    %11 = arith.cmpi slt, %0, %10 : vector<256x16xi32>
    %c1_i32 = arith.constant 1 : i32
    %12 = vector.broadcast %c1_i32 : i32 to vector<256x16xi32>
    %13 = arith.cmpi sge, %5, %12 : vector<256x16xi32>
    %c0 = arith.constant 0 : index
    %c0_0 = arith.constant 0 : index
    %c0_1 = arith.constant 0 : index
    %14 = vector.load %arg1[%c0, %c0_0, %c0_1] : memref<1x256x16xf32, #tpu.memory_space<vmem>>, vector<1x256x16xf32>
    %15 = vector.shape_cast %14 : vector<1x256x16xf32> to vector<256x16xf32>
    %16 = arith.truncf %15 : vector<256x16xf32> to vector<256x16xbf16>
    %c0_2 = arith.constant 0 : index
    %c0_3 = arith.constant 0 : index
    %17 = vector.load %arg2[%c0_2, %c0_3] : memref<16x16xbf16, #tpu.memory_space<vmem>>, vector<16x16xbf16>
    %cst = arith.constant dense<0.000000e+00> : vector<256x16xf32>
    %18 = tpu.matmul %16, %17, %cst {dimension_numbers = #tpu.dot_dimension_numbers<[1], [0], [0], [1], [0, 0, 1, 1], [], []>} : vector<256x16xbf16>, vector<16x16xbf16>, vector<256x16xf32> -> vector<256x16xf32>
    %c0_4 = arith.constant 0 : index
    %c0_5 = arith.constant 0 : index
    %19 = vector.load %arg3[%c0_4, %c0_5] : memref<1x16xf32, #tpu.memory_space<vmem>>, vector<1x16xf32>
    %20 = vector.broadcast %19 : vector<1x16xf32> to vector<256x16xf32>
    %21 = arith.addf %18, %20 : vector<256x16xf32>
    %22 = vector.shape_cast %21 : vector<256x16xf32> to vector<16x16x16xf32>
    %c1 = arith.constant 1 : index
    %c1_6 = arith.constant 1 : index
    %c0_7 = arith.constant 0 : index
    %23 = vector.load %arg14[%c1, %c1_6, %c0_7] : memref<18x18x16xf32, #tpu.memory_space<vmem>>, vector<16x16x16xf32>
    tpu.vector_store %arg14[%c1, %c1_6, %c0_7], %22 {strides = array<i32>} : memref<18x18x16xf32, #tpu.memory_space<vmem>>, vector<16x16x16xf32>,
    %c0_8 = arith.constant 0 : index
    %c1_9 = arith.constant 1 : index
    %c0_10 = arith.constant 0 : index
    %24 = vector.load %arg14[%c0_8, %c1_9, %c0_10] : memref<18x18x16xf32, #tpu.memory_space<vmem>>, vector<16x16x16xf32>
    %25 = vector.shape_cast %24 : vector<16x16x16xf32> to vector<256x16xf32>
    %c0_11 = arith.constant 0 : index
    %c0_12 = arith.constant 0 : index
    %26 = vector.load %arg4[%c0_11, %c0_12] : memref<4x16xf32, #tpu.memory_space<vmem>>, vector<1x16xf32>
    %c0_13 = arith.constant 0 : index
    %c0_14 = arith.constant 0 : index
    %27 = vector.load %arg5[%c0_13, %c0_14] : memref<4x16xf32, #tpu.memory_space<vmem>>, vector<1x16xf32>
    %28 = vector.broadcast %26 : vector<1x16xf32> to vector<256x16xf32>
    %29 = arith.mulf %25, %28 : vector<256x16xf32>
    %30 = vector.broadcast %27 : vector<1x16xf32> to vector<256x16xf32>
    %31 = arith.addf %29, %30 : vector<256x16xf32>
    %32 = arith.addf %31, %21 : vector<256x16xf32>
    %cst_15 = arith.constant 0.000000e+00 : f32
    %33 = vector.broadcast %cst_15 : f32 to vector<256x16xf32>
    %34 = arith.maximumf %32, %33 : vector<256x16xf32>
    %35 = arith.select %7, %34, %21 : vector<256x16xi1>, vector<256x16xf32>
    %36 = arith.truncf %35 : vector<256x16xf32> to vector<256x16xbf16>
    %c1_16 = arith.constant 1 : index
    %c2 = arith.constant 2 : index
    %c0_17 = arith.constant 0 : index
    %37 = vector.load %arg14[%c1_16, %c2, %c0_17] : memref<18x18x16xf32, #tpu.memory_space<vmem>>, vector<16x16x16xf32>
    %38 = vector.shape_cast %37 : vector<16x16x16xf32> to vector<256x16xf32>
    %c1_18 = arith.constant 1 : index
    %c0_19 = arith.constant 0 : index
    %39 = vector.load %arg4[%c1_18, %c0_19] : memref<4x16xf32, #tpu.memory_space<vmem>>, vector<1x16xf32>
    %c1_20 = arith.constant 1 : index
    %c0_21 = arith.constant 0 : index
    %40 = vector.load %arg5[%c1_20, %c0_21] : memref<4x16xf32, #tpu.memory_space<vmem>>, vector<1x16xf32>
    %41 = vector.broadcast %39 : vector<1x16xf32> to vector<256x16xf32>
    %42 = arith.mulf %38, %41 : vector<256x16xf32>
    %43 = vector.broadcast %40 : vector<1x16xf32> to vector<256x16xf32>
    %44 = arith.addf %42, %43 : vector<256x16xf32>
    %45 = arith.addf %44, %21 : vector<256x16xf32>
    %cst_22 = arith.constant 0.000000e+00 : f32
    %46 = vector.broadcast %cst_22 : f32 to vector<256x16xf32>
    %47 = arith.maximumf %45, %46 : vector<256x16xf32>
    %48 = arith.select %9, %47, %21 : vector<256x16xi1>, vector<256x16xf32>
    %49 = arith.truncf %48 : vector<256x16xf32> to vector<256x16xbf16>
    %c2_23 = arith.constant 2 : index
    %c1_24 = arith.constant 1 : index
    %c0_25 = arith.constant 0 : index
    %50 = vector.load %arg14[%c2_23, %c1_24, %c0_25] : memref<18x18x16xf32, #tpu.memory_space<vmem>>, vector<16x16x16xf32>
    %51 = vector.shape_cast %50 : vector<16x16x16xf32> to vector<256x16xf32>
    %c2_26 = arith.constant 2 : index
    %c0_27 = arith.constant 0 : index
    %52 = vector.load %arg4[%c2_26, %c0_27] : memref<4x16xf32, #tpu.memory_space<vmem>>, vector<1x16xf32>
    %c2_28 = arith.constant 2 : index
    %c0_29 = arith.constant 0 : index
    %53 = vector.load %arg5[%c2_28, %c0_29] : memref<4x16xf32, #tpu.memory_space<vmem>>, vector<1x16xf32>
    %54 = vector.broadcast %52 : vector<1x16xf32> to vector<256x16xf32>
    %55 = arith.mulf %51, %54 : vector<256x16xf32>
    %56 = vector.broadcast %53 : vector<1x16xf32> to vector<256x16xf32>
    %57 = arith.addf %55, %56 : vector<256x16xf32>
    %58 = arith.addf %57, %21 : vector<256x16xf32>
    %cst_30 = arith.constant 0.000000e+00 : f32
    %59 = vector.broadcast %cst_30 : f32 to vector<256x16xf32>
    %60 = arith.maximumf %58, %59 : vector<256x16xf32>
    %61 = arith.select %11, %60, %21 : vector<256x16xi1>, vector<256x16xf32>
    %62 = arith.truncf %61 : vector<256x16xf32> to vector<256x16xbf16>
    %c1_31 = arith.constant 1 : index
    %c0_32 = arith.constant 0 : index
    %c0_33 = arith.constant 0 : index
    %63 = vector.load %arg14[%c1_31, %c0_32, %c0_33] : memref<18x18x16xf32, #tpu.memory_space<vmem>>, vector<16x16x16xf32>
    %64 = vector.shape_cast %63 : vector<16x16x16xf32> to vector<256x16xf32>
    %c3 = arith.constant 3 : index
    %c0_34 = arith.constant 0 : index
    %65 = vector.load %arg4[%c3, %c0_34] : memref<4x16xf32, #tpu.memory_space<vmem>>, vector<1x16xf32>
    %c3_35 = arith.constant 3 : index
    %c0_36 = arith.constant 0 : index
    %66 = vector.load %arg5[%c3_35, %c0_36] : memref<4x16xf32, #tpu.memory_space<vmem>>, vector<1x16xf32>
    %67 = vector.broadcast %65 : vector<1x16xf32> to vector<256x16xf32>
    %68 = arith.mulf %64, %67 : vector<256x16xf32>
    %69 = vector.broadcast %66 : vector<1x16xf32> to vector<256x16xf32>
    %70 = arith.addf %68, %69 : vector<256x16xf32>
    %71 = arith.addf %70, %21 : vector<256x16xf32>
    %cst_37 = arith.constant 0.000000e+00 : f32
    %72 = vector.broadcast %cst_37 : f32 to vector<256x16xf32>
    %73 = arith.maximumf %71, %72 : vector<256x16xf32>
    %74 = arith.select %13, %73, %21 : vector<256x16xi1>, vector<256x16xf32>
    %75 = arith.truncf %74 : vector<256x16xf32> to vector<256x16xbf16>
    %76 = vector.shape_cast %36 : vector<256x16xbf16> to vector<1x256x16xbf16>
    %77 = vector.shape_cast %49 : vector<256x16xbf16> to vector<1x256x16xbf16>
    %78 = vector.shape_cast %62 : vector<256x16xbf16> to vector<1x256x16xbf16>
    %79 = vector.shape_cast %75 : vector<256x16xbf16> to vector<1x256x16xbf16>
    %80 = tpu.concatenate %76, %77, %78, %79 in 0 : vector<1x256x16xbf16>, vector<1x256x16xbf16>, vector<1x256x16xbf16>, vector<1x256x16xbf16> -> vector<4x256x16xbf16>
    %c0_38 = arith.constant 0 : index
    %c0_39 = arith.constant 0 : index
    %c0_40 = arith.constant 0 : index
    %81 = vector.load %arg6[%c0_38, %c0_39, %c0_40] : memref<4x16x16xbf16, #tpu.memory_space<vmem>>, vector<4x16x16xbf16>
    %cst_41 = arith.constant dense<0.000000e+00> : vector<4x256x16xf32>
    %82 = tpu.matmul %80, %81, %cst_41 {dimension_numbers = #tpu.dot_dimension_numbers<[2], [1], [1], [2], [0, 0, 0, 1, 1, 2], [0], [0]>} : vector<4x256x16xbf16>, vector<4x16x16xbf16>, vector<4x256x16xf32> -> vector<4x256x16xf32>
    %83 = vector.extract_strided_slice %82 {offsets = [0, 0, 0], sizes = [1, 256, 16], strides = [1, 1, 1]} : vector<4x256x16xf32> to vector<1x256x16xf32>
    %84 = vector.shape_cast %83 : vector<1x256x16xf32> to vector<256x16xf32>
    %85 = vector.extract_strided_slice %82 {offsets = [1, 0, 0], sizes = [1, 256, 16], strides = [1, 1, 1]} : vector<4x256x16xf32> to vector<1x256x16xf32>
    %86 = vector.shape_cast %85 : vector<1x256x16xf32> to vector<256x16xf32>
    %87 = arith.addf %84, %86 : vector<256x16xf32>
    %88 = vector.extract_strided_slice %82 {offsets = [2, 0, 0], sizes = [1, 256, 16], strides = [1, 1, 1]} : vector<4x256x16xf32> to vector<1x256x16xf32>
    %89 = vector.shape_cast %88 : vector<1x256x16xf32> to vector<256x16xf32>
    %90 = arith.addf %87, %89 : vector<256x16xf32>
    %91 = vector.extract_strided_slice %82 {offsets = [3, 0, 0], sizes = [1, 256, 16], strides = [1, 1, 1]} : vector<4x256x16xf32> to vector<1x256x16xf32>
    %92 = vector.shape_cast %91 : vector<1x256x16xf32> to vector<256x16xf32>
    %93 = arith.addf %90, %92 : vector<256x16xf32>
    %c0_42 = arith.constant 0 : index
    %c0_43 = arith.constant 0 : index
    %94 = vector.load %arg7[%c0_42, %c0_43] : memref<1x16xf32, #tpu.memory_space<vmem>>, vector<1x16xf32>
    %95 = vector.broadcast %94 : vector<1x16xf32> to vector<256x16xf32>
    %96 = arith.addf %93, %95 : vector<256x16xf32>
    %97 = vector.shape_cast %96 : vector<256x16xf32> to vector<16x16x16xf32>
    %c1_44 = arith.constant 1 : index
    %c1_45 = arith.constant 1 : index
    %c0_46 = arith.constant 0 : index
    %98 = vector.load %arg14[%c1_44, %c1_45, %c0_46] : memref<18x18x16xf32, #tpu.memory_space<vmem>>, vector<16x16x16xf32>
    tpu.vector_store %arg14[%c1_44, %c1_45, %c0_46], %97 {strides = array<i32>} : memref<18x18x16xf32, #tpu.memory_space<vmem>>, vector<16x16x16xf32>,
    %c0_47 = arith.constant 0 : index
    %c1_48 = arith.constant 1 : index
    %c0_49 = arith.constant 0 : index
    %99 = vector.load %arg14[%c0_47, %c1_48, %c0_49] : memref<18x18x16xf32, #tpu.memory_space<vmem>>, vector<16x16x16xf32>
    %100 = vector.shape_cast %99 : vector<16x16x16xf32> to vector<256x16xf32>
    %c0_50 = arith.constant 0 : index
    %c0_51 = arith.constant 0 : index
    %101 = vector.load %arg8[%c0_50, %c0_51] : memref<4x16xf32, #tpu.memory_space<vmem>>, vector<1x16xf32>
    %c0_52 = arith.constant 0 : index
    %c0_53 = arith.constant 0 : index
    %102 = vector.load %arg9[%c0_52, %c0_53] : memref<4x16xf32, #tpu.memory_space<vmem>>, vector<1x16xf32>
    %103 = vector.broadcast %101 : vector<1x16xf32> to vector<256x16xf32>
    %104 = arith.mulf %100, %103 : vector<256x16xf32>
    %105 = vector.broadcast %102 : vector<1x16xf32> to vector<256x16xf32>
    %106 = arith.addf %104, %105 : vector<256x16xf32>
    %107 = arith.addf %106, %96 : vector<256x16xf32>
    %cst_54 = arith.constant 0.000000e+00 : f32
    %108 = vector.broadcast %cst_54 : f32 to vector<256x16xf32>
    %109 = arith.maximumf %107, %108 : vector<256x16xf32>
    %110 = arith.select %7, %109, %96 : vector<256x16xi1>, vector<256x16xf32>
    %111 = arith.truncf %110 : vector<256x16xf32> to vector<256x16xbf16>
    %c1_55 = arith.constant 1 : index
    %c2_56 = arith.constant 2 : index
    %c0_57 = arith.constant 0 : index
    %112 = vector.load %arg14[%c1_55, %c2_56, %c0_57] : memref<18x18x16xf32, #tpu.memory_space<vmem>>, vector<16x16x16xf32>
    %113 = vector.shape_cast %112 : vector<16x16x16xf32> to vector<256x16xf32>
    %c1_58 = arith.constant 1 : index
    %c0_59 = arith.constant 0 : index
    %114 = vector.load %arg8[%c1_58, %c0_59] : memref<4x16xf32, #tpu.memory_space<vmem>>, vector<1x16xf32>
    %c1_60 = arith.constant 1 : index
    %c0_61 = arith.constant 0 : index
    %115 = vector.load %arg9[%c1_60, %c0_61] : memref<4x16xf32, #tpu.memory_space<vmem>>, vector<1x16xf32>
    %116 = vector.broadcast %114 : vector<1x16xf32> to vector<256x16xf32>
    %117 = arith.mulf %113, %116 : vector<256x16xf32>
    %118 = vector.broadcast %115 : vector<1x16xf32> to vector<256x16xf32>
    %119 = arith.addf %117, %118 : vector<256x16xf32>
    %120 = arith.addf %119, %96 : vector<256x16xf32>
    %cst_62 = arith.constant 0.000000e+00 : f32
    %121 = vector.broadcast %cst_62 : f32 to vector<256x16xf32>
    %122 = arith.maximumf %120, %121 : vector<256x16xf32>
    %123 = arith.select %9, %122, %96 : vector<256x16xi1>, vector<256x16xf32>
    %124 = arith.truncf %123 : vector<256x16xf32> to vector<256x16xbf16>
    %c2_63 = arith.constant 2 : index
    %c1_64 = arith.constant 1 : index
    %c0_65 = arith.constant 0 : index
    %125 = vector.load %arg14[%c2_63, %c1_64, %c0_65] : memref<18x18x16xf32, #tpu.memory_space<vmem>>, vector<16x16x16xf32>
    %126 = vector.shape_cast %125 : vector<16x16x16xf32> to vector<256x16xf32>
    %c2_66 = arith.constant 2 : index
    %c0_67 = arith.constant 0 : index
    %127 = vector.load %arg8[%c2_66, %c0_67] : memref<4x16xf32, #tpu.memory_space<vmem>>, vector<1x16xf32>
    %c2_68 = arith.constant 2 : index
    %c0_69 = arith.constant 0 : index
    %128 = vector.load %arg9[%c2_68, %c0_69] : memref<4x16xf32, #tpu.memory_space<vmem>>, vector<1x16xf32>
    %129 = vector.broadcast %127 : vector<1x16xf32> to vector<256x16xf32>
    %130 = arith.mulf %126, %129 : vector<256x16xf32>
    %131 = vector.broadcast %128 : vector<1x16xf32> to vector<256x16xf32>
    %132 = arith.addf %130, %131 : vector<256x16xf32>
    %133 = arith.addf %132, %96 : vector<256x16xf32>
    %cst_70 = arith.constant 0.000000e+00 : f32
    %134 = vector.broadcast %cst_70 : f32 to vector<256x16xf32>
    %135 = arith.maximumf %133, %134 : vector<256x16xf32>
    %136 = arith.select %11, %135, %96 : vector<256x16xi1>, vector<256x16xf32>
    %137 = arith.truncf %136 : vector<256x16xf32> to vector<256x16xbf16>
    %c1_71 = arith.constant 1 : index
    %c0_72 = arith.constant 0 : index
    %c0_73 = arith.constant 0 : index
    %138 = vector.load %arg14[%c1_71, %c0_72, %c0_73] : memref<18x18x16xf32, #tpu.memory_space<vmem>>, vector<16x16x16xf32>
    %139 = vector.shape_cast %138 : vector<16x16x16xf32> to vector<256x16xf32>
    %c3_74 = arith.constant 3 : index
    %c0_75 = arith.constant 0 : index
    %140 = vector.load %arg8[%c3_74, %c0_75] : memref<4x16xf32, #tpu.memory_space<vmem>>, vector<1x16xf32>
    %c3_76 = arith.constant 3 : index
    %c0_77 = arith.constant 0 : index
    %141 = vector.load %arg9[%c3_76, %c0_77] : memref<4x16xf32, #tpu.memory_space<vmem>>, vector<1x16xf32>
    %142 = vector.broadcast %140 : vector<1x16xf32> to vector<256x16xf32>
    %143 = arith.mulf %139, %142 : vector<256x16xf32>
    %144 = vector.broadcast %141 : vector<1x16xf32> to vector<256x16xf32>
    %145 = arith.addf %143, %144 : vector<256x16xf32>
    %146 = arith.addf %145, %96 : vector<256x16xf32>
    %cst_78 = arith.constant 0.000000e+00 : f32
    %147 = vector.broadcast %cst_78 : f32 to vector<256x16xf32>
    %148 = arith.maximumf %146, %147 : vector<256x16xf32>
    %149 = arith.select %13, %148, %96 : vector<256x16xi1>, vector<256x16xf32>
    %150 = arith.truncf %149 : vector<256x16xf32> to vector<256x16xbf16>
    %151 = vector.shape_cast %111 : vector<256x16xbf16> to vector<1x256x16xbf16>
    %152 = vector.shape_cast %124 : vector<256x16xbf16> to vector<1x256x16xbf16>
    %153 = vector.shape_cast %137 : vector<256x16xbf16> to vector<1x256x16xbf16>
    %154 = vector.shape_cast %150 : vector<256x16xbf16> to vector<1x256x16xbf16>
    %155 = tpu.concatenate %151, %152, %153, %154 in 0 : vector<1x256x16xbf16>, vector<1x256x16xbf16>, vector<1x256x16xbf16>, vector<1x256x16xbf16> -> vector<4x256x16xbf16>
    %c0_79 = arith.constant 0 : index
    %c0_80 = arith.constant 0 : index
    %c0_81 = arith.constant 0 : index
    %156 = vector.load %arg10[%c0_79, %c0_80, %c0_81] : memref<4x16x16xbf16, #tpu.memory_space<vmem>>, vector<4x16x16xbf16>
    %cst_82 = arith.constant dense<0.000000e+00> : vector<4x256x16xf32>
    %157 = tpu.matmul %155, %156, %cst_82 {dimension_numbers = #tpu.dot_dimension_numbers<[2], [1], [1], [2], [0, 0, 0, 1, 1, 2], [0], [0]>} : vector<4x256x16xbf16>, vector<4x16x16xbf16>, vector<4x256x16xf32> -> vector<4x256x16xf32>
    %158 = vector.extract_strided_slice %157 {offsets = [0, 0, 0], sizes = [1, 256, 16], strides = [1, 1, 1]} : vector<4x256x16xf32> to vector<1x256x16xf32>
    %159 = vector.shape_cast %158 : vector<1x256x16xf32> to vector<256x16xf32>
    %160 = vector.extract_strided_slice %157 {offsets = [1, 0, 0], sizes = [1, 256, 16], strides = [1, 1, 1]} : vector<4x256x16xf32> to vector<1x256x16xf32>
    %161 = vector.shape_cast %160 : vector<1x256x16xf32> to vector<256x16xf32>
    %162 = arith.addf %159, %161 : vector<256x16xf32>
    %163 = vector.extract_strided_slice %157 {offsets = [2, 0, 0], sizes = [1, 256, 16], strides = [1, 1, 1]} : vector<4x256x16xf32> to vector<1x256x16xf32>
    %164 = vector.shape_cast %163 : vector<1x256x16xf32> to vector<256x16xf32>
    %165 = arith.addf %162, %164 : vector<256x16xf32>
    %166 = vector.extract_strided_slice %157 {offsets = [3, 0, 0], sizes = [1, 256, 16], strides = [1, 1, 1]} : vector<4x256x16xf32> to vector<1x256x16xf32>
    %167 = vector.shape_cast %166 : vector<1x256x16xf32> to vector<256x16xf32>
    %168 = arith.addf %165, %167 : vector<256x16xf32>
    %c0_83 = arith.constant 0 : index
    %c0_84 = arith.constant 0 : index
    %169 = vector.load %arg11[%c0_83, %c0_84] : memref<1x16xf32, #tpu.memory_space<vmem>>, vector<1x16xf32>
    %170 = vector.broadcast %169 : vector<1x16xf32> to vector<256x16xf32>
    %171 = arith.addf %168, %170 : vector<256x16xf32>
    %cst_85 = arith.constant 0.000000e+00 : f32
    %172 = vector.broadcast %cst_85 : f32 to vector<256x16xf32>
    %173 = arith.maximumf %171, %172 : vector<256x16xf32>
    %c0_86 = arith.constant 0 : index
    %c0_87 = arith.constant 0 : index
    %174 = vector.load %arg12[%c0_86, %c0_87] : memref<1x16xf32, #tpu.memory_space<vmem>>, vector<1x16xf32>
    %cst_88 = arith.constant dense<0.000000e+00> : vector<1x256xf32>
    %175 = tpu.matmul %174, %173, %cst_88 {dimension_numbers = #tpu.dot_dimension_numbers<[1], [1], [0], [0], [0, 0, 1, 0], [], []>} : vector<1x16xf32>, vector<256x16xf32>, vector<1x256xf32> -> vector<1x256xf32>
    %cst_89 = arith.constant 0.000000e+00 : f32
    %176 = vector.broadcast %cst_89 : f32 to vector<1x256xf32>
    %177 = arith.subf %176, %175 : vector<1x256xf32>
    %178 = math.exp %177 : vector<1x256xf32>
    %cst_90 = arith.constant 1.000000e+00 : f32
    %179 = vector.broadcast %cst_90 : f32 to vector<1x256xf32>
    %180 = arith.addf %179, %178 : vector<1x256xf32>
    %cst_91 = arith.constant 1.000000e+00 : f32
    %181 = vector.broadcast %cst_91 : f32 to vector<1x256xf32>
    %182 = arith.divf %181, %180 : vector<1x256xf32>
    %183 = vector.shape_cast %182 : vector<1x256xf32> to vector<1x1x256xf32>
    %c0_92 = arith.constant 0 : index
    %c0_93 = arith.constant 0 : index
    %c0_94 = arith.constant 0 : index
    %184 = vector.load %arg13[%c0_92, %c0_93, %c0_94] : memref<1x1x256xf32, #tpu.memory_space<vmem>>, vector<1x1x256xf32>
    tpu.vector_store %arg13[%c0_92, %c0_93, %c0_94], %183 {strides = array<i32>} : memref<1x1x256xf32, #tpu.memory_space<vmem>>, vector<1x1x256xf32>,
    return
  }
  func.func @transform_0(%arg0: i32) -> (i32, i32, i32) {
    %c0_i32 = arith.constant 0 : i32
    %c0_i32_0 = arith.constant 0 : i32
    %c0_i32_1 = arith.constant 0 : i32
    return %arg0, %c0_i32, %c0_i32_0 : i32, i32, i32
  }
  func.func @transform_1(%arg0: i32) -> (i32, i32) {
    %c0_i32 = arith.constant 0 : i32
    %c0_i32_0 = arith.constant 0 : i32
    %c0_i32_1 = arith.constant 0 : i32
    return %c0_i32, %c0_i32_0 : i32, i32
  }
  func.func @transform_2(%arg0: i32) -> (i32, i32) {
    %c0_i32 = arith.constant 0 : i32
    %c0_i32_0 = arith.constant 0 : i32
    %c0_i32_1 = arith.constant 0 : i32
    return %c0_i32, %c0_i32_0 : i32, i32
  }
  func.func @transform_3(%arg0: i32) -> (i32, i32) {
    %c0_i32 = arith.constant 0 : i32
    %c0_i32_0 = arith.constant 0 : i32
    %c0_i32_1 = arith.constant 0 : i32
    return %c0_i32, %c0_i32_0 : i32, i32
  }
  func.func @transform_4(%arg0: i32) -> (i32, i32) {
    %c0_i32 = arith.constant 0 : i32
    %c0_i32_0 = arith.constant 0 : i32
    %c0_i32_1 = arith.constant 0 : i32
    return %c0_i32, %c0_i32_0 : i32, i32
  }
  func.func @transform_5(%arg0: i32) -> (i32, i32, i32) {
    %c0_i32 = arith.constant 0 : i32
    %c0_i32_0 = arith.constant 0 : i32
    %c0_i32_1 = arith.constant 0 : i32
    %c0_i32_2 = arith.constant 0 : i32
    return %c0_i32, %c0_i32_0, %c0_i32_1 : i32, i32, i32
  }
  func.func @transform_6(%arg0: i32) -> (i32, i32) {
    %c0_i32 = arith.constant 0 : i32
    %c0_i32_0 = arith.constant 0 : i32
    %c0_i32_1 = arith.constant 0 : i32
    return %c0_i32, %c0_i32_0 : i32, i32
  }
  func.func @transform_7(%arg0: i32) -> (i32, i32) {
    %c0_i32 = arith.constant 0 : i32
    %c0_i32_0 = arith.constant 0 : i32
    %c0_i32_1 = arith.constant 0 : i32
    return %c0_i32, %c0_i32_0 : i32, i32
  }
  func.func @transform_8(%arg0: i32) -> (i32, i32) {
    %c0_i32 = arith.constant 0 : i32
    %c0_i32_0 = arith.constant 0 : i32
    %c0_i32_1 = arith.constant 0 : i32
    return %c0_i32, %c0_i32_0 : i32, i32
  }
  func.func @transform_9(%arg0: i32) -> (i32, i32, i32) {
    %c0_i32 = arith.constant 0 : i32
    %c0_i32_0 = arith.constant 0 : i32
    %c0_i32_1 = arith.constant 0 : i32
    %c0_i32_2 = arith.constant 0 : i32
    return %c0_i32, %c0_i32_0, %c0_i32_1 : i32, i32, i32
  }
  func.func @transform_10(%arg0: i32) -> (i32, i32) {
    %c0_i32 = arith.constant 0 : i32
    %c0_i32_0 = arith.constant 0 : i32
    %c0_i32_1 = arith.constant 0 : i32
    return %c0_i32, %c0_i32_0 : i32, i32
  }
  func.func @transform_11(%arg0: i32) -> (i32, i32) {
    %c0_i32 = arith.constant 0 : i32
    %c0_i32_0 = arith.constant 0 : i32
    %c0_i32_1 = arith.constant 0 : i32
    return %c0_i32, %c0_i32_0 : i32, i32
  }
  func.func @transform_12(%arg0: i32) -> (i32, i32, i32) {
    %c0_i32 = arith.constant 0 : i32
    %c0_i32_0 = arith.constant 0 : i32
    %c0_i32_1 = arith.constant 0 : i32
    return %arg0, %c0_i32, %c0_i32_0 : i32, i32, i32
  }
}

</mosaic_0001>

<llo_original>
// kernel: tpu_custom_call.1
$region0: #{tpu_custom_call.1}
  #allocation0 [shape = 'u32[]', space=smem, size = 0x4, offset = 0x4, fixed_abs, tag = 'smem constant byte address 0x4 - core index']
  #allocation1 [shape = 'u32[144,128]{1,0:T(1,128)}', space=vmem, size = 0x12000, scoped, tag = 'internal scratch']
  #allocation2 [shape = 'f32[18,18,16]{2,1,0:T(8,128)}', space=vmem, size = 0x36000, scoped, tag = 'scratch operand']
  %s0 = inlined_call_operand.vmem [shape: f32[2,256,16], index: 0, kind: input, shape index: {}]
  %s1 = inlined_call_operand.vmem [shape: bf16[16,16], index: 1, kind: input, shape index: {}]
  %s2 = inlined_call_operand.vmem [shape: f32[1,16], index: 2, kind: input, shape index: {}]
  %s3 = inlined_call_operand.vmem [shape: f32[4,16], index: 3, kind: input, shape index: {}]
  %s4 = inlined_call_operand.vmem [shape: f32[4,16], index: 4, kind: input, shape index: {}]
  %s5 = inlined_call_operand.vmem [shape: bf16[4,16,16], index: 5, kind: input, shape index: {}]
  %s6 = inlined_call_operand.vmem [shape: f32[1,16], index: 6, kind: input, shape index: {}]
  %s7 = inlined_call_operand.vmem [shape: f32[4,16], index: 7, kind: input, shape index: {}]
  %s8 = inlined_call_operand.vmem [shape: f32[4,16], index: 8, kind: input, shape index: {}]
  %s9 = inlined_call_operand.vmem [shape: bf16[4,16,16], index: 9, kind: input, shape index: {}]
  %s10 = inlined_call_operand.vmem [shape: f32[1,16], index: 10, kind: input, shape index: {}]
  %s11 = inlined_call_operand.vmem [shape: f32[1,16], index: 11, kind: input, shape index: {}]
  %s12 = inlined_call_operand.hbm [shape: f32[2,1,256], index: 12, kind: output, shape index: {}]
  %s13 = sld [smem:[#allocation0]]
  $region81: #{tpu_custom_call.1} parent=0
    _
  %s15 = ssub.s32 1, %s13
  %s16 = scalar_select 0, %s15, %s13
  $region1: #{tpu_custom_call.1} parent=0
    #allocation3 [shape = 'u8[2048]{0}', space=vmem, size = 0x800, scoped, tag = 'output window, operand 0']
    #allocation4 [shape = 's32[2]{0}', space=sflag, size = 0x8, scoped, tag = 'scoped memory for tpu_custom_call.1']
    %17 = vsyncpa [#allocation4], 0
    %s18 = scalar_lea.sflag [#allocation4], 1
    %19 = vsyncpa %s18, 0
    loop: start=0, step=1, limit=4
    $region2: #{tpu_custom_call.1} parent=1 // loop_pre_header
      _
    $region3: #{tpu_custom_call.1} parent=1 // loop_header
      %s21 = sphi 0, %s25
      %p22 = scmp.ge.s32.totalorder %s21, 4
      %s31 = sphi 0, %s33
      %s34 = sphi 0, %s31
      %s35 = sphi 0, %s34
      %s51 = sphi 0, %s35
      %s55 = sphi 0, %s55
      %s57 = sphi 0, %s55
      %s58 = sphi 0, %s57
      %s72 = sphi 0, %s58
      %s76 = sphi 0, %s76
      %s78 = sphi 0, %s76
      %s79 = sphi 0, %s78
      %s93 = sphi 0, %s79
      %s97 = sphi 0, %s97
      %s99 = sphi 0, %s97
      %s100 = sphi 0, %s99
      %s114 = sphi 0, %s100
      %s118 = sphi 0, %s118
      %s120 = sphi 0, %s118
      %s121 = sphi 0, %s120
      %s135 = sphi 0, %s121
      %s139 = sphi 0, %s139
      %s141 = sphi 0, %s139
      %s142 = sphi 0, %s141
      %s156 = sphi 0, %s142
      %s160 = sphi 0, %s160
      %s162 = sphi 0, %s160
      %s163 = sphi 0, %s162
      %s177 = sphi 0, %s163
      %s181 = sphi 0, %s181
      %s183 = sphi 0, %s181
      %s184 = sphi 0, %s183
      %s198 = sphi 0, %s184
      %s202 = sphi 0, %s202
      %s204 = sphi 0, %s202
      %s205 = sphi 0, %s204
      %s219 = sphi 0, %s205
      %s223 = sphi 0, %s223
      %s225 = sphi 0, %s223
      %s226 = sphi 0, %s225
      %s240 = sphi 0, %s226
      %s244 = sphi 0, %s244
      %s246 = sphi 0, %s244
      %s247 = sphi 0, %s246
      %s261 = sphi 0, %s247
      %s265 = sphi 0, %s265
      %s267 = sphi 0, %s265
      %s268 = sphi 0, %s267
      %s282 = sphi 0, %s268
      %s288 = sphi 0, %s290
      %s291 = sphi 0, %s288
      %s292 = sphi 0, %s291
      %s308 = sphi 0, %s292
    $region4: #{tpu_custom_call.1} parent=1 // loop_header_branch
      %24 = sbr.rel (%p22) target = $region8
    $region5: #{tpu_custom_call.1} parent=1 // loop_body
      %s26 = ssub.s32 %s21, 1
      %s27 = ssub.s32 %s21, 2
      %s28 = sadd.s32 %s21, 1
      %s29 = ssub.s32 %s21, %s28
      %p30 = scmp.eq.s32.totalorder %s29, 0
      %s32 = sadd.s32 %s31, 1
      %s33 = scalar_select %p30, %s31, %s32
      %p36 = pneg %p30
      %p37 = scmp.eq.s32.totalorder %s21, 1
      %p38 = por %p36, %p37
      %p39 = scmp.ne.s32.totalorder %s31, %s34
      %p40 = scmp.eq.s32.totalorder %s21, 0
      %p41 = por %p39, %p40
      %p42 = scmp.ne.s32.totalorder %s31, %s34
      %p43 = scmp.eq.s32.totalorder %s26, 1
      %p44 = por %p42, %p43
      %p45 = scmp.ne.s32.totalorder %s34, %s35
      %p46 = scmp.eq.s32.totalorder %s26, 0
      %p47 = por %p45, %p46
      %p48 = scmp.ne.s32.totalorder %s34, %s35
      %p49 = scmp.eq.s32.totalorder %s27, 1
      %p50 = por %p48, %p49
      %p52 = scmp.ne.s32.totalorder %s35, %s51
      %p53 = scmp.eq.s32.totalorder %s27, 0
      %p54 = por %p52, %p53
      %s56 = sadd.s32 %s55, 1
      %p59 = scmp.eq.s32.totalorder %s21, 1
      %p60 = scmp.ne.s32.totalorder %s55, %s57
      %p61 = scmp.eq.s32.totalorder %s21, 0
      %p62 = por %p60, %p61
      %p63 = scmp.ne.s32.totalorder %s55, %s57
      %p64 = scmp.eq.s32.totalorder %s26, 1
      %p65 = por %p63, %p64
      %p66 = scmp.ne.s32.totalorder %s57, %s58
      %p67 = scmp.eq.s32.totalorder %s26, 0
      %p68 = por %p66, %p67
      %p69 = scmp.ne.s32.totalorder %s57, %s58
      %p70 = scmp.eq.s32.totalorder %s27, 1
      %p71 = por %p69, %p70
      %p73 = scmp.ne.s32.totalorder %s58, %s72
      %p74 = scmp.eq.s32.totalorder %s27, 0
      %p75 = por %p73, %p74
      %s77 = sadd.s32 %s76, 1
      %p80 = scmp.eq.s32.totalorder %s21, 1
      %p81 = scmp.ne.s32.totalorder %s76, %s78
      %p82 = scmp.eq.s32.totalorder %s21, 0
      %p83 = por %p81, %p82
      %p84 = scmp.ne.s32.totalorder %s76, %s78
      %p85 = scmp.eq.s32.totalorder %s26, 1
      %p86 = por %p84, %p85
      %p87 = scmp.ne.s32.totalorder %s78, %s79
      %p88 = scmp.eq.s32.totalorder %s26, 0
      %p89 = por %p87, %p88
      %p90 = scmp.ne.s32.totalorder %s78, %s79
      %p91 = scmp.eq.s32.totalorder %s27, 1
      %p92 = por %p90, %p91
      %p94 = scmp.ne.s32.totalorder %s79, %s93
      %p95 = scmp.eq.s32.totalorder %s27, 0
      %p96 = por %p94, %p95
      %s98 = sadd.s32 %s97, 1
      %p101 = scmp.eq.s32.totalorder %s21, 1
      %p102 = scmp.ne.s32.totalorder %s97, %s99
      %p103 = scmp.eq.s32.totalorder %s21, 0
      %p104 = por %p102, %p103
      %p105 = scmp.ne.s32.totalorder %s97, %s99
      %p106 = scmp.eq.s32.totalorder %s26, 1
      %p107 = por %p105, %p106
      %p108 = scmp.ne.s32.totalorder %s99, %s100
      %p109 = scmp.eq.s32.totalorder %s26, 0
      %p110 = por %p108, %p109
      %p111 = scmp.ne.s32.totalorder %s99, %s100
      %p112 = scmp.eq.s32.totalorder %s27, 1
      %p113 = por %p111, %p112
      %p115 = scmp.ne.s32.totalorder %s100, %s114
      %p116 = scmp.eq.s32.totalorder %s27, 0
      %p117 = por %p115, %p116
      %s119 = sadd.s32 %s118, 1
      %p122 = scmp.eq.s32.totalorder %s21, 1
      %p123 = scmp.ne.s32.totalorder %s118, %s120
      %p124 = scmp.eq.s32.totalorder %s21, 0
      %p125 = por %p123, %p124
      %p126 = scmp.ne.s32.totalorder %s118, %s120
      %p127 = scmp.eq.s32.totalorder %s26, 1
      %p128 = por %p126, %p127
      %p129 = scmp.ne.s32.totalorder %s120, %s121
      %p130 = scmp.eq.s32.totalorder %s26, 0
      %p131 = por %p129, %p130
      %p132 = scmp.ne.s32.totalorder %s120, %s121
      %p133 = scmp.eq.s32.totalorder %s27, 1
      %p134 = por %p132, %p133
      %p136 = scmp.ne.s32.totalorder %s121, %s135
      %p137 = scmp.eq.s32.totalorder %s27, 0
      %p138 = por %p136, %p137
      %s140 = sadd.s32 %s139, 1
      %p143 = scmp.eq.s32.totalorder %s21, 1
      %p144 = scmp.ne.s32.totalorder %s139, %s141
      %p145 = scmp.eq.s32.totalorder %s21, 0
      %p146 = por %p144, %p145
      %p147 = scmp.ne.s32.totalorder %s139, %s141
      %p148 = scmp.eq.s32.totalorder %s26, 1
      %p149 = por %p147, %p148
      %p150 = scmp.ne.s32.totalorder %s141, %s142
      %p151 = scmp.eq.s32.totalorder %s26, 0
      %p152 = por %p150, %p151
      %p153 = scmp.ne.s32.totalorder %s141, %s142
      %p154 = scmp.eq.s32.totalorder %s27, 1
      %p155 = por %p153, %p154
      %p157 = scmp.ne.s32.totalorder %s142, %s156
      %p158 = scmp.eq.s32.totalorder %s27, 0
      %p159 = por %p157, %p158
      %s161 = sadd.s32 %s160, 1
      %p164 = scmp.eq.s32.totalorder %s21, 1
      %p165 = scmp.ne.s32.totalorder %s160, %s162
      %p166 = scmp.eq.s32.totalorder %s21, 0
      %p167 = por %p165, %p166
      %p168 = scmp.ne.s32.totalorder %s160, %s162
      %p169 = scmp.eq.s32.totalorder %s26, 1
      %p170 = por %p168, %p169
      %p171 = scmp.ne.s32.totalorder %s162, %s163
      %p172 = scmp.eq.s32.totalorder %s26, 0
      %p173 = por %p171, %p172
      %p174 = scmp.ne.s32.totalorder %s162, %s163
      %p175 = scmp.eq.s32.totalorder %s27, 1
      %p176 = por %p174, %p175
      %p178 = scmp.ne.s32.totalorder %s163, %s177
      %p179 = scmp.eq.s32.totalorder %s27, 0
      %p180 = por %p178, %p179
      %s182 = sadd.s32 %s181, 1
      %p185 = scmp.eq.s32.totalorder %s21, 1
      %p186 = scmp.ne.s32.totalorder %s181, %s183
      %p187 = scmp.eq.s32.totalorder %s21, 0
      %p188 = por %p186, %p187
      %p189 = scmp.ne.s32.totalorder %s181, %s183
      %p190 = scmp.eq.s32.totalorder %s26, 1
      %p191 = por %p189, %p190
      %p192 = scmp.ne.s32.totalorder %s183, %s184
      %p193 = scmp.eq.s32.totalorder %s26, 0
      %p194 = por %p192, %p193
      %p195 = scmp.ne.s32.totalorder %s183, %s184
      %p196 = scmp.eq.s32.totalorder %s27, 1
      %p197 = por %p195, %p196
      %p199 = scmp.ne.s32.totalorder %s184, %s198
      %p200 = scmp.eq.s32.totalorder %s27, 0
      %p201 = por %p199, %p200
      %s203 = sadd.s32 %s202, 1
      %p206 = scmp.eq.s32.totalorder %s21, 1
      %p207 = scmp.ne.s32.totalorder %s202, %s204
      %p208 = scmp.eq.s32.totalorder %s21, 0
      %p209 = por %p207, %p208
      %p210 = scmp.ne.s32.totalorder %s202, %s204
      %p211 = scmp.eq.s32.totalorder %s26, 1
      %p212 = por %p210, %p211
      %p213 = scmp.ne.s32.totalorder %s204, %s205
      %p214 = scmp.eq.s32.totalorder %s26, 0
      %p215 = por %p213, %p214
      %p216 = scmp.ne.s32.totalorder %s204, %s205
      %p217 = scmp.eq.s32.totalorder %s27, 1
      %p218 = por %p216, %p217
      %p220 = scmp.ne.s32.totalorder %s205, %s219
      %p221 = scmp.eq.s32.totalorder %s27, 0
      %p222 = por %p220, %p221
      %s224 = sadd.s32 %s223, 1
      %p227 = scmp.eq.s32.totalorder %s21, 1
      %p228 = scmp.ne.s32.totalorder %s223, %s225
      %p229 = scmp.eq.s32.totalorder %s21, 0
      %p230 = por %p228, %p229
      %p231 = scmp.ne.s32.totalorder %s223, %s225
      %p232 = scmp.eq.s32.totalorder %s26, 1
      %p233 = por %p231, %p232
      %p234 = scmp.ne.s32.totalorder %s225, %s226
      %p235 = scmp.eq.s32.totalorder %s26, 0
      %p236 = por %p234, %p235
      %p237 = scmp.ne.s32.totalorder %s225, %s226
      %p238 = scmp.eq.s32.totalorder %s27, 1
      %p239 = por %p237, %p238
      %p241 = scmp.ne.s32.totalorder %s226, %s240
      %p242 = scmp.eq.s32.totalorder %s27, 0
      %p243 = por %p241, %p242
      %s245 = sadd.s32 %s244, 1
      %p248 = scmp.eq.s32.totalorder %s21, 1
      %p249 = scmp.ne.s32.totalorder %s244, %s246
      %p250 = scmp.eq.s32.totalorder %s21, 0
      %p251 = por %p249, %p250
      %p252 = scmp.ne.s32.totalorder %s244, %s246
      %p253 = scmp.eq.s32.totalorder %s26, 1
      %p254 = por %p252, %p253
      %p255 = scmp.ne.s32.totalorder %s246, %s247
      %p256 = scmp.eq.s32.totalorder %s26, 0
      %p257 = por %p255, %p256
      %p258 = scmp.ne.s32.totalorder %s246, %s247
      %p259 = scmp.eq.s32.totalorder %s27, 1
      %p260 = por %p258, %p259
      %p262 = scmp.ne.s32.totalorder %s247, %s261
      %p263 = scmp.eq.s32.totalorder %s27, 0
      %p264 = por %p262, %p263
      %s266 = sadd.s32 %s265, 1
      %p269 = scmp.eq.s32.totalorder %s21, 1
      %p270 = scmp.ne.s32.totalorder %s265, %s267
      %p271 = scmp.eq.s32.totalorder %s21, 0
      %p272 = por %p270, %p271
      %p273 = scmp.ne.s32.totalorder %s265, %s267
      %p274 = scmp.eq.s32.totalorder %s26, 1
      %p275 = por %p273, %p274
      %p276 = scmp.ne.s32.totalorder %s267, %s268
      %p277 = scmp.eq.s32.totalorder %s26, 0
      %p278 = por %p276, %p277
      %p279 = scmp.ne.s32.totalorder %s267, %s268
      %p280 = scmp.eq.s32.totalorder %s27, 1
      %p281 = por %p279, %p280
      %p283 = scmp.ne.s32.totalorder %s268, %s282
      %p284 = scmp.eq.s32.totalorder %s27, 0
      %p285 = por %p283, %p284
      %s286 = ssub.s32 %s21, %s28
      %p287 = scmp.eq.s32.totalorder %s286, 0
      %s289 = sadd.s32 %s288, 1
      %s290 = scalar_select %p287, %s288, %s289
      %p293 = pneg %p287
      %p294 = scmp.eq.s32.totalorder %s21, 1
      %p295 = por %p293, %p294
      %p296 = scmp.ne.s32.totalorder %s288, %s291
      %p297 = scmp.eq.s32.totalorder %s21, 0
      %p298 = por %p296, %p297
      %p299 = scmp.ne.s32.totalorder %s288, %s291
      %p300 = scmp.eq.s32.totalorder %s26, 1
      %p301 = por %p299, %p300
      %p302 = scmp.ne.s32.totalorder %s291, %s292
      %p303 = scmp.eq.s32.totalorder %s26, 0
      %p304 = por %p302, %p303
      %p305 = scmp.ne.s32.totalorder %s291, %s292
      %p306 = scmp.eq.s32.totalorder %s27, 1
      %p307 = por %p305, %p306
      %p309 = scmp.ne.s32.totalorder %s292, %s308
      %p310 = scmp.eq.s32.totalorder %s27, 0
      %p311 = por %p309, %p310
      %p312 = scmp.le.s32.totalorder 1, %s21
      %p313 = scmp.lt.s32.totalorder %s21, 3
      %p314 = pnand %p312, %p313
      %p315 = pneg %p314
      // Predicated region
      $region9: #{tpu_custom_call.1} parent=5 // pred_check
        _
      $region10: #{tpu_custom_call.1} parent=5 // pred_check_branch
        %317 = sbr.rel (%p314) target = $region12
      $region11: #{tpu_custom_call.1} parent=5 // pred_region
        %s318 = ssub.s32 %s21, 1
        // Predicated region
        $region13: #{tpu_custom_call.1} parent=11 // pred_check
          %p319 = pneg %p68
        $region14: #{tpu_custom_call.1} parent=11 // pred_check_branch
          %321 = sbr.rel (%p319) target = $region16
        $region15: #{tpu_custom_call.1} parent=11 // pred_region
          _
        $region16: #{tpu_custom_call.1} parent=11 // pred_fallthru
          _
        // Predicated region
        $region17: #{tpu_custom_call.1} parent=11 // pred_check
          %p322 = pneg %p89
        $region18: #{tpu_custom_call.1} parent=11 // pred_check_branch
          %324 = sbr.rel (%p322) target = $region20
        $region19: #{tpu_custom_call.1} parent=11 // pred_region
          _
        $region20: #{tpu_custom_call.1} parent=11 // pred_fallthru
          _
        // Predicated region
        $region21: #{tpu_custom_call.1} parent=11 // pred_check
          %p325 = pneg %p110
        $region22: #{tpu_custom_call.1} parent=11 // pred_check_branch
          %327 = sbr.rel (%p325) target = $region24
        $region23: #{tpu_custom_call.1} parent=11 // pred_region
          _
        $region24: #{tpu_custom_call.1} parent=11 // pred_fallthru
          _
        // Predicated region
        $region25: #{tpu_custom_call.1} parent=11 // pred_check
          %p328 = pneg %p131
        $region26: #{tpu_custom_call.1} parent=11 // pred_check_branch
          %330 = sbr.rel (%p328) target = $region28
        $region27: #{tpu_custom_call.1} parent=11 // pred_region
          _
        $region28: #{tpu_custom_call.1} parent=11 // pred_fallthru
          _
        // Predicated region
        $region29: #{tpu_custom_call.1} parent=11 // pred_check
          %p331 = pneg %p152
        $region30: #{tpu_custom_call.1} parent=11 // pred_check_branch
          %333 = sbr.rel (%p331) target = $region32
        $region31: #{tpu_custom_call.1} parent=11 // pred_region
          _
        $region32: #{tpu_custom_call.1} parent=11 // pred_fallthru
          _
        // Predicated region
        $region33: #{tpu_custom_call.1} parent=11 // pred_check
          %p334 = pneg %p173
        $region34: #{tpu_custom_call.1} parent=11 // pred_check_branch
          %336 = sbr.rel (%p334) target = $region36
        $region35: #{tpu_custom_call.1} parent=11 // pred_region
          _
        $region36: #{tpu_custom_call.1} parent=11 // pred_fallthru
          _
        // Predicated region
        $region37: #{tpu_custom_call.1} parent=11 // pred_check
          %p337 = pneg %p194
        $region38: #{tpu_custom_call.1} parent=11 // pred_check_branch
          %339 = sbr.rel (%p337) target = $region40
        $region39: #{tpu_custom_call.1} parent=11 // pred_region
          _
        $region40: #{tpu_custom_call.1} parent=11 // pred_fallthru
          _
        // Predicated region
        $region41: #{tpu_custom_call.1} parent=11 // pred_check
          %p340 = pneg %p215
        $region42: #{tpu_custom_call.1} parent=11 // pred_check_branch
          %342 = sbr.rel (%p340) target = $region44
        $region43: #{tpu_custom_call.1} parent=11 // pred_region
          _
        $region44: #{tpu_custom_call.1} parent=11 // pred_fallthru
          _
        // Predicated region
        $region45: #{tpu_custom_call.1} parent=11 // pred_check
          %p343 = pneg %p236
        $region46: #{tpu_custom_call.1} parent=11 // pred_check_branch
          %345 = sbr.rel (%p343) target = $region48
        $region47: #{tpu_custom_call.1} parent=11 // pred_region
          _
        $region48: #{tpu_custom_call.1} parent=11 // pred_fallthru
          _
        // Predicated region
        $region49: #{tpu_custom_call.1} parent=11 // pred_check
          %p346 = pneg %p257
        $region50: #{tpu_custom_call.1} parent=11 // pred_check_branch
          %348 = sbr.rel (%p346) target = $region52
        $region51: #{tpu_custom_call.1} parent=11 // pred_region
          _
        $region52: #{tpu_custom_call.1} parent=11 // pred_fallthru
          _
        // Predicated region
        $region53: #{tpu_custom_call.1} parent=11 // pred_check
          %p349 = pneg %p278
        $region54: #{tpu_custom_call.1} parent=11 // pred_check_branch
          %351 = sbr.rel (%p349) target = $region56
        $region55: #{tpu_custom_call.1} parent=11 // pred_region
          _
        $region56: #{tpu_custom_call.1} parent=11 // pred_fallthru
          _
      $region12: #{tpu_custom_call.1} parent=5 // pred_fallthru
        _
      %p352 = scmp.lt.s32.totalorder %s21, 2
      // Predicated region
      $region57: #{tpu_custom_call.1} parent=5 // pred_check
        %p353 = pneg %p352
      $region58: #{tpu_custom_call.1} parent=5 // pred_check_branch
        %355 = sbr.rel (%p353) target = $region60
      $region59: #{tpu_custom_call.1} parent=5 // pred_region
        // Predicated region
        $region61: #{tpu_custom_call.1} parent=59 // pred_check
          %p356 = pneg %p41
        $region62: #{tpu_custom_call.1} parent=59 // pred_check_branch
          %358 = sbr.rel (%p356) target = $region64
        $region63: #{tpu_custom_call.1} parent=59 // pred_region
          %p359 = scmp.lt.s32.totalorder %s21, 1
          %s360 = scalar_select %p359, %s21, 1
          %s361 = smul.addr %s360, 32
          %s362 = smul.addr %s361, 8
          %s363 = scalar_lea.vmem %s0, %s362
        $region64: #{tpu_custom_call.1} parent=59 // pred_fallthru
          _
      $region60: #{tpu_custom_call.1} parent=5 // pred_fallthru
        _
      %p364 = scmp.le.s32.totalorder 1, %s21
      %p365 = scmp.lt.s32.totalorder %s21, 3
      %p366 = pnand %p364, %p365
      %p367 = pneg %p366
      // Predicated region
      $region65: #{tpu_custom_call.1} parent=5 // pred_check
        _
      $region66: #{tpu_custom_call.1} parent=5 // pred_check_branch
        %369 = sbr.rel (%p366) target = $region68
      $region67: #{tpu_custom_call.1} parent=5 // pred_region
        %s370 = ssub.s32 %s21, 1
        %p371 = scmp.lt.s32.totalorder %s26, 1
        %s372 = scalar_select %p371, %s26, 1
        %s373 = smul.addr %s372, 32
        %s374 = smul.addr %s373, 8
        %s375 = scalar_lea.vmem %s0, %s374
        %p376 = pneg %p47
        %p377 = pneg %p44
        %p378 = pneg %p68
        %p379 = pneg %p65
        %p380 = pneg %p89
        %p381 = pneg %p86
        %p382 = pneg %p110
        %p383 = pneg %p107
        %p384 = pneg %p131
        %p385 = pneg %p128
        %p386 = pneg %p152
        %p387 = pneg %p149
        %p388 = pneg %p173
        %p389 = pneg %p170
        %p390 = pneg %p194
        %p391 = pneg %p191
        %p392 = pneg %p215
        %p393 = pneg %p212
        %p394 = pneg %p236
        %p395 = pneg %p233
        %p396 = pneg %p257
        %p397 = pneg %p254
        %p398 = pneg %p278
        %p399 = pneg %p275
        %p400 = pneg %p304
        %p401 = pneg %p301
        %s402 = sand.u32 %s291, 1
        %s403 = scalar_lea.sflag [#allocation4], %s402
        %s404 = sand.u32 %s291, 1
        %s405 = smul.addr %s404, 2
        %s406 = scalar_lea.vmem [#allocation3], %s405
        %p407 = scmp.lt.s32.totalorder %s26, 1
        %s408 = scalar_select %p407, %s26, 1
        %s409 = smul.addr %s408, 32
        %s410 = smul.addr %s409, 8
        %s411 = scalar_lea.vmem %s0, %s410
        %v413 = vlaneseq
        %v414 = vshrl.u32 %v413, 7
        %v415 = vadd.s32 %v414, 8
        %v416 = vadd.s32 %v414, 16
        %v417 = vadd.s32 %v414, 24
        %v418 = vadd.s32 %v414, 32
        %v419 = vadd.s32 %v414, 40
        %v420 = vadd.s32 %v414, 48
        %v421 = vadd.s32 %v414, 56
        %v422 = vadd.s32 %v414, 64
        %v423 = vadd.s32 %v414, 72
        %v424 = vadd.s32 %v414, 80
        %v425 = vadd.s32 %v414, 88
        %v426 = vadd.s32 %v414, 96
        %v427 = vadd.s32 %v414, 104
        %v428 = vadd.s32 %v414, 112
        %v429 = vadd.s32 %v414, 120
        %v430 = vadd.s32 %v414, 128
        %v431 = vadd.s32 %v414, 136
        %v432 = vadd.s32 %v414, 144
        %v433 = vadd.s32 %v414, 152
        %v434 = vadd.s32 %v414, 160
        %v435 = vadd.s32 %v414, 168
        %v436 = vadd.s32 %v414, 176
        %v437 = vadd.s32 %v414, 184
        %v438 = vadd.s32 %v414, 192
        %v439 = vadd.s32 %v414, 200
        %v440 = vadd.s32 %v414, 208
        %v441 = vadd.s32 %v414, 216
        %v442 = vadd.s32 %v414, 224
        %v443 = vadd.s32 %v414, 232
        %v444 = vadd.s32 %v414, 240
        %v445 = vadd.s32 %v414, 248
        %vm446 = vcmp.ge.s32.totalorder %v414, 16
        %vm447 = vcmp.ge.s32.totalorder %v415, 16
        %vm448 = vcmp.ge.s32.totalorder %v416, 16
        %vm449 = vcmp.ge.s32.totalorder %v417, 16
        %vm450 = vcmp.ge.s32.totalorder %v418, 16
        %vm451 = vcmp.ge.s32.totalorder %v419, 16
        %vm452 = vcmp.ge.s32.totalorder %v420, 16
        %vm453 = vcmp.ge.s32.totalorder %v421, 16
        %vm454 = vcmp.ge.s32.totalorder %v422, 16
        %vm455 = vcmp.ge.s32.totalorder %v423, 16
        %vm456 = vcmp.ge.s32.totalorder %v424, 16
        %vm457 = vcmp.ge.s32.totalorder %v425, 16
        %vm458 = vcmp.ge.s32.totalorder %v426, 16
        %vm459 = vcmp.ge.s32.totalorder %v427, 16
        %vm460 = vcmp.ge.s32.totalorder %v428, 16
        %vm461 = vcmp.ge.s32.totalorder %v429, 16
        %vm462 = vcmp.ge.s32.totalorder %v430, 16
        %vm463 = vcmp.ge.s32.totalorder %v431, 16
        %vm464 = vcmp.ge.s32.totalorder %v432, 16
        %vm465 = vcmp.ge.s32.totalorder %v433, 16
        %vm466 = vcmp.ge.s32.totalorder %v434, 16
        %vm467 = vcmp.ge.s32.totalorder %v435, 16
        %vm468 = vcmp.ge.s32.totalorder %v436, 16
        %vm469 = vcmp.ge.s32.totalorder %v437, 16
        %vm470 = vcmp.ge.s32.totalorder %v438, 16
        %vm471 = vcmp.ge.s32.totalorder %v439, 16
        %vm472 = vcmp.ge.s32.totalorder %v440, 16
        %vm473 = vcmp.ge.s32.totalorder %v441, 16
        %vm474 = vcmp.ge.s32.totalorder %v442, 16
        %vm475 = vcmp.ge.s32.totalorder %v443, 16
        %vm476 = vcmp.ge.s32.totalorder %v444, 16
        %vm477 = vcmp.ge.s32.totalorder %v445, 16
        %vm478 = vcmp.lt.s32.totalorder %v414, 15
        %vm479 = vcmp.lt.s32.totalorder %v415, 15
        %vm480 = vcmp.lt.s32.totalorder %v414, 240
        %vm481 = vcmp.lt.s32.totalorder %v415, 240
        %vm482 = vcmp.lt.s32.totalorder %v416, 240
        %vm483 = vcmp.lt.s32.totalorder %v417, 240
        %vm484 = vcmp.lt.s32.totalorder %v418, 240
        %vm485 = vcmp.lt.s32.totalorder %v419, 240
        %vm486 = vcmp.lt.s32.totalorder %v420, 240
        %vm487 = vcmp.lt.s32.totalorder %v421, 240
        %vm488 = vcmp.lt.s32.totalorder %v422, 240
        %vm489 = vcmp.lt.s32.totalorder %v423, 240
        %vm490 = vcmp.lt.s32.totalorder %v424, 240
        %vm491 = vcmp.lt.s32.totalorder %v425, 240
        %vm492 = vcmp.lt.s32.totalorder %v426, 240
        %vm493 = vcmp.lt.s32.totalorder %v427, 240
        %vm494 = vcmp.lt.s32.totalorder %v428, 240
        %vm495 = vcmp.lt.s32.totalorder %v429, 240
        %vm496 = vcmp.lt.s32.totalorder %v430, 240
        %vm497 = vcmp.lt.s32.totalorder %v431, 240
        %vm498 = vcmp.lt.s32.totalorder %v432, 240
        %vm499 = vcmp.lt.s32.totalorder %v433, 240
        %vm500 = vcmp.lt.s32.totalorder %v434, 240
        %vm501 = vcmp.lt.s32.totalorder %v435, 240
        %vm502 = vcmp.lt.s32.totalorder %v436, 240
        %vm503 = vcmp.lt.s32.totalorder %v437, 240
        %vm504 = vcmp.lt.s32.totalorder %v438, 240
        %vm505 = vcmp.lt.s32.totalorder %v439, 240
        %vm506 = vcmp.lt.s32.totalorder %v440, 240
        %vm507 = vcmp.lt.s32.totalorder %v441, 240
        %vm508 = vcmp.lt.s32.totalorder %v442, 240
        %vm509 = vcmp.lt.s32.totalorder %v443, 240
        %vm510 = vcmp.lt.s32.totalorder %v444, 240
        %vm511 = vcmp.lt.s32.totalorder %v445, 240
        %vm512 = vcmp.ge.s32.totalorder %v414, 1
        %vm513 = vcmp.ge.s32.totalorder %v415, 1
        %v514 = vld [vmem:[%s411] sm:$0xff]
        %v515 = vld [vmem:[%s411 + $0x8] sm:$0xff]
        %v516 = vld [vmem:[%s411 + $0x10] sm:$0xff]
        %v517 = vld [vmem:[%s411 + $0x18] sm:$0xff]
        %v518 = vld [vmem:[%s411 + $0x20] sm:$0xff]
        %v519 = vld [vmem:[%s411 + $0x28] sm:$0xff]
        %v520 = vld [vmem:[%s411 + $0x30] sm:$0xff]
        %v521 = vld [vmem:[%s411 + $0x38] sm:$0xff]
        %v522 = vld [vmem:[%s411 + $0x40] sm:$0xff]
        %v523 = vld [vmem:[%s411 + $0x48] sm:$0xff]
        %v524 = vld [vmem:[%s411 + $0x50] sm:$0xff]
        %v525 = vld [vmem:[%s411 + $0x58] sm:$0xff]
        %v526 = vld [vmem:[%s411 + $0x60] sm:$0xff]
        %v527 = vld [vmem:[%s411 + $0x68] sm:$0xff]
        %v528 = vld [vmem:[%s411 + $0x70] sm:$0xff]
        %v529 = vld [vmem:[%s411 + $0x78] sm:$0xff]
        %v530 = vld [vmem:[%s411 + $0x80] sm:$0xff]
        %v531 = vld [vmem:[%s411 + $0x88] sm:$0xff]
        %v532 = vld [vmem:[%s411 + $0x90] sm:$0xff]
        %v533 = vld [vmem:[%s411 + $0x98] sm:$0xff]
        %v534 = vld [vmem:[%s411 + $0xa0] sm:$0xff]
        %v535 = vld [vmem:[%s411 + $0xa8] sm:$0xff]
        %v536 = vld [vmem:[%s411 + $0xb0] sm:$0xff]
        %v537 = vld [vmem:[%s411 + $0xb8] sm:$0xff]
        %v538 = vld [vmem:[%s411 + $0xc0] sm:$0xff]
        %v539 = vld [vmem:[%s411 + $0xc8] sm:$0xff]
        %v540 = vld [vmem:[%s411 + $0xd0] sm:$0xff]
        %v541 = vld [vmem:[%s411 + $0xd8] sm:$0xff]
        %v542 = vld [vmem:[%s411 + $0xe0] sm:$0xff]
        %v543 = vld [vmem:[%s411 + $0xe8] sm:$0xff]
        %v544 = vld [vmem:[%s411 + $0xf0] sm:$0xff]
        %v545 = vld [vmem:[%s411 + $0xf8] sm:$0xff]
        %v546 = vpack.c.bf16 %v515, %v514
        %v547 = vpack.c.bf16 %v517, %v516
        %v548 = vpack.c.bf16 %v519, %v518
        %v549 = vpack.c.bf16 %v521, %v520
        %v550 = vpack.c.bf16 %v523, %v522
        %v551 = vpack.c.bf16 %v525, %v524
        %v552 = vpack.c.bf16 %v527, %v526
        %v553 = vpack.c.bf16 %v529, %v528
        %v554 = vpack.c.bf16 %v531, %v530
        %v555 = vpack.c.bf16 %v533, %v532
        %v556 = vpack.c.bf16 %v535, %v534
        %v557 = vpack.c.bf16 %v537, %v536
        %v558 = vpack.c.bf16 %v539, %v538
        %v559 = vpack.c.bf16 %v541, %v540
        %v560 = vpack.c.bf16 %v543, %v542
        %v561 = vpack.c.bf16 %v545, %v544
        %v562 = vld [vmem:[%s1] sm:$0xf]
        %v563 = vld [vmem:[%s1 + $0x4] sm:$0xf]
        %v564 = vld [vmem:[%s2] sm:$0x1]
        %v566 = vlaneseq
        %v567 = vshrl.u32 %v566, 7
        %v568 = vsub.s32 0, %v567
        %v569 = vrot.slane %v564, %v568
        %v573 = vunpack.c.l.b16 %v562
        %v574 = vunpack.c.l.b16 %v563
        %v575 = vpack.c.b16 %v574, %v573
        %vm577 = vcmask 130048
        %v579 = vsel %vm577, %v546, 0
        %v582 = vsel %vm577, %v547, 0
        %v585 = vsel %vm577, %v548, 0
        %v588 = vsel %vm577, %v549, 0
        %v591 = vsel %vm577, %v550, 0
        %v594 = vsel %vm577, %v551, 0
        %v597 = vsel %vm577, %v552, 0
        %v600 = vsel %vm577, %v553, 0
        %v603 = vsel %vm577, %v554, 0
        %v606 = vsel %vm577, %v555, 0
        %v609 = vsel %vm577, %v556, 0
        %v612 = vsel %vm577, %v557, 0
        %v615 = vsel %vm577, %v558, 0
        %v618 = vsel %vm577, %v559, 0
        %v621 = vsel %vm577, %v560, 0
        %v624 = vsel %vm577, %v561, 0
        %626 = vmatprep.subr.bf16.mxu0 0
        %627 = vmatpush1.bf16.msra.mxu0 %v575
        %628 = vmatprep.subr.bf16.mxu0 0
        %629 = vmatpush1.bf16.msra.mxu0 0
        %630 = vmatprep.subr.bf16.mxu0 0
        %631 = vmatpush1.bf16.msra.mxu0 0
        %632 = vmatprep.subr.bf16.mxu0 0
        %633 = vmatpush1.bf16.msra.mxu0 0
        %634 = vmatprep.subr.bf16.mxu0 0
        %635 = vmatpush1.bf16.msra.mxu0 0
        %636 = vmatprep.subr.bf16.mxu0 0
        %637 = vmatpush1.bf16.msra.mxu0 0
        %638 = vmatprep.subr.bf16.mxu0 0
        %639 = vmatpush1.bf16.msra.mxu0 0
        %640 = vmatprep.subr.bf16.mxu0 0
        %641 = vmatpush1.bf16.msra.mxu0 0
        %642 = vmatprep.subr.bf16.mxu0 0
        %643 = vmatpush1.bf16.msra.mxu0 0
        %644 = vmatprep.subr.bf16.mxu0 0
        %645 = vmatpush1.bf16.msra.mxu0 0
        %646 = vmatprep.subr.bf16.mxu0 0
        %647 = vmatpush1.bf16.msra.mxu0 0
        %648 = vmatprep.subr.bf16.mxu0 0
        %649 = vmatpush1.bf16.msra.mxu0 0
        %650 = vmatprep.subr.bf16.mxu0 0
        %651 = vmatpush1.bf16.msra.mxu0 0
        %652 = vmatprep.subr.bf16.mxu0 0
        %653 = vmatpush1.bf16.msra.mxu0 0
        %654 = vmatprep.subr.bf16.mxu0 0
        %655 = vmatpush1.bf16.msra.mxu0 0
        %656 = vmatprep.subr.bf16.mxu0 0
        %657 = vmatpush1.bf16.msra.mxu0 0
        %658 = vmatprep.mubr.bf16.mxu0 0
        %659 = vmatmul.mubr.bf16.gmra.mrb[0].mxu0 %v579
        %v660 = vpop.f32.mrb[0].mxu0
        %v661 = vadd.f32 %v569, %v660
        %v662 = vpop.f32.mrb[0].mxu0
        %v663 = vpop.f32.mrb[0].mxu0
        %v664 = vadd.f32 %v569, %v663
        %v665 = vpop.f32.mrb[0].mxu0
        %666 = vmatprep.mubr.bf16.mxu0 0
        %667 = vmatmul.mubr.bf16.gmra.mrb[0].mxu0 %v582
        %v668 = vpop.f32.mrb[0].mxu0
        %v669 = vadd.f32 %v569, %v668
        %v670 = vpop.f32.mrb[0].mxu0
        %v671 = vpop.f32.mrb[0].mxu0
        %v672 = vadd.f32 %v569, %v671
        %v673 = vpop.f32.mrb[0].mxu0
        %674 = vmatprep.mubr.bf16.mxu0 0
        %675 = vmatmul.mubr.bf16.gmra.mrb[0].mxu0 %v585
        %v676 = vpop.f32.mrb[0].mxu0
        %v677 = vadd.f32 %v569, %v676
        %v678 = vpop.f32.mrb[0].mxu0
        %v679 = vpop.f32.mrb[0].mxu0
        %v680 = vadd.f32 %v569, %v679
        %v681 = vpop.f32.mrb[0].mxu0
        %682 = vmatprep.mubr.bf16.mxu0 0
        %683 = vmatmul.mubr.bf16.gmra.mrb[0].mxu0 %v588
        %v684 = vpop.f32.mrb[0].mxu0
        %v685 = vadd.f32 %v569, %v684
        %v686 = vpop.f32.mrb[0].mxu0
        %v687 = vpop.f32.mrb[0].mxu0
        %v688 = vadd.f32 %v569, %v687
        %v689 = vpop.f32.mrb[0].mxu0
        %690 = vmatprep.mubr.bf16.mxu0 0
        %691 = vmatmul.mubr.bf16.gmra.mrb[0].mxu0 %v591
        %v692 = vpop.f32.mrb[0].mxu0
        %v693 = vadd.f32 %v569, %v692
        %v694 = vpop.f32.mrb[0].mxu0
        %v695 = vpop.f32.mrb[0].mxu0
        %v696 = vadd.f32 %v569, %v695
        %v697 = vpop.f32.mrb[0].mxu0
        %698 = vmatprep.mubr.bf16.mxu0 0
        %699 = vmatmul.mubr.bf16.gmra.mrb[0].mxu0 %v594
        %v700 = vpop.f32.mrb[0].mxu0
        %v701 = vadd.f32 %v569, %v700
        %v702 = vpop.f32.mrb[0].mxu0
        %v703 = vpop.f32.mrb[0].mxu0
        %v704 = vadd.f32 %v569, %v703
        %v705 = vpop.f32.mrb[0].mxu0
        %706 = vmatprep.mubr.bf16.mxu0 0
        %707 = vmatmul.mubr.bf16.gmra.mrb[0].mxu0 %v597
        %v708 = vpop.f32.mrb[0].mxu0
        %v709 = vadd.f32 %v569, %v708
        %v710 = vpop.f32.mrb[0].mxu0
        %v711 = vpop.f32.mrb[0].mxu0
        %v712 = vadd.f32 %v569, %v711
        %v713 = vpop.f32.mrb[0].mxu0
        %714 = vmatprep.mubr.bf16.mxu0 0
        %715 = vmatmul.mubr.bf16.gmra.mrb[0].mxu0 %v600
        %v716 = vpop.f32.mrb[0].mxu0
        %v717 = vadd.f32 %v569, %v716
        %v718 = vpop.f32.mrb[0].mxu0
        %v719 = vpop.f32.mrb[0].mxu0
        %v720 = vadd.f32 %v569, %v719
        %v721 = vpop.f32.mrb[0].mxu0
        %722 = vmatprep.mubr.bf16.mxu0 0
        %723 = vmatmul.mubr.bf16.gmra.mrb[0].mxu0 %v603
        %v724 = vpop.f32.mrb[0].mxu0
        %v725 = vadd.f32 %v569, %v724
        %v726 = vpop.f32.mrb[0].mxu0
        %v727 = vpop.f32.mrb[0].mxu0
        %v728 = vadd.f32 %v569, %v727
        %v729 = vpop.f32.mrb[0].mxu0
        %730 = vmatprep.mubr.bf16.mxu0 0
        %731 = vmatmul.mubr.bf16.gmra.mrb[0].mxu0 %v606
        %v732 = vpop.f32.mrb[0].mxu0
        %v733 = vadd.f32 %v569, %v732
        %v734 = vpop.f32.mrb[0].mxu0
        %v735 = vpop.f32.mrb[0].mxu0
        %v736 = vadd.f32 %v569, %v735
        %v737 = vpop.f32.mrb[0].mxu0
        %738 = vmatprep.mubr.bf16.mxu0 0
        %739 = vmatmul.mubr.bf16.gmra.mrb[0].mxu0 %v609
        %v740 = vpop.f32.mrb[0].mxu0
        %v741 = vadd.f32 %v569, %v740
        %v742 = vpop.f32.mrb[0].mxu0
        %v743 = vpop.f32.mrb[0].mxu0
        %v744 = vadd.f32 %v569, %v743
        %v745 = vpop.f32.mrb[0].mxu0
        %746 = vmatprep.mubr.bf16.mxu0 0
        %747 = vmatmul.mubr.bf16.gmra.mrb[0].mxu0 %v612
        %v748 = vpop.f32.mrb[0].mxu0
        %v749 = vadd.f32 %v569, %v748
        %v750 = vpop.f32.mrb[0].mxu0
        %v751 = vpop.f32.mrb[0].mxu0
        %v752 = vadd.f32 %v569, %v751
        %v753 = vpop.f32.mrb[0].mxu0
        %754 = vmatprep.mubr.bf16.mxu0 0
        %755 = vmatmul.mubr.bf16.gmra.mrb[0].mxu0 %v615
        %v756 = vpop.f32.mrb[0].mxu0
        %v757 = vadd.f32 %v569, %v756
        %v758 = vpop.f32.mrb[0].mxu0
        %v759 = vpop.f32.mrb[0].mxu0
        %v760 = vadd.f32 %v569, %v759
        %v761 = vpop.f32.mrb[0].mxu0
        %762 = vmatprep.mubr.bf16.mxu0 0
        %763 = vmatmul.mubr.bf16.gmra.mrb[0].mxu0 %v618
        %v764 = vpop.f32.mrb[0].mxu0
        %v765 = vadd.f32 %v569, %v764
        %v766 = vpop.f32.mrb[0].mxu0
        %v767 = vpop.f32.mrb[0].mxu0
        %v768 = vadd.f32 %v569, %v767
        %v769 = vpop.f32.mrb[0].mxu0
        %770 = vmatprep.mubr.bf16.mxu0 0
        %771 = vmatmul.mubr.bf16.gmra.mrb[0].mxu0 %v621
        %v772 = vpop.f32.mrb[0].mxu0
        %v773 = vadd.f32 %v569, %v772
        %v774 = vpop.f32.mrb[0].mxu0
        %v775 = vpop.f32.mrb[0].mxu0
        %v776 = vadd.f32 %v569, %v775
        %v777 = vpop.f32.mrb[0].mxu0
        %778 = vmatprep.mubr.bf16.mxu0 0
        %779 = vmatmul.mubr.bf16.gmra.mrb[0].mxu0 %v624
        %v780 = vpop.f32.mrb[0].mxu0
        %v781 = vadd.f32 %v569, %v780
        %v782 = vpop.f32.mrb[0].mxu0
        %v783 = vpop.f32.mrb[0].mxu0
        %v784 = vadd.f32 %v569, %v783
        %v785 = vpop.f32.mrb[0].mxu0
        %786 = vdwg.mxu0
        %s787 = scalar_lea.vmem [#allocation2], 24
        %788 = vst.msk [vmem:[%s787 + $0x1] sm:$0xff] %vm577, %v661
        %789 = vst.msk [vmem:[%s787 + $0x9] sm:$0xff] %vm577, %v664
        %790 = vst.msk [vmem:[%s787 + $0x19] sm:$0xff] %vm577, %v669
        %791 = vst.msk [vmem:[%s787 + $0x21] sm:$0xff] %vm577, %v672
        %792 = vst.msk [vmem:[%s787 + $0x31] sm:$0xff] %vm577, %v677
        %793 = vst.msk [vmem:[%s787 + $0x39] sm:$0xff] %vm577, %v680
        %794 = vst.msk [vmem:[%s787 + $0x49] sm:$0xff] %vm577, %v685
        %795 = vst.msk [vmem:[%s787 + $0x51] sm:$0xff] %vm577, %v688
        %796 = vst.msk [vmem:[%s787 + $0x61] sm:$0xff] %vm577, %v693
        %797 = vst.msk [vmem:[%s787 + $0x69] sm:$0xff] %vm577, %v696
        %798 = vst.msk [vmem:[%s787 + $0x79] sm:$0xff] %vm577, %v701
        %799 = vst.msk [vmem:[%s787 + $0x81] sm:$0xff] %vm577, %v704
        %800 = vst.msk [vmem:[%s787 + $0x91] sm:$0xff] %vm577, %v709
        %801 = vst.msk [vmem:[%s787 + $0x99] sm:$0xff] %vm577, %v712
        %802 = vst.msk [vmem:[%s787 + $0xa9] sm:$0xff] %vm577, %v717
        %803 = vst.msk [vmem:[%s787 + $0xb1] sm:$0xff] %vm577, %v720
        %804 = vst.msk [vmem:[%s787 + $0xc1] sm:$0xff] %vm577, %v725
        %805 = vst.msk [vmem:[%s787 + $0xc9] sm:$0xff] %vm577, %v728
        %806 = vst.msk [vmem:[%s787 + $0xd9] sm:$0xff] %vm577, %v733
        %807 = vst.msk [vmem:[%s787 + $0xe1] sm:$0xff] %vm577, %v736
        %808 = vst.msk [vmem:[%s787 + $0xf1] sm:$0xff] %vm577, %v741
        %809 = vst.msk [vmem:[%s787 + $0xf9] sm:$0xff] %vm577, %v744
        %810 = vst.msk [vmem:[%s787 + $0x109] sm:$0xff] %vm577, %v749
        %811 = vst.msk [vmem:[%s787 + $0x111] sm:$0xff] %vm577, %v752
        %812 = vst.msk [vmem:[%s787 + $0x121] sm:$0xff] %vm577, %v757
        %813 = vst.msk [vmem:[%s787 + $0x129] sm:$0xff] %vm577, %v760
        %814 = vst.msk [vmem:[%s787 + $0x139] sm:$0xff] %vm577, %v765
        %815 = vst.msk [vmem:[%s787 + $0x141] sm:$0xff] %vm577, %v768
        %816 = vst.msk [vmem:[%s787 + $0x151] sm:$0xff] %vm577, %v773
        %817 = vst.msk [vmem:[%s787 + $0x159] sm:$0xff] %vm577, %v776
        %818 = vst.msk [vmem:[%s787 + $0x169] sm:$0xff] %vm577, %v781
        %819 = vst.msk [vmem:[%s787 + $0x171] sm:$0xff] %vm577, %v784
        %v820 = vld [vmem:[#allocation2 + $0x1] sm:$0xff]
        %v821 = vld [vmem:[#allocation2 + $0x9] sm:$0xff]
        %v822 = vld [vmem:[#allocation2 + $0x19] sm:$0xff]
        %v823 = vld [vmem:[#allocation2 + $0x21] sm:$0xff]
        %v824 = vld [vmem:[#allocation2 + $0x31] sm:$0xff]
        %v825 = vld [vmem:[#allocation2 + $0x39] sm:$0xff]
        %v826 = vld [vmem:[#allocation2 + $0x49] sm:$0xff]
        %v827 = vld [vmem:[#allocation2 + $0x51] sm:$0xff]
        %v828 = vld [vmem:[#allocation2 + $0x61] sm:$0xff]
        %v829 = vld [vmem:[#allocation2 + $0x69] sm:$0xff]
        %v830 = vld [vmem:[#allocation2 + $0x79] sm:$0xff]
        %v831 = vld [vmem:[#allocation2 + $0x81] sm:$0xff]
        %v832 = vld [vmem:[#allocation2 + $0x91] sm:$0xff]
        %v833 = vld [vmem:[#allocation2 + $0x99] sm:$0xff]
        %v834 = vld [vmem:[#allocation2 + $0xa9] sm:$0xff]
        %v835 = vld [vmem:[#allocation2 + $0xb1] sm:$0xff]
        %v836 = vld [vmem:[#allocation2 + $0xc1] sm:$0xff]
        %v837 = vld [vmem:[#allocation2 + $0xc9] sm:$0xff]
        %v838 = vld [vmem:[#allocation2 + $0xd9] sm:$0xff]
        %v839 = vld [vmem:[#allocation2 + $0xe1] sm:$0xff]
        %v840 = vld [vmem:[#allocation2 + $0xf1] sm:$0xff]
        %v841 = vld [vmem:[#allocation2 + $0xf9] sm:$0xff]
        %v842 = vld [vmem:[#allocation2 + $0x109] sm:$0xff]
        %v843 = vld [vmem:[#allocation2 + $0x111] sm:$0xff]
        %v844 = vld [vmem:[#allocation2 + $0x121] sm:$0xff]
        %v845 = vld [vmem:[#allocation2 + $0x129] sm:$0xff]
        %v846 = vld [vmem:[#allocation2 + $0x139] sm:$0xff]
        %v847 = vld [vmem:[#allocation2 + $0x141] sm:$0xff]
        %v848 = vld [vmem:[#allocation2 + $0x151] sm:$0xff]
        %v849 = vld [vmem:[#allocation2 + $0x159] sm:$0xff]
        %v850 = vld [vmem:[#allocation2 + $0x169] sm:$0xff]
        %v851 = vld [vmem:[#allocation2 + $0x171] sm:$0xff]
        %v852 = vld [vmem:[%s3] sm:$0x1]
        %v853 = vld [vmem:[%s4] sm:$0x1]
        %v854 = vlaneseq
        %v855 = vshrl.u32 %v854, 7
        %v856 = vsub.s32 0, %v855
        %v857 = vrot.slane %v852, %v856
        %v858 = vmul.f32 %v820, %v857
        %v859 = vmul.f32 %v821, %v857
        %v860 = vmul.f32 %v822, %v857
        %v861 = vmul.f32 %v823, %v857
        %v862 = vmul.f32 %v824, %v857
        %v863 = vmul.f32 %v825, %v857
        %v864 = vmul.f32 %v826, %v857
        %v865 = vmul.f32 %v827, %v857
        %v866 = vmul.f32 %v828, %v857
        %v867 = vmul.f32 %v829, %v857
        %v868 = vmul.f32 %v830, %v857
        %v869 = vmul.f32 %v831, %v857
        %v870 = vmul.f32 %v832, %v857
        %v871 = vmul.f32 %v833, %v857
        %v872 = vmul.f32 %v834, %v857
        %v873 = vmul.f32 %v835, %v857
        %v874 = vmul.f32 %v836, %v857
        %v875 = vmul.f32 %v837, %v857
        %v876 = vmul.f32 %v838, %v857
        %v877 = vmul.f32 %v839, %v857
        %v878 = vmul.f32 %v840, %v857
        %v879 = vmul.f32 %v841, %v857
        %v880 = vmul.f32 %v842, %v857
        %v881 = vmul.f32 %v843, %v857
        %v882 = vmul.f32 %v844, %v857
        %v883 = vmul.f32 %v845, %v857
        %v884 = vmul.f32 %v846, %v857
        %v885 = vmul.f32 %v847, %v857
        %v886 = vmul.f32 %v848, %v857
        %v887 = vmul.f32 %v849, %v857
        %v888 = vmul.f32 %v850, %v857
        %v889 = vmul.f32 %v851, %v857
        %v890 = vlaneseq
        %v891 = vshrl.u32 %v890, 7
        %v892 = vsub.s32 0, %v891
        %v893 = vrot.slane %v853, %v892
        %v894 = vadd.f32 %v858, %v893
        %v895 = vadd.f32 %v859, %v893
        %v896 = vadd.f32 %v860, %v893
        %v897 = vadd.f32 %v861, %v893
        %v898 = vadd.f32 %v862, %v893
        %v899 = vadd.f32 %v863, %v893
        %v900 = vadd.f32 %v864, %v893
        %v901 = vadd.f32 %v865, %v893
        %v902 = vadd.f32 %v866, %v893
        %v903 = vadd.f32 %v867, %v893
        %v904 = vadd.f32 %v868, %v893
        %v905 = vadd.f32 %v869, %v893
        %v906 = vadd.f32 %v870, %v893
        %v907 = vadd.f32 %v871, %v893
        %v908 = vadd.f32 %v872, %v893
        %v909 = vadd.f32 %v873, %v893
        %v910 = vadd.f32 %v874, %v893
        %v911 = vadd.f32 %v875, %v893
        %v912 = vadd.f32 %v876, %v893
        %v913 = vadd.f32 %v877, %v893
        %v914 = vadd.f32 %v878, %v893
        %v915 = vadd.f32 %v879, %v893
        %v916 = vadd.f32 %v880, %v893
        %v917 = vadd.f32 %v881, %v893
        %v918 = vadd.f32 %v882, %v893
        %v919 = vadd.f32 %v883, %v893
        %v920 = vadd.f32 %v884, %v893
        %v921 = vadd.f32 %v885, %v893
        %v922 = vadd.f32 %v886, %v893
        %v923 = vadd.f32 %v887, %v893
        %v924 = vadd.f32 %v888, %v893
        %v925 = vadd.f32 %v889, %v893
        %v926 = vadd.f32 %v894, %v661
        %v927 = vadd.f32 %v895, %v664
        %v928 = vadd.f32 %v896, %v669
        %v929 = vadd.f32 %v897, %v672
        %v930 = vadd.f32 %v898, %v677
        %v931 = vadd.f32 %v899, %v680
        %v932 = vadd.f32 %v900, %v685
        %v933 = vadd.f32 %v901, %v688
        %v934 = vadd.f32 %v902, %v693
        %v935 = vadd.f32 %v903, %v696
        %v936 = vadd.f32 %v904, %v701
        %v937 = vadd.f32 %v905, %v704
        %v938 = vadd.f32 %v906, %v709
        %v939 = vadd.f32 %v907, %v712
        %v940 = vadd.f32 %v908, %v717
        %v941 = vadd.f32 %v909, %v720
        %v942 = vadd.f32 %v910, %v725
        %v943 = vadd.f32 %v911, %v728
        %v944 = vadd.f32 %v912, %v733
        %v945 = vadd.f32 %v913, %v736
        %v946 = vadd.f32 %v914, %v741
        %v947 = vadd.f32 %v915, %v744
        %v948 = vadd.f32 %v916, %v749
        %v949 = vadd.f32 %v917, %v752
        %v950 = vadd.f32 %v918, %v757
        %v951 = vadd.f32 %v919, %v760
        %v952 = vadd.f32 %v920, %v765
        %v953 = vadd.f32 %v921, %v768
        %v954 = vadd.f32 %v922, %v773
        %v955 = vadd.f32 %v923, %v776
        %v956 = vadd.f32 %v924, %v781
        %v957 = vadd.f32 %v925, %v784
        %v958 = vmax.f32 %v926, 0.0
        %v959 = vmax.f32 %v927, 0.0
        %v960 = vmax.f32 %v928, 0.0
        %v961 = vmax.f32 %v929, 0.0
        %v962 = vmax.f32 %v930, 0.0
        %v963 = vmax.f32 %v931, 0.0
        %v964 = vmax.f32 %v932, 0.0
        %v965 = vmax.f32 %v933, 0.0
        %v966 = vmax.f32 %v934, 0.0
        %v967 = vmax.f32 %v935, 0.0
        %v968 = vmax.f32 %v936, 0.0
        %v969 = vmax.f32 %v937, 0.0
        %v970 = vmax.f32 %v938, 0.0
        %v971 = vmax.f32 %v939, 0.0
        %v972 = vmax.f32 %v940, 0.0
        %v973 = vmax.f32 %v941, 0.0
        %v974 = vmax.f32 %v942, 0.0
        %v975 = vmax.f32 %v943, 0.0
        %v976 = vmax.f32 %v944, 0.0
        %v977 = vmax.f32 %v945, 0.0
        %v978 = vmax.f32 %v946, 0.0
        %v979 = vmax.f32 %v947, 0.0
        %v980 = vmax.f32 %v948, 0.0
        %v981 = vmax.f32 %v949, 0.0
        %v982 = vmax.f32 %v950, 0.0
        %v983 = vmax.f32 %v951, 0.0
        %v984 = vmax.f32 %v952, 0.0
        %v985 = vmax.f32 %v953, 0.0
        %v986 = vmax.f32 %v954, 0.0
        %v987 = vmax.f32 %v955, 0.0
        %v988 = vmax.f32 %v956, 0.0
        %v989 = vmax.f32 %v957, 0.0
        %v990 = vsel %vm446, %v958, %v661
        %v991 = vsel %vm447, %v959, %v664
        %v992 = vsel %vm448, %v960, %v669
        %v993 = vsel %vm449, %v961, %v672
        %v994 = vsel %vm450, %v962, %v677
        %v995 = vsel %vm451, %v963, %v680
        %v996 = vsel %vm452, %v964, %v685
        %v997 = vsel %vm453, %v965, %v688
        %v998 = vsel %vm454, %v966, %v693
        %v999 = vsel %vm455, %v967, %v696
        %v1000 = vsel %vm456, %v968, %v701
        %v1001 = vsel %vm457, %v969, %v704
        %v1002 = vsel %vm458, %v970, %v709
        %v1003 = vsel %vm459, %v971, %v712
        %v1004 = vsel %vm460, %v972, %v717
        %v1005 = vsel %vm461, %v973, %v720
        %v1006 = vsel %vm462, %v974, %v725
        %v1007 = vsel %vm463, %v975, %v728
        %v1008 = vsel %vm464, %v976, %v733
        %v1009 = vsel %vm465, %v977, %v736
        %v1010 = vsel %vm466, %v978, %v741
        %v1011 = vsel %vm467, %v979, %v744
        %v1012 = vsel %vm468, %v980, %v749
        %v1013 = vsel %vm469, %v981, %v752
        %v1014 = vsel %vm470, %v982, %v757
        %v1015 = vsel %vm471, %v983, %v760
        %v1016 = vsel %vm472, %v984, %v765
        %v1017 = vsel %vm473, %v985, %v768
        %v1018 = vsel %vm474, %v986, %v773
        %v1019 = vsel %vm475, %v987, %v776
        %v1020 = vsel %vm476, %v988, %v781
        %v1021 = vsel %vm477, %v989, %v784
        %v1022 = vpack.c.bf16 %v991, %v990
        %v1023 = vpack.c.bf16 %v993, %v992
        %v1024 = vpack.c.bf16 %v995, %v994
        %v1025 = vpack.c.bf16 %v997, %v996
        %v1026 = vpack.c.bf16 %v999, %v998
        %v1027 = vpack.c.bf16 %v1001, %v1000
        %v1028 = vpack.c.bf16 %v1003, %v1002
        %v1029 = vpack.c.bf16 %v1005, %v1004
        %v1030 = vpack.c.bf16 %v1007, %v1006
        %v1031 = vpack.c.bf16 %v1009, %v1008
        %v1032 = vpack.c.bf16 %v1011, %v1010
        %v1033 = vpack.c.bf16 %v1013, %v1012
        %v1034 = vpack.c.bf16 %v1015, %v1014
        %v1035 = vpack.c.bf16 %v1017, %v1016
        %v1036 = vpack.c.bf16 %v1019, %v1018
        %v1037 = vpack.c.bf16 %v1021, %v1020
        %v1038 = vld [vmem:[%s787 + $0x2] sm:$0xff]
        %v1039 = vld [vmem:[%s787 + $0xa] sm:$0xff]
        %v1040 = vld [vmem:[%s787 + $0x1a] sm:$0xff]
        %v1041 = vld [vmem:[%s787 + $0x22] sm:$0xff]
        %v1042 = vld [vmem:[%s787 + $0x32] sm:$0xff]
        %v1043 = vld [vmem:[%s787 + $0x3a] sm:$0xff]
        %v1044 = vld [vmem:[%s787 + $0x4a] sm:$0xff]
        %v1045 = vld [vmem:[%s787 + $0x52] sm:$0xff]
        %v1046 = vld [vmem:[%s787 + $0x62] sm:$0xff]
        %v1047 = vld [vmem:[%s787 + $0x6a] sm:$0xff]
        %v1048 = vld [vmem:[%s787 + $0x7a] sm:$0xff]
        %v1049 = vld [vmem:[%s787 + $0x82] sm:$0xff]
        %v1050 = vld [vmem:[%s787 + $0x92] sm:$0xff]
        %v1051 = vld [vmem:[%s787 + $0x9a] sm:$0xff]
        %v1052 = vld [vmem:[%s787 + $0xaa] sm:$0xff]
        %v1053 = vld [vmem:[%s787 + $0xb2] sm:$0xff]
        %v1054 = vld [vmem:[%s787 + $0xc2] sm:$0xff]
        %v1055 = vld [vmem:[%s787 + $0xca] sm:$0xff]
        %v1056 = vld [vmem:[%s787 + $0xda] sm:$0xff]
        %v1057 = vld [vmem:[%s787 + $0xe2] sm:$0xff]
        %v1058 = vld [vmem:[%s787 + $0xf2] sm:$0xff]
        %v1059 = vld [vmem:[%s787 + $0xfa] sm:$0xff]
        %v1060 = vld [vmem:[%s787 + $0x10a] sm:$0xff]
        %v1061 = vld [vmem:[%s787 + $0x112] sm:$0xff]
        %v1062 = vld [vmem:[%s787 + $0x122] sm:$0xff]
        %v1063 = vld [vmem:[%s787 + $0x12a] sm:$0xff]
        %v1064 = vld [vmem:[%s787 + $0x13a] sm:$0xff]
        %v1065 = vld [vmem:[%s787 + $0x142] sm:$0xff]
        %v1066 = vld [vmem:[%s787 + $0x152] sm:$0xff]
        %v1067 = vld [vmem:[%s787 + $0x15a] sm:$0xff]
        %v1068 = vld [vmem:[%s787 + $0x16a] sm:$0xff]
        %v1069 = vld [vmem:[%s787 + $0x172] sm:$0xff]
        %v1070 = vld [vmem:[%s3 + $0x1] sm:$0x1]
        %v1071 = vld [vmem:[%s4 + $0x1] sm:$0x1]
        %v1072 = vlaneseq
        %v1073 = vshrl.u32 %v1072, 7
        %v1074 = vsub.s32 0, %v1073
        %v1075 = vrot.slane %v1070, %v1074
        %v1076 = vmul.f32 %v1038, %v1075
        %v1077 = vmul.f32 %v1039, %v1075
        %v1078 = vmul.f32 %v1040, %v1075
        %v1079 = vmul.f32 %v1041, %v1075
        %v1080 = vmul.f32 %v1042, %v1075
        %v1081 = vmul.f32 %v1043, %v1075
        %v1082 = vmul.f32 %v1044, %v1075
        %v1083 = vmul.f32 %v1045, %v1075
        %v1084 = vmul.f32 %v1046, %v1075
        %v1085 = vmul.f32 %v1047, %v1075
        %v1086 = vmul.f32 %v1048, %v1075
        %v1087 = vmul.f32 %v1049, %v1075
        %v1088 = vmul.f32 %v1050, %v1075
        %v1089 = vmul.f32 %v1051, %v1075
        %v1090 = vmul.f32 %v1052, %v1075
        %v1091 = vmul.f32 %v1053, %v1075
        %v1092 = vmul.f32 %v1054, %v1075
        %v1093 = vmul.f32 %v1055, %v1075
        %v1094 = vmul.f32 %v1056, %v1075
        %v1095 = vmul.f32 %v1057, %v1075
        %v1096 = vmul.f32 %v1058, %v1075
        %v1097 = vmul.f32 %v1059, %v1075
        %v1098 = vmul.f32 %v1060, %v1075
        %v1099 = vmul.f32 %v1061, %v1075
        %v1100 = vmul.f32 %v1062, %v1075
        %v1101 = vmul.f32 %v1063, %v1075
        %v1102 = vmul.f32 %v1064, %v1075
        %v1103 = vmul.f32 %v1065, %v1075
        %v1104 = vmul.f32 %v1066, %v1075
        %v1105 = vmul.f32 %v1067, %v1075
        %v1106 = vmul.f32 %v1068, %v1075
        %v1107 = vmul.f32 %v1069, %v1075
        %v1108 = vlaneseq
        %v1109 = vshrl.u32 %v1108, 7
        %v1110 = vsub.s32 0, %v1109
        %v1111 = vrot.slane %v1071, %v1110
        %v1112 = vadd.f32 %v1076, %v1111
        %v1113 = vadd.f32 %v1077, %v1111
        %v1114 = vadd.f32 %v1078, %v1111
        %v1115 = vadd.f32 %v1079, %v1111
        %v1116 = vadd.f32 %v1080, %v1111
        %v1117 = vadd.f32 %v1081, %v1111
        %v1118 = vadd.f32 %v1082, %v1111
        %v1119 = vadd.f32 %v1083, %v1111
        %v1120 = vadd.f32 %v1084, %v1111
        %v1121 = vadd.f32 %v1085, %v1111
        %v1122 = vadd.f32 %v1086, %v1111
        %v1123 = vadd.f32 %v1087, %v1111
        %v1124 = vadd.f32 %v1088, %v1111
        %v1125 = vadd.f32 %v1089, %v1111
        %v1126 = vadd.f32 %v1090, %v1111
        %v1127 = vadd.f32 %v1091, %v1111
        %v1128 = vadd.f32 %v1092, %v1111
        %v1129 = vadd.f32 %v1093, %v1111
        %v1130 = vadd.f32 %v1094, %v1111
        %v1131 = vadd.f32 %v1095, %v1111
        %v1132 = vadd.f32 %v1096, %v1111
        %v1133 = vadd.f32 %v1097, %v1111
        %v1134 = vadd.f32 %v1098, %v1111
        %v1135 = vadd.f32 %v1099, %v1111
        %v1136 = vadd.f32 %v1100, %v1111
        %v1137 = vadd.f32 %v1101, %v1111
        %v1138 = vadd.f32 %v1102, %v1111
        %v1139 = vadd.f32 %v1103, %v1111
        %v1140 = vadd.f32 %v1104, %v1111
        %v1141 = vadd.f32 %v1105, %v1111
        %v1142 = vadd.f32 %v1106, %v1111
        %v1143 = vadd.f32 %v1107, %v1111
        %v1144 = vadd.f32 %v1112, %v661
        %v1145 = vadd.f32 %v1113, %v664
        %v1146 = vadd.f32 %v1114, %v669
        %v1147 = vadd.f32 %v1115, %v672
        %v1148 = vadd.f32 %v1116, %v677
        %v1149 = vadd.f32 %v1117, %v680
        %v1150 = vadd.f32 %v1118, %v685
        %v1151 = vadd.f32 %v1119, %v688
        %v1152 = vadd.f32 %v1120, %v693
        %v1153 = vadd.f32 %v1121, %v696
        %v1154 = vadd.f32 %v1122, %v701
        %v1155 = vadd.f32 %v1123, %v704
        %v1156 = vadd.f32 %v1124, %v709
        %v1157 = vadd.f32 %v1125, %v712
        %v1158 = vadd.f32 %v1126, %v717
        %v1159 = vadd.f32 %v1127, %v720
        %v1160 = vadd.f32 %v1128, %v725
        %v1161 = vadd.f32 %v1129, %v728
        %v1162 = vadd.f32 %v1130, %v733
        %v1163 = vadd.f32 %v1131, %v736
        %v1164 = vadd.f32 %v1132, %v741
        %v1165 = vadd.f32 %v1133, %v744
        %v1166 = vadd.f32 %v1134, %v749
        %v1167 = vadd.f32 %v1135, %v752
        %v1168 = vadd.f32 %v1136, %v757
        %v1169 = vadd.f32 %v1137, %v760
        %v1170 = vadd.f32 %v1138, %v765
        %v1171 = vadd.f32 %v1139, %v768
        %v1172 = vadd.f32 %v1140, %v773
        %v1173 = vadd.f32 %v1141, %v776
        %v1174 = vadd.f32 %v1142, %v781
        %v1175 = vadd.f32 %v1143, %v784
        %v1176 = vmax.f32 %v1144, 0.0
        %v1177 = vmax.f32 %v1145, 0.0
        %v1178 = vmax.f32 %v1146, 0.0
        %v1179 = vmax.f32 %v1147, 0.0
        %v1180 = vmax.f32 %v1148, 0.0
        %v1181 = vmax.f32 %v1149, 0.0
        %v1182 = vmax.f32 %v1150, 0.0
        %v1183 = vmax.f32 %v1151, 0.0
        %v1184 = vmax.f32 %v1152, 0.0
        %v1185 = vmax.f32 %v1153, 0.0
        %v1186 = vmax.f32 %v1154, 0.0
        %v1187 = vmax.f32 %v1155, 0.0
        %v1188 = vmax.f32 %v1156, 0.0
        %v1189 = vmax.f32 %v1157, 0.0
        %v1190 = vmax.f32 %v1158, 0.0
        %v1191 = vmax.f32 %v1159, 0.0
        %v1192 = vmax.f32 %v1160, 0.0
        %v1193 = vmax.f32 %v1161, 0.0
        %v1194 = vmax.f32 %v1162, 0.0
        %v1195 = vmax.f32 %v1163, 0.0
        %v1196 = vmax.f32 %v1164, 0.0
        %v1197 = vmax.f32 %v1165, 0.0
        %v1198 = vmax.f32 %v1166, 0.0
        %v1199 = vmax.f32 %v1167, 0.0
        %v1200 = vmax.f32 %v1168, 0.0
        %v1201 = vmax.f32 %v1169, 0.0
        %v1202 = vmax.f32 %v1170, 0.0
        %v1203 = vmax.f32 %v1171, 0.0
        %v1204 = vmax.f32 %v1172, 0.0
        %v1205 = vmax.f32 %v1173, 0.0
        %v1206 = vmax.f32 %v1174, 0.0
        %v1207 = vmax.f32 %v1175, 0.0
        %v1208 = vsel %vm478, %v1176, %v661
        %v1209 = vsel %vm479, %v1177, %v664
        %v1210 = vsel %vm478, %v1178, %v669
        %v1211 = vsel %vm479, %v1179, %v672
        %v1212 = vsel %vm478, %v1180, %v677
        %v1213 = vsel %vm479, %v1181, %v680
        %v1214 = vsel %vm478, %v1182, %v685
        %v1215 = vsel %vm479, %v1183, %v688
        %v1216 = vsel %vm478, %v1184, %v693
        %v1217 = vsel %vm479, %v1185, %v696
        %v1218 = vsel %vm478, %v1186, %v701
        %v1219 = vsel %vm479, %v1187, %v704
        %v1220 = vsel %vm478, %v1188, %v709
        %v1221 = vsel %vm479, %v1189, %v712
        %v1222 = vsel %vm478, %v1190, %v717
        %v1223 = vsel %vm479, %v1191, %v720
        %v1224 = vsel %vm478, %v1192, %v725
        %v1225 = vsel %vm479, %v1193, %v728
        %v1226 = vsel %vm478, %v1194, %v733
        %v1227 = vsel %vm479, %v1195, %v736
        %v1228 = vsel %vm478, %v1196, %v741
        %v1229 = vsel %vm479, %v1197, %v744
        %v1230 = vsel %vm478, %v1198, %v749
        %v1231 = vsel %vm479, %v1199, %v752
        %v1232 = vsel %vm478, %v1200, %v757
        %v1233 = vsel %vm479, %v1201, %v760
        %v1234 = vsel %vm478, %v1202, %v765
        %v1235 = vsel %vm479, %v1203, %v768
        %v1236 = vsel %vm478, %v1204, %v773
        %v1237 = vsel %vm479, %v1205, %v776
        %v1238 = vsel %vm478, %v1206, %v781
        %v1239 = vsel %vm479, %v1207, %v784
        %v1240 = vpack.c.bf16 %v1209, %v1208
        %v1241 = vpack.c.bf16 %v1211, %v1210
        %v1242 = vpack.c.bf16 %v1213, %v1212
        %v1243 = vpack.c.bf16 %v1215, %v1214
        %v1244 = vpack.c.bf16 %v1217, %v1216
        %v1245 = vpack.c.bf16 %v1219, %v1218
        %v1246 = vpack.c.bf16 %v1221, %v1220
        %v1247 = vpack.c.bf16 %v1223, %v1222
        %v1248 = vpack.c.bf16 %v1225, %v1224
        %v1249 = vpack.c.bf16 %v1227, %v1226
        %v1250 = vpack.c.bf16 %v1229, %v1228
        %v1251 = vpack.c.bf16 %v1231, %v1230
        %v1252 = vpack.c.bf16 %v1233, %v1232
        %v1253 = vpack.c.bf16 %v1235, %v1234
        %v1254 = vpack.c.bf16 %v1237, %v1236
        %v1255 = vpack.c.bf16 %v1239, %v1238
        %s1256 = scalar_lea.vmem [#allocation2], 48
        %v1257 = vld [vmem:[%s1256 + $0x1] sm:$0xff]
        %v1258 = vld [vmem:[%s1256 + $0x9] sm:$0xff]
        %v1259 = vld [vmem:[%s1256 + $0x19] sm:$0xff]
        %v1260 = vld [vmem:[%s1256 + $0x21] sm:$0xff]
        %v1261 = vld [vmem:[%s1256 + $0x31] sm:$0xff]
        %v1262 = vld [vmem:[%s1256 + $0x39] sm:$0xff]
        %v1263 = vld [vmem:[%s1256 + $0x49] sm:$0xff]
        %v1264 = vld [vmem:[%s1256 + $0x51] sm:$0xff]
        %v1265 = vld [vmem:[%s1256 + $0x61] sm:$0xff]
        %v1266 = vld [vmem:[%s1256 + $0x69] sm:$0xff]
        %v1267 = vld [vmem:[%s1256 + $0x79] sm:$0xff]
        %v1268 = vld [vmem:[%s1256 + $0x81] sm:$0xff]
        %v1269 = vld [vmem:[%s1256 + $0x91] sm:$0xff]
        %v1270 = vld [vmem:[%s1256 + $0x99] sm:$0xff]
        %v1271 = vld [vmem:[%s1256 + $0xa9] sm:$0xff]
        %v1272 = vld [vmem:[%s1256 + $0xb1] sm:$0xff]
        %v1273 = vld [vmem:[%s1256 + $0xc1] sm:$0xff]
        %v1274 = vld [vmem:[%s1256 + $0xc9] sm:$0xff]
        %v1275 = vld [vmem:[%s1256 + $0xd9] sm:$0xff]
        %v1276 = vld [vmem:[%s1256 + $0xe1] sm:$0xff]
        %v1277 = vld [vmem:[%s1256 + $0xf1] sm:$0xff]
        %v1278 = vld [vmem:[%s1256 + $0xf9] sm:$0xff]
        %v1279 = vld [vmem:[%s1256 + $0x109] sm:$0xff]
        %v1280 = vld [vmem:[%s1256 + $0x111] sm:$0xff]
        %v1281 = vld [vmem:[%s1256 + $0x121] sm:$0xff]
        %v1282 = vld [vmem:[%s1256 + $0x129] sm:$0xff]
        %v1283 = vld [vmem:[%s1256 + $0x139] sm:$0xff]
        %v1284 = vld [vmem:[%s1256 + $0x141] sm:$0xff]
        %v1285 = vld [vmem:[%s1256 + $0x151] sm:$0xff]
        %v1286 = vld [vmem:[%s1256 + $0x159] sm:$0xff]
        %v1287 = vld [vmem:[%s1256 + $0x169] sm:$0xff]
        %v1288 = vld [vmem:[%s1256 + $0x171] sm:$0xff]
        %v1289 = vld [vmem:[%s3 + $0x2] sm:$0x1]
        %v1290 = vld [vmem:[%s4 + $0x2] sm:$0x1]
        %v1291 = vlaneseq
        %v1292 = vshrl.u32 %v1291, 7
        %v1293 = vsub.s32 0, %v1292
        %v1294 = vrot.slane %v1289, %v1293
        %v1295 = vmul.f32 %v1257, %v1294
        %v1296 = vmul.f32 %v1258, %v1294
        %v1297 = vmul.f32 %v1259, %v1294
        %v1298 = vmul.f32 %v1260, %v1294
        %v1299 = vmul.f32 %v1261, %v1294
        %v1300 = vmul.f32 %v1262, %v1294
        %v1301 = vmul.f32 %v1263, %v1294
        %v1302 = vmul.f32 %v1264, %v1294
        %v1303 = vmul.f32 %v1265, %v1294
        %v1304 = vmul.f32 %v1266, %v1294
        %v1305 = vmul.f32 %v1267, %v1294
        %v1306 = vmul.f32 %v1268, %v1294
        %v1307 = vmul.f32 %v1269, %v1294
        %v1308 = vmul.f32 %v1270, %v1294
        %v1309 = vmul.f32 %v1271, %v1294
        %v1310 = vmul.f32 %v1272, %v1294
        %v1311 = vmul.f32 %v1273, %v1294
        %v1312 = vmul.f32 %v1274, %v1294
        %v1313 = vmul.f32 %v1275, %v1294
        %v1314 = vmul.f32 %v1276, %v1294
        %v1315 = vmul.f32 %v1277, %v1294
        %v1316 = vmul.f32 %v1278, %v1294
        %v1317 = vmul.f32 %v1279, %v1294
        %v1318 = vmul.f32 %v1280, %v1294
        %v1319 = vmul.f32 %v1281, %v1294
        %v1320 = vmul.f32 %v1282, %v1294
        %v1321 = vmul.f32 %v1283, %v1294
        %v1322 = vmul.f32 %v1284, %v1294
        %v1323 = vmul.f32 %v1285, %v1294
        %v1324 = vmul.f32 %v1286, %v1294
        %v1325 = vmul.f32 %v1287, %v1294
        %v1326 = vmul.f32 %v1288, %v1294
        %v1327 = vlaneseq
        %v1328 = vshrl.u32 %v1327, 7
        %v1329 = vsub.s32 0, %v1328
        %v1330 = vrot.slane %v1290, %v1329
        %v1331 = vadd.f32 %v1295, %v1330
        %v1332 = vadd.f32 %v1296, %v1330
        %v1333 = vadd.f32 %v1297, %v1330
        %v1334 = vadd.f32 %v1298, %v1330
        %v1335 = vadd.f32 %v1299, %v1330
        %v1336 = vadd.f32 %v1300, %v1330
        %v1337 = vadd.f32 %v1301, %v1330
        %v1338 = vadd.f32 %v1302, %v1330
        %v1339 = vadd.f32 %v1303, %v1330
        %v1340 = vadd.f32 %v1304, %v1330
        %v1341 = vadd.f32 %v1305, %v1330
        %v1342 = vadd.f32 %v1306, %v1330
        %v1343 = vadd.f32 %v1307, %v1330
        %v1344 = vadd.f32 %v1308, %v1330
        %v1345 = vadd.f32 %v1309, %v1330
        %v1346 = vadd.f32 %v1310, %v1330
        %v1347 = vadd.f32 %v1311, %v1330
        %v1348 = vadd.f32 %v1312, %v1330
        %v1349 = vadd.f32 %v1313, %v1330
        %v1350 = vadd.f32 %v1314, %v1330
        %v1351 = vadd.f32 %v1315, %v1330
        %v1352 = vadd.f32 %v1316, %v1330
        %v1353 = vadd.f32 %v1317, %v1330
        %v1354 = vadd.f32 %v1318, %v1330
        %v1355 = vadd.f32 %v1319, %v1330
        %v1356 = vadd.f32 %v1320, %v1330
        %v1357 = vadd.f32 %v1321, %v1330
        %v1358 = vadd.f32 %v1322, %v1330
        %v1359 = vadd.f32 %v1323, %v1330
        %v1360 = vadd.f32 %v1324, %v1330
        %v1361 = vadd.f32 %v1325, %v1330
        %v1362 = vadd.f32 %v1326, %v1330
        %v1363 = vadd.f32 %v1331, %v661
        %v1364 = vadd.f32 %v1332, %v664
        %v1365 = vadd.f32 %v1333, %v669
        %v1366 = vadd.f32 %v1334, %v672
        %v1367 = vadd.f32 %v1335, %v677
        %v1368 = vadd.f32 %v1336, %v680
        %v1369 = vadd.f32 %v1337, %v685
        %v1370 = vadd.f32 %v1338, %v688
        %v1371 = vadd.f32 %v1339, %v693
        %v1372 = vadd.f32 %v1340, %v696
        %v1373 = vadd.f32 %v1341, %v701
        %v1374 = vadd.f32 %v1342, %v704
        %v1375 = vadd.f32 %v1343, %v709
        %v1376 = vadd.f32 %v1344, %v712
        %v1377 = vadd.f32 %v1345, %v717
        %v1378 = vadd.f32 %v1346, %v720
        %v1379 = vadd.f32 %v1347, %v725
        %v1380 = vadd.f32 %v1348, %v728
        %v1381 = vadd.f32 %v1349, %v733
        %v1382 = vadd.f32 %v1350, %v736
        %v1383 = vadd.f32 %v1351, %v741
        %v1384 = vadd.f32 %v1352, %v744
        %v1385 = vadd.f32 %v1353, %v749
        %v1386 = vadd.f32 %v1354, %v752
        %v1387 = vadd.f32 %v1355, %v757
        %v1388 = vadd.f32 %v1356, %v760
        %v1389 = vadd.f32 %v1357, %v765
        %v1390 = vadd.f32 %v1358, %v768
        %v1391 = vadd.f32 %v1359, %v773
        %v1392 = vadd.f32 %v1360, %v776
        %v1393 = vadd.f32 %v1361, %v781
        %v1394 = vadd.f32 %v1362, %v784
        %v1395 = vmax.f32 %v1363, 0.0
        %v1396 = vmax.f32 %v1364, 0.0
        %v1397 = vmax.f32 %v1365, 0.0
        %v1398 = vmax.f32 %v1366, 0.0
        %v1399 = vmax.f32 %v1367, 0.0
        %v1400 = vmax.f32 %v1368, 0.0
        %v1401 = vmax.f32 %v1369, 0.0
        %v1402 = vmax.f32 %v1370, 0.0
        %v1403 = vmax.f32 %v1371, 0.0
        %v1404 = vmax.f32 %v1372, 0.0
        %v1405 = vmax.f32 %v1373, 0.0
        %v1406 = vmax.f32 %v1374, 0.0
        %v1407 = vmax.f32 %v1375, 0.0
        %v1408 = vmax.f32 %v1376, 0.0
        %v1409 = vmax.f32 %v1377, 0.0
        %v1410 = vmax.f32 %v1378, 0.0
        %v1411 = vmax.f32 %v1379, 0.0
        %v1412 = vmax.f32 %v1380, 0.0
        %v1413 = vmax.f32 %v1381, 0.0
        %v1414 = vmax.f32 %v1382, 0.0
        %v1415 = vmax.f32 %v1383, 0.0
        %v1416 = vmax.f32 %v1384, 0.0
        %v1417 = vmax.f32 %v1385, 0.0
        %v1418 = vmax.f32 %v1386, 0.0
        %v1419 = vmax.f32 %v1387, 0.0
        %v1420 = vmax.f32 %v1388, 0.0
        %v1421 = vmax.f32 %v1389, 0.0
        %v1422 = vmax.f32 %v1390, 0.0
        %v1423 = vmax.f32 %v1391, 0.0
        %v1424 = vmax.f32 %v1392, 0.0
        %v1425 = vmax.f32 %v1393, 0.0
        %v1426 = vmax.f32 %v1394, 0.0
        %v1427 = vsel %vm480, %v1395, %v661
        %v1428 = vsel %vm481, %v1396, %v664
        %v1429 = vsel %vm482, %v1397, %v669
        %v1430 = vsel %vm483, %v1398, %v672
        %v1431 = vsel %vm484, %v1399, %v677
        %v1432 = vsel %vm485, %v1400, %v680
        %v1433 = vsel %vm486, %v1401, %v685
        %v1434 = vsel %vm487, %v1402, %v688
        %v1435 = vsel %vm488, %v1403, %v693
        %v1436 = vsel %vm489, %v1404, %v696
        %v1437 = vsel %vm490, %v1405, %v701
        %v1438 = vsel %vm491, %v1406, %v704
        %v1439 = vsel %vm492, %v1407, %v709
        %v1440 = vsel %vm493, %v1408, %v712
        %v1441 = vsel %vm494, %v1409, %v717
        %v1442 = vsel %vm495, %v1410, %v720
        %v1443 = vsel %vm496, %v1411, %v725
        %v1444 = vsel %vm497, %v1412, %v728
        %v1445 = vsel %vm498, %v1413, %v733
        %v1446 = vsel %vm499, %v1414, %v736
        %v1447 = vsel %vm500, %v1415, %v741
        %v1448 = vsel %vm501, %v1416, %v744
        %v1449 = vsel %vm502, %v1417, %v749
        %v1450 = vsel %vm503, %v1418, %v752
        %v1451 = vsel %vm504, %v1419, %v757
        %v1452 = vsel %vm505, %v1420, %v760
        %v1453 = vsel %vm506, %v1421, %v765
        %v1454 = vsel %vm507, %v1422, %v768
        %v1455 = vsel %vm508, %v1423, %v773
        %v1456 = vsel %vm509, %v1424, %v776
        %v1457 = vsel %vm510, %v1425, %v781
        %v1458 = vsel %vm511, %v1426, %v784
        %v1459 = vpack.c.bf16 %v1428, %v1427
        %v1460 = vpack.c.bf16 %v1430, %v1429
        %v1461 = vpack.c.bf16 %v1432, %v1431
        %v1462 = vpack.c.bf16 %v1434, %v1433
        %v1463 = vpack.c.bf16 %v1436, %v1435
        %v1464 = vpack.c.bf16 %v1438, %v1437
        %v1465 = vpack.c.bf16 %v1440, %v1439
        %v1466 = vpack.c.bf16 %v1442, %v1441
        %v1467 = vpack.c.bf16 %v1444, %v1443
        %v1468 = vpack.c.bf16 %v1446, %v1445
        %v1469 = vpack.c.bf16 %v1448, %v1447
        %v1470 = vpack.c.bf16 %v1450, %v1449
        %v1471 = vpack.c.bf16 %v1452, %v1451
        %v1472 = vpack.c.bf16 %v1454, %v1453
        %v1473 = vpack.c.bf16 %v1456, %v1455
        %v1474 = vpack.c.bf16 %v1458, %v1457
        %v1475 = vld [vmem:[%s787] sm:$0xff]
        %v1476 = vld [vmem:[%s787 + $0x8] sm:$0xff]
        %v1477 = vld [vmem:[%s787 + $0x18] sm:$0xff]
        %v1478 = vld [vmem:[%s787 + $0x20] sm:$0xff]
        %v1479 = vld [vmem:[%s787 + $0x30] sm:$0xff]
        %v1480 = vld [vmem:[%s787 + $0x38] sm:$0xff]
        %v1481 = vld [vmem:[%s787 + $0x48] sm:$0xff]
        %v1482 = vld [vmem:[%s787 + $0x50] sm:$0xff]
        %v1483 = vld [vmem:[%s787 + $0x60] sm:$0xff]
        %v1484 = vld [vmem:[%s787 + $0x68] sm:$0xff]
        %v1485 = vld [vmem:[%s787 + $0x78] sm:$0xff]
        %v1486 = vld [vmem:[%s787 + $0x80] sm:$0xff]
        %v1487 = vld [vmem:[%s787 + $0x90] sm:$0xff]
        %v1488 = vld [vmem:[%s787 + $0x98] sm:$0xff]
        %v1489 = vld [vmem:[%s787 + $0xa8] sm:$0xff]
        %v1490 = vld [vmem:[%s787 + $0xb0] sm:$0xff]
        %v1491 = vld [vmem:[%s787 + $0xc0] sm:$0xff]
        %v1492 = vld [vmem:[%s787 + $0xc8] sm:$0xff]
        %v1493 = vld [vmem:[%s787 + $0xd8] sm:$0xff]
        %v1494 = vld [vmem:[%s787 + $0xe0] sm:$0xff]
        %v1495 = vld [vmem:[%s787 + $0xf0] sm:$0xff]
        %v1496 = vld [vmem:[%s787 + $0xf8] sm:$0xff]
        %v1497 = vld [vmem:[%s787 + $0x108] sm:$0xff]
        %v1498 = vld [vmem:[%s787 + $0x110] sm:$0xff]
        %v1499 = vld [vmem:[%s787 + $0x120] sm:$0xff]
        %v1500 = vld [vmem:[%s787 + $0x128] sm:$0xff]
        %v1501 = vld [vmem:[%s787 + $0x138] sm:$0xff]
        %v1502 = vld [vmem:[%s787 + $0x140] sm:$0xff]
        %v1503 = vld [vmem:[%s787 + $0x150] sm:$0xff]
        %v1504 = vld [vmem:[%s787 + $0x158] sm:$0xff]
        %v1505 = vld [vmem:[%s787 + $0x168] sm:$0xff]
        %v1506 = vld [vmem:[%s787 + $0x170] sm:$0xff]
        %v1507 = vld [vmem:[%s3 + $0x3] sm:$0x1]
        %v1508 = vld [vmem:[%s4 + $0x3] sm:$0x1]
        %v1509 = vlaneseq
        %v1510 = vshrl.u32 %v1509, 7
        %v1511 = vsub.s32 0, %v1510
        %v1512 = vrot.slane %v1507, %v1511
        %v1513 = vmul.f32 %v1475, %v1512
        %v1514 = vmul.f32 %v1476, %v1512
        %v1515 = vmul.f32 %v1477, %v1512
        %v1516 = vmul.f32 %v1478, %v1512
        %v1517 = vmul.f32 %v1479, %v1512
        %v1518 = vmul.f32 %v1480, %v1512
        %v1519 = vmul.f32 %v1481, %v1512
        %v1520 = vmul.f32 %v1482, %v1512
        %v1521 = vmul.f32 %v1483, %v1512
        %v1522 = vmul.f32 %v1484, %v1512
        %v1523 = vmul.f32 %v1485, %v1512
        %v1524 = vmul.f32 %v1486, %v1512
        %v1525 = vmul.f32 %v1487, %v1512
        %v1526 = vmul.f32 %v1488, %v1512
        %v1527 = vmul.f32 %v1489, %v1512
        %v1528 = vmul.f32 %v1490, %v1512
        %v1529 = vmul.f32 %v1491, %v1512
        %v1530 = vmul.f32 %v1492, %v1512
        %v1531 = vmul.f32 %v1493, %v1512
        %v1532 = vmul.f32 %v1494, %v1512
        %v1533 = vmul.f32 %v1495, %v1512
        %v1534 = vmul.f32 %v1496, %v1512
        %v1535 = vmul.f32 %v1497, %v1512
        %v1536 = vmul.f32 %v1498, %v1512
        %v1537 = vmul.f32 %v1499, %v1512
        %v1538 = vmul.f32 %v1500, %v1512
        %v1539 = vmul.f32 %v1501, %v1512
        %v1540 = vmul.f32 %v1502, %v1512
        %v1541 = vmul.f32 %v1503, %v1512
        %v1542 = vmul.f32 %v1504, %v1512
        %v1543 = vmul.f32 %v1505, %v1512
        %v1544 = vmul.f32 %v1506, %v1512
        %v1545 = vlaneseq
        %v1546 = vshrl.u32 %v1545, 7
        %v1547 = vsub.s32 0, %v1546
        %v1548 = vrot.slane %v1508, %v1547
        %v1549 = vadd.f32 %v1513, %v1548
        %v1550 = vadd.f32 %v1514, %v1548
        %v1551 = vadd.f32 %v1515, %v1548
        %v1552 = vadd.f32 %v1516, %v1548
        %v1553 = vadd.f32 %v1517, %v1548
        %v1554 = vadd.f32 %v1518, %v1548
        %v1555 = vadd.f32 %v1519, %v1548
        %v1556 = vadd.f32 %v1520, %v1548
        %v1557 = vadd.f32 %v1521, %v1548
        %v1558 = vadd.f32 %v1522, %v1548
        %v1559 = vadd.f32 %v1523, %v1548
        %v1560 = vadd.f32 %v1524, %v1548
        %v1561 = vadd.f32 %v1525, %v1548
        %v1562 = vadd.f32 %v1526, %v1548
        %v1563 = vadd.f32 %v1527, %v1548
        %v1564 = vadd.f32 %v1528, %v1548
        %v1565 = vadd.f32 %v1529, %v1548
        %v1566 = vadd.f32 %v1530, %v1548
        %v1567 = vadd.f32 %v1531, %v1548
        %v1568 = vadd.f32 %v1532, %v1548
        %v1569 = vadd.f32 %v1533, %v1548
        %v1570 = vadd.f32 %v1534, %v1548
        %v1571 = vadd.f32 %v1535, %v1548
        %v1572 = vadd.f32 %v1536, %v1548
        %v1573 = vadd.f32 %v1537, %v1548
        %v1574 = vadd.f32 %v1538, %v1548
        %v1575 = vadd.f32 %v1539, %v1548
        %v1576 = vadd.f32 %v1540, %v1548
        %v1577 = vadd.f32 %v1541, %v1548
        %v1578 = vadd.f32 %v1542, %v1548
        %v1579 = vadd.f32 %v1543, %v1548
        %v1580 = vadd.f32 %v1544, %v1548
        %v1581 = vadd.f32 %v1549, %v661
        %v1582 = vadd.f32 %v1550, %v664
        %v1583 = vadd.f32 %v1551, %v669
        %v1584 = vadd.f32 %v1552, %v672
        %v1585 = vadd.f32 %v1553, %v677
        %v1586 = vadd.f32 %v1554, %v680
        %v1587 = vadd.f32 %v1555, %v685
        %v1588 = vadd.f32 %v1556, %v688
        %v1589 = vadd.f32 %v1557, %v693
        %v1590 = vadd.f32 %v1558, %v696
        %v1591 = vadd.f32 %v1559, %v701
        %v1592 = vadd.f32 %v1560, %v704
        %v1593 = vadd.f32 %v1561, %v709
        %v1594 = vadd.f32 %v1562, %v712
        %v1595 = vadd.f32 %v1563, %v717
        %v1596 = vadd.f32 %v1564, %v720
        %v1597 = vadd.f32 %v1565, %v725
        %v1598 = vadd.f32 %v1566, %v728
        %v1599 = vadd.f32 %v1567, %v733
        %v1600 = vadd.f32 %v1568, %v736
        %v1601 = vadd.f32 %v1569, %v741
        %v1602 = vadd.f32 %v1570, %v744
        %v1603 = vadd.f32 %v1571, %v749
        %v1604 = vadd.f32 %v1572, %v752
        %v1605 = vadd.f32 %v1573, %v757
        %v1606 = vadd.f32 %v1574, %v760
        %v1607 = vadd.f32 %v1575, %v765
        %v1608 = vadd.f32 %v1576, %v768
        %v1609 = vadd.f32 %v1577, %v773
        %v1610 = vadd.f32 %v1578, %v776
        %v1611 = vadd.f32 %v1579, %v781
        %v1612 = vadd.f32 %v1580, %v784
        %v1613 = vmax.f32 %v1581, 0.0
        %v1614 = vmax.f32 %v1582, 0.0
        %v1615 = vmax.f32 %v1583, 0.0
        %v1616 = vmax.f32 %v1584, 0.0
        %v1617 = vmax.f32 %v1585, 0.0
        %v1618 = vmax.f32 %v1586, 0.0
        %v1619 = vmax.f32 %v1587, 0.0
        %v1620 = vmax.f32 %v1588, 0.0
        %v1621 = vmax.f32 %v1589, 0.0
        %v1622 = vmax.f32 %v1590, 0.0
        %v1623 = vmax.f32 %v1591, 0.0
        %v1624 = vmax.f32 %v1592, 0.0
        %v1625 = vmax.f32 %v1593, 0.0
        %v1626 = vmax.f32 %v1594, 0.0
        %v1627 = vmax.f32 %v1595, 0.0
        %v1628 = vmax.f32 %v1596, 0.0
        %v1629 = vmax.f32 %v1597, 0.0
        %v1630 = vmax.f32 %v1598, 0.0
        %v1631 = vmax.f32 %v1599, 0.0
        %v1632 = vmax.f32 %v1600, 0.0
        %v1633 = vmax.f32 %v1601, 0.0
        %v1634 = vmax.f32 %v1602, 0.0
        %v1635 = vmax.f32 %v1603, 0.0
        %v1636 = vmax.f32 %v1604, 0.0
        %v1637 = vmax.f32 %v1605, 0.0
        %v1638 = vmax.f32 %v1606, 0.0
        %v1639 = vmax.f32 %v1607, 0.0
        %v1640 = vmax.f32 %v1608, 0.0
        %v1641 = vmax.f32 %v1609, 0.0
        %v1642 = vmax.f32 %v1610, 0.0
        %v1643 = vmax.f32 %v1611, 0.0
        %v1644 = vmax.f32 %v1612, 0.0
        %v1645 = vsel %vm512, %v1613, %v661
        %v1646 = vsel %vm513, %v1614, %v664
        %v1647 = vsel %vm512, %v1615, %v669
        %v1648 = vsel %vm513, %v1616, %v672
        %v1649 = vsel %vm512, %v1617, %v677
        %v1650 = vsel %vm513, %v1618, %v680
        %v1651 = vsel %vm512, %v1619, %v685
        %v1652 = vsel %vm513, %v1620, %v688
        %v1653 = vsel %vm512, %v1621, %v693
        %v1654 = vsel %vm513, %v1622, %v696
        %v1655 = vsel %vm512, %v1623, %v701
        %v1656 = vsel %vm513, %v1624, %v704
        %v1657 = vsel %vm512, %v1625, %v709
        %v1658 = vsel %vm513, %v1626, %v712
        %v1659 = vsel %vm512, %v1627, %v717
        %v1660 = vsel %vm513, %v1628, %v720
        %v1661 = vsel %vm512, %v1629, %v725
        %v1662 = vsel %vm513, %v1630, %v728
        %v1663 = vsel %vm512, %v1631, %v733
        %v1664 = vsel %vm513, %v1632, %v736
        %v1665 = vsel %vm512, %v1633, %v741
        %v1666 = vsel %vm513, %v1634, %v744
        %v1667 = vsel %vm512, %v1635, %v749
        %v1668 = vsel %vm513, %v1636, %v752
        %v1669 = vsel %vm512, %v1637, %v757
        %v1670 = vsel %vm513, %v1638, %v760
        %v1671 = vsel %vm512, %v1639, %v765
        %v1672 = vsel %vm513, %v1640, %v768
        %v1673 = vsel %vm512, %v1641, %v773
        %v1674 = vsel %vm513, %v1642, %v776
        %v1675 = vsel %vm512, %v1643, %v781
        %v1676 = vsel %vm513, %v1644, %v784
        %v1677 = vpack.c.bf16 %v1646, %v1645
        %v1678 = vpack.c.bf16 %v1648, %v1647
        %v1679 = vpack.c.bf16 %v1650, %v1649
        %v1680 = vpack.c.bf16 %v1652, %v1651
        %v1681 = vpack.c.bf16 %v1654, %v1653
        %v1682 = vpack.c.bf16 %v1656, %v1655
        %v1683 = vpack.c.bf16 %v1658, %v1657
        %v1684 = vpack.c.bf16 %v1660, %v1659
        %v1685 = vpack.c.bf16 %v1662, %v1661
        %v1686 = vpack.c.bf16 %v1664, %v1663
        %v1687 = vpack.c.bf16 %v1666, %v1665
        %v1688 = vpack.c.bf16 %v1668, %v1667
        %v1689 = vpack.c.bf16 %v1670, %v1669
        %v1690 = vpack.c.bf16 %v1672, %v1671
        %v1691 = vpack.c.bf16 %v1674, %v1673
        %v1692 = vpack.c.bf16 %v1676, %v1675
        %v1693 = vld [vmem:[%s5] sm:$0xf]
        %v1694 = vld [vmem:[%s5 + $0x4] sm:$0xf]
        %v1695 = vld [vmem:[%s5 + $0x8] sm:$0xf]
        %v1696 = vld [vmem:[%s5 + $0xc] sm:$0xf]
        %v1697 = vld [vmem:[%s5 + $0x10] sm:$0xf]
        %v1698 = vld [vmem:[%s5 + $0x14] sm:$0xf]
        %v1699 = vld [vmem:[%s5 + $0x18] sm:$0xf]
        %v1700 = vld [vmem:[%s5 + $0x1c] sm:$0xf]
        %v1703 = vunpack.c.l.b16 %v1693
        %v1704 = vunpack.c.l.b16 %v1694
        %v1705 = vpack.c.b16 %v1704, %v1703
        %v1708 = vsel %vm577, %v1022, 0
        %v1711 = vsel %vm577, %v1023, 0
        %v1714 = vsel %vm577, %v1024, 0
        %v1717 = vsel %vm577, %v1025, 0
        %v1720 = vsel %vm577, %v1026, 0
        %v1723 = vsel %vm577, %v1027, 0
        %v1726 = vsel %vm577, %v1028, 0
        %v1729 = vsel %vm577, %v1029, 0
        %v1732 = vsel %vm577, %v1030, 0
        %v1735 = vsel %vm577, %v1031, 0
        %v1738 = vsel %vm577, %v1032, 0
        %v1741 = vsel %vm577, %v1033, 0
        %v1744 = vsel %vm577, %v1034, 0
        %v1747 = vsel %vm577, %v1035, 0
        %v1750 = vsel %vm577, %v1036, 0
        %v1753 = vsel %vm577, %v1037, 0
        %1755 = vmatprep.subr.bf16.mxu0 0
        %1756 = vmatpush1.bf16.msra.mxu0 %v1705
        %1757 = vmatprep.subr.bf16.mxu0 0
        %1758 = vmatpush1.bf16.msra.mxu0 0
        %1759 = vmatprep.subr.bf16.mxu0 0
        %1760 = vmatpush1.bf16.msra.mxu0 0
        %1761 = vmatprep.subr.bf16.mxu0 0
        %1762 = vmatpush1.bf16.msra.mxu0 0
        %1763 = vmatprep.subr.bf16.mxu0 0
        %1764 = vmatpush1.bf16.msra.mxu0 0
        %1765 = vmatprep.subr.bf16.mxu0 0
        %1766 = vmatpush1.bf16.msra.mxu0 0
        %1767 = vmatprep.subr.bf16.mxu0 0
        %1768 = vmatpush1.bf16.msra.mxu0 0
        %1769 = vmatprep.subr.bf16.mxu0 0
        %1770 = vmatpush1.bf16.msra.mxu0 0
        %1771 = vmatprep.subr.bf16.mxu0 0
        %1772 = vmatpush1.bf16.msra.mxu0 0
        %1773 = vmatprep.subr.bf16.mxu0 0
        %1774 = vmatpush1.bf16.msra.mxu0 0
        %1775 = vmatprep.subr.bf16.mxu0 0
        %1776 = vmatpush1.bf16.msra.mxu0 0
        %1777 = vmatprep.subr.bf16.mxu0 0
        %1778 = vmatpush1.bf16.msra.mxu0 0
        %1779 = vmatprep.subr.bf16.mxu0 0
        %1780 = vmatpush1.bf16.msra.mxu0 0
        %1781 = vmatprep.subr.bf16.mxu0 0
        %1782 = vmatpush1.bf16.msra.mxu0 0
        %1783 = vmatprep.subr.bf16.mxu0 0
        %1784 = vmatpush1.bf16.msra.mxu0 0
        %1785 = vmatprep.subr.bf16.mxu0 0
        %1786 = vmatpush1.bf16.msra.mxu0 0
        %1787 = vmatprep.mubr.bf16.mxu0 0
        %1788 = vmatmul.mubr.bf16.gmra.mrb[0].mxu0 %v1708
        %v1789 = vpop.f32.mrb[0].mxu0
        %v1790 = vadd.f32 0.0, %v1789
        %v1791 = vpop.f32.mrb[0].mxu0
        %v1792 = vpop.f32.mrb[0].mxu0
        %v1793 = vadd.f32 0.0, %v1792
        %v1794 = vpop.f32.mrb[0].mxu0
        %1795 = vmatprep.mubr.bf16.mxu0 0
        %1796 = vmatmul.mubr.bf16.gmra.mrb[0].mxu0 %v1711
        %v1797 = vpop.f32.mrb[0].mxu0
        %v1798 = vadd.f32 0.0, %v1797
        %v1799 = vpop.f32.mrb[0].mxu0
        %v1800 = vpop.f32.mrb[0].mxu0
        %v1801 = vadd.f32 0.0, %v1800
        %v1802 = vpop.f32.mrb[0].mxu0
        %1803 = vmatprep.mubr.bf16.mxu0 0
        %1804 = vmatmul.mubr.bf16.gmra.mrb[0].mxu0 %v1714
        %v1805 = vpop.f32.mrb[0].mxu0
        %v1806 = vadd.f32 0.0, %v1805
        %v1807 = vpop.f32.mrb[0].mxu0
        %v1808 = vpop.f32.mrb[0].mxu0
        %v1809 = vadd.f32 0.0, %v1808
        %v1810 = vpop.f32.mrb[0].mxu0
        %1811 = vmatprep.mubr.bf16.mxu0 0
        %1812 = vmatmul.mubr.bf16.gmra.mrb[0].mxu0 %v1717
        %v1813 = vpop.f32.mrb[0].mxu0
        %v1814 = vadd.f32 0.0, %v1813
        %v1815 = vpop.f32.mrb[0].mxu0
        %v1816 = vpop.f32.mrb[0].mxu0
        %v1817 = vadd.f32 0.0, %v1816
        %v1818 = vpop.f32.mrb[0].mxu0
        %1819 = vmatprep.mubr.bf16.mxu0 0
        %1820 = vmatmul.mubr.bf16.gmra.mrb[0].mxu0 %v1720
        %v1821 = vpop.f32.mrb[0].mxu0
        %v1822 = vadd.f32 0.0, %v1821
        %v1823 = vpop.f32.mrb[0].mxu0
        %v1824 = vpop.f32.mrb[0].mxu0
        %v1825 = vadd.f32 0.0, %v1824
        %v1826 = vpop.f32.mrb[0].mxu0
        %1827 = vmatprep.mubr.bf16.mxu0 0
        %1828 = vmatmul.mubr.bf16.gmra.mrb[0].mxu0 %v1723
        %v1829 = vpop.f32.mrb[0].mxu0
        %v1830 = vadd.f32 0.0, %v1829
        %v1831 = vpop.f32.mrb[0].mxu0
        %v1832 = vpop.f32.mrb[0].mxu0
        %v1833 = vadd.f32 0.0, %v1832
        %v1834 = vpop.f32.mrb[0].mxu0
        %1835 = vmatprep.mubr.bf16.mxu0 0
        %1836 = vmatmul.mubr.bf16.gmra.mrb[0].mxu0 %v1726
        %v1837 = vpop.f32.mrb[0].mxu0
        %v1838 = vadd.f32 0.0, %v1837
        %v1839 = vpop.f32.mrb[0].mxu0
        %v1840 = vpop.f32.mrb[0].mxu0
        %v1841 = vadd.f32 0.0, %v1840
        %v1842 = vpop.f32.mrb[0].mxu0
        %1843 = vmatprep.mubr.bf16.mxu0 0
        %1844 = vmatmul.mubr.bf16.gmra.mrb[0].mxu0 %v1729
        %v1845 = vpop.f32.mrb[0].mxu0
        %v1846 = vadd.f32 0.0, %v1845
        %v1847 = vpop.f32.mrb[0].mxu0
        %v1848 = vpop.f32.mrb[0].mxu0
        %v1849 = vadd.f32 0.0, %v1848
        %v1850 = vpop.f32.mrb[0].mxu0
        %1851 = vmatprep.mubr.bf16.mxu0 0
        %1852 = vmatmul.mubr.bf16.gmra.mrb[0].mxu0 %v1732
        %v1853 = vpop.f32.mrb[0].mxu0
        %v1854 = vadd.f32 0.0, %v1853
        %v1855 = vpop.f32.mrb[0].mxu0
        %v1856 = vpop.f32.mrb[0].mxu0
        %v1857 = vadd.f32 0.0, %v1856
        %v1858 = vpop.f32.mrb[0].mxu0
        %1859 = vmatprep.mubr.bf16.mxu0 0
        %1860 = vmatmul.mubr.bf16.gmra.mrb[0].mxu0 %v1735
        %v1861 = vpop.f32.mrb[0].mxu0
        %v1862 = vadd.f32 0.0, %v1861
        %v1863 = vpop.f32.mrb[0].mxu0
        %v1864 = vpop.f32.mrb[0].mxu0
        %v1865 = vadd.f32 0.0, %v1864
        %v1866 = vpop.f32.mrb[0].mxu0
        %1867 = vmatprep.mubr.bf16.mxu0 0
        %1868 = vmatmul.mubr.bf16.gmra.mrb[0].mxu0 %v1738
        %v1869 = vpop.f32.mrb[0].mxu0
        %v1870 = vadd.f32 0.0, %v1869
        %v1871 = vpop.f32.mrb[0].mxu0
        %v1872 = vpop.f32.mrb[0].mxu0
        %v1873 = vadd.f32 0.0, %v1872
        %v1874 = vpop.f32.mrb[0].mxu0
        %1875 = vmatprep.mubr.bf16.mxu0 0
        %1876 = vmatmul.mubr.bf16.gmra.mrb[0].mxu0 %v1741
        %v1877 = vpop.f32.mrb[0].mxu0
        %v1878 = vadd.f32 0.0, %v1877
        %v1879 = vpop.f32.mrb[0].mxu0
        %v1880 = vpop.f32.mrb[0].mxu0
        %v1881 = vadd.f32 0.0, %v1880
        %v1882 = vpop.f32.mrb[0].mxu0
        %1883 = vmatprep.mubr.bf16.mxu0 0
        %1884 = vmatmul.mubr.bf16.gmra.mrb[0].mxu0 %v1744
        %v1885 = vpop.f32.mrb[0].mxu0
        %v1886 = vadd.f32 0.0, %v1885
        %v1887 = vpop.f32.mrb[0].mxu0
        %v1888 = vpop.f32.mrb[0].mxu0
        %v1889 = vadd.f32 0.0, %v1888
        %v1890 = vpop.f32.mrb[0].mxu0
        %1891 = vmatprep.mubr.bf16.mxu0 0
        %1892 = vmatmul.mubr.bf16.gmra.mrb[0].mxu0 %v1747
        %v1893 = vpop.f32.mrb[0].mxu0
        %v1894 = vadd.f32 0.0, %v1893
        %v1895 = vpop.f32.mrb[0].mxu0
        %v1896 = vpop.f32.mrb[0].mxu0
        %v1897 = vadd.f32 0.0, %v1896
        %v1898 = vpop.f32.mrb[0].mxu0
        %1899 = vmatprep.mubr.bf16.mxu0 0
        %1900 = vmatmul.mubr.bf16.gmra.mrb[0].mxu0 %v1750
        %v1901 = vpop.f32.mrb[0].mxu0
        %v1902 = vadd.f32 0.0, %v1901
        %v1903 = vpop.f32.mrb[0].mxu0
        %v1904 = vpop.f32.mrb[0].mxu0
        %v1905 = vadd.f32 0.0, %v1904
        %v1906 = vpop.f32.mrb[0].mxu0
        %1907 = vmatprep.mubr.bf16.mxu0 0
        %1908 = vmatmul.mubr.bf16.gmra.mrb[0].mxu0 %v1753
        %v1909 = vpop.f32.mrb[0].mxu0
        %v1910 = vadd.f32 0.0, %v1909
        %v1911 = vpop.f32.mrb[0].mxu0
        %v1912 = vpop.f32.mrb[0].mxu0
        %v1913 = vadd.f32 0.0, %v1912
        %v1914 = vpop.f32.mrb[0].mxu0
        %1915 = vdwg.mxu0
        %v1918 = vunpack.c.l.b16 %v1695
        %v1919 = vunpack.c.l.b16 %v1696
        %v1920 = vpack.c.b16 %v1919, %v1918
        %v1923 = vsel %vm577, %v1240, 0
        %v1926 = vsel %vm577, %v1241, 0
        %v1929 = vsel %vm577, %v1242, 0
        %v1932 = vsel %vm577, %v1243, 0
        %v1935 = vsel %vm577, %v1244, 0
        %v1938 = vsel %vm577, %v1245, 0
        %v1941 = vsel %vm577, %v1246, 0
        %v1944 = vsel %vm577, %v1247, 0
        %v1947 = vsel %vm577, %v1248, 0
        %v1950 = vsel %vm577, %v1249, 0
        %v1953 = vsel %vm577, %v1250, 0
        %v1956 = vsel %vm577, %v1251, 0
        %v1959 = vsel %vm577, %v1252, 0
        %v1962 = vsel %vm577, %v1253, 0
        %v1965 = vsel %vm577, %v1254, 0
        %v1968 = vsel %vm577, %v1255, 0
        %1970 = vmatprep.subr.bf16.mxu0 0
        %1971 = vmatpush1.bf16.msra.mxu0 %v1920
        %1972 = vmatprep.subr.bf16.mxu0 0
        %1973 = vmatpush1.bf16.msra.mxu0 0
        %1974 = vmatprep.subr.bf16.mxu0 0
        %1975 = vmatpush1.bf16.msra.mxu0 0
        %1976 = vmatprep.subr.bf16.mxu0 0
        %1977 = vmatpush1.bf16.msra.mxu0 0
        %1978 = vmatprep.subr.bf16.mxu0 0
        %1979 = vmatpush1.bf16.msra.mxu0 0
        %1980 = vmatprep.subr.bf16.mxu0 0
        %1981 = vmatpush1.bf16.msra.mxu0 0
        %1982 = vmatprep.subr.bf16.mxu0 0
        %1983 = vmatpush1.bf16.msra.mxu0 0
        %1984 = vmatprep.subr.bf16.mxu0 0
        %1985 = vmatpush1.bf16.msra.mxu0 0
        %1986 = vmatprep.subr.bf16.mxu0 0
        %1987 = vmatpush1.bf16.msra.mxu0 0
        %1988 = vmatprep.subr.bf16.mxu0 0
        %1989 = vmatpush1.bf16.msra.mxu0 0
        %1990 = vmatprep.subr.bf16.mxu0 0
        %1991 = vmatpush1.bf16.msra.mxu0 0
        %1992 = vmatprep.subr.bf16.mxu0 0
        %1993 = vmatpush1.bf16.msra.mxu0 0
        %1994 = vmatprep.subr.bf16.mxu0 0
        %1995 = vmatpush1.bf16.msra.mxu0 0
        %1996 = vmatprep.subr.bf16.mxu0 0
        %1997 = vmatpush1.bf16.msra.mxu0 0
        %1998 = vmatprep.subr.bf16.mxu0 0
        %1999 = vmatpush1.bf16.msra.mxu0 0
        %2000 = vmatprep.subr.bf16.mxu0 0
        %2001 = vmatpush1.bf16.msra.mxu0 0
        %2002 = vmatprep.mubr.bf16.mxu0 0
        %2003 = vmatmul.mubr.bf16.gmra.mrb[0].mxu0 %v1923
        %v2004 = vpop.f32.mrb[0].mxu0
        %v2005 = vadd.f32 0.0, %v2004
        %v2006 = vpop.f32.mrb[0].mxu0
        %v2007 = vpop.f32.mrb[0].mxu0
        %v2008 = vadd.f32 0.0, %v2007
        %v2009 = vpop.f32.mrb[0].mxu0
        %2010 = vmatprep.mubr.bf16.mxu0 0
        %2011 = vmatmul.mubr.bf16.gmra.mrb[0].mxu0 %v1926
        %v2012 = vpop.f32.mrb[0].mxu0
        %v2013 = vadd.f32 0.0, %v2012
        %v2014 = vpop.f32.mrb[0].mxu0
        %v2015 = vpop.f32.mrb[0].mxu0
        %v2016 = vadd.f32 0.0, %v2015
        %v2017 = vpop.f32.mrb[0].mxu0
        %2018 = vmatprep.mubr.bf16.mxu0 0
        %2019 = vmatmul.mubr.bf16.gmra.mrb[0].mxu0 %v1929
        %v2020 = vpop.f32.mrb[0].mxu0
        %v2021 = vadd.f32 0.0, %v2020
        %v2022 = vpop.f32.mrb[0].mxu0
        %v2023 = vpop.f32.mrb[0].mxu0
        %v2024 = vadd.f32 0.0, %v2023
        %v2025 = vpop.f32.mrb[0].mxu0
        %2026 = vmatprep.mubr.bf16.mxu0 0
        %2027 = vmatmul.mubr.bf16.gmra.mrb[0].mxu0 %v1932
        %v2028 = vpop.f32.mrb[0].mxu0
        %v2029 = vadd.f32 0.0, %v2028
        %v2030 = vpop.f32.mrb[0].mxu0
        %v2031 = vpop.f32.mrb[0].mxu0
        %v2032 = vadd.f32 0.0, %v2031
        %v2033 = vpop.f32.mrb[0].mxu0
        %2034 = vmatprep.mubr.bf16.mxu0 0
        %2035 = vmatmul.mubr.bf16.gmra.mrb[0].mxu0 %v1935
        %v2036 = vpop.f32.mrb[0].mxu0
        %v2037 = vadd.f32 0.0, %v2036
        %v2038 = vpop.f32.mrb[0].mxu0
        %v2039 = vpop.f32.mrb[0].mxu0
        %v2040 = vadd.f32 0.0, %v2039
        %v2041 = vpop.f32.mrb[0].mxu0
        %2042 = vmatprep.mubr.bf16.mxu0 0
        %2043 = vmatmul.mubr.bf16.gmra.mrb[0].mxu0 %v1938
        %v2044 = vpop.f32.mrb[0].mxu0
        %v2045 = vadd.f32 0.0, %v2044
        %v2046 = vpop.f32.mrb[0].mxu0
        %v2047 = vpop.f32.mrb[0].mxu0
        %v2048 = vadd.f32 0.0, %v2047
        %v2049 = vpop.f32.mrb[0].mxu0
        %2050 = vmatprep.mubr.bf16.mxu0 0
        %2051 = vmatmul.mubr.bf16.gmra.mrb[0].mxu0 %v1941
        %v2052 = vpop.f32.mrb[0].mxu0
        %v2053 = vadd.f32 0.0, %v2052
        %v2054 = vpop.f32.mrb[0].mxu0
        %v2055 = vpop.f32.mrb[0].mxu0
        %v2056 = vadd.f32 0.0, %v2055
        %v2057 = vpop.f32.mrb[0].mxu0
        %2058 = vmatprep.mubr.bf16.mxu0 0
        %2059 = vmatmul.mubr.bf16.gmra.mrb[0].mxu0 %v1944
        %v2060 = vpop.f32.mrb[0].mxu0
        %v2061 = vadd.f32 0.0, %v2060
        %v2062 = vpop.f32.mrb[0].mxu0
        %v2063 = vpop.f32.mrb[0].mxu0
        %v2064 = vadd.f32 0.0, %v2063
        %v2065 = vpop.f32.mrb[0].mxu0
        %2066 = vmatprep.mubr.bf16.mxu0 0
        %2067 = vmatmul.mubr.bf16.gmra.mrb[0].mxu0 %v1947
        %v2068 = vpop.f32.mrb[0].mxu0
        %v2069 = vadd.f32 0.0, %v2068
        %v2070 = vpop.f32.mrb[0].mxu0
        %v2071 = vpop.f32.mrb[0].mxu0
        %v2072 = vadd.f32 0.0, %v2071
        %v2073 = vpop.f32.mrb[0].mxu0
        %2074 = vmatprep.mubr.bf16.mxu0 0
        %2075 = vmatmul.mubr.bf16.gmra.mrb[0].mxu0 %v1950
        %v2076 = vpop.f32.mrb[0].mxu0
        %v2077 = vadd.f32 0.0, %v2076
        %v2078 = vpop.f32.mrb[0].mxu0
        %v2079 = vpop.f32.mrb[0].mxu0
        %v2080 = vadd.f32 0.0, %v2079
        %v2081 = vpop.f32.mrb[0].mxu0
        %2082 = vmatprep.mubr.bf16.mxu0 0
        %2083 = vmatmul.mubr.bf16.gmra.mrb[0].mxu0 %v1953
        %v2084 = vpop.f32.mrb[0].mxu0
        %v2085 = vadd.f32 0.0, %v2084
        %v2086 = vpop.f32.mrb[0].mxu0
        %v2087 = vpop.f32.mrb[0].mxu0
        %v2088 = vadd.f32 0.0, %v2087
        %v2089 = vpop.f32.mrb[0].mxu0
        %2090 = vmatprep.mubr.bf16.mxu0 0
        %2091 = vmatmul.mubr.bf16.gmra.mrb[0].mxu0 %v1956
        %v2092 = vpop.f32.mrb[0].mxu0
        %v2093 = vadd.f32 0.0, %v2092
        %v2094 = vpop.f32.mrb[0].mxu0
        %v2095 = vpop.f32.mrb[0].mxu0
        %v2096 = vadd.f32 0.0, %v2095
        %v2097 = vpop.f32.mrb[0].mxu0
        %2098 = vmatprep.mubr.bf16.mxu0 0
        %2099 = vmatmul.mubr.bf16.gmra.mrb[0].mxu0 %v1959
        %v2100 = vpop.f32.mrb[0].mxu0
        %v2101 = vadd.f32 0.0, %v2100
        %v2102 = vpop.f32.mrb[0].mxu0
        %v2103 = vpop.f32.mrb[0].mxu0
        %v2104 = vadd.f32 0.0, %v2103
        %v2105 = vpop.f32.mrb[0].mxu0
        %2106 = vmatprep.mubr.bf16.mxu0 0
        %2107 = vmatmul.mubr.bf16.gmra.mrb[0].mxu0 %v1962
        %v2108 = vpop.f32.mrb[0].mxu0
        %v2109 = vadd.f32 0.0, %v2108
        %v2110 = vpop.f32.mrb[0].mxu0
        %v2111 = vpop.f32.mrb[0].mxu0
        %v2112 = vadd.f32 0.0, %v2111
        %v2113 = vpop.f32.mrb[0].mxu0
        %2114 = vmatprep.mubr.bf16.mxu0 0
        %2115 = vmatmul.mubr.bf16.gmra.mrb[0].mxu0 %v1965
        %v2116 = vpop.f32.mrb[0].mxu0
        %v2117 = vadd.f32 0.0, %v2116
        %v2118 = vpop.f32.mrb[0].mxu0
        %v2119 = vpop.f32.mrb[0].mxu0
        %v2120 = vadd.f32 0.0, %v2119
        %v2121 = vpop.f32.mrb[0].mxu0
        %2122 = vmatprep.mubr.bf16.mxu0 0
        %2123 = vmatmul.mubr.bf16.gmra.mrb[0].mxu0 %v1968
        %v2124 = vpop.f32.mrb[0].mxu0
        %v2125 = vadd.f32 0.0, %v2124
        %v2126 = vpop.f32.mrb[0].mxu0
        %v2127 = vpop.f32.mrb[0].mxu0
        %v2128 = vadd.f32 0.0, %v2127
        %v2129 = vpop.f32.mrb[0].mxu0
        %2130 = vdwg.mxu0
        %v2133 = vunpack.c.l.b16 %v1697
        %v2134 = vunpack.c.l.b16 %v1698
        %v2135 = vpack.c.b16 %v2134, %v2133
        %v2138 = vsel %vm577, %v1459, 0
        %v2141 = vsel %vm577, %v1460, 0
        %v2144 = vsel %vm577, %v1461, 0
        %v2147 = vsel %vm577, %v1462, 0
        %v2150 = vsel %vm577, %v1463, 0
        %v2153 = vsel %vm577, %v1464, 0
        %v2156 = vsel %vm577, %v1465, 0
        %v2159 = vsel %vm577, %v1466, 0
        %v2162 = vsel %vm577, %v1467, 0
        %v2165 = vsel %vm577, %v1468, 0
        %v2168 = vsel %vm577, %v1469, 0
        %v2171 = vsel %vm577, %v1470, 0
        %v2174 = vsel %vm577, %v1471, 0
        %v2177 = vsel %vm577, %v1472, 0
        %v2180 = vsel %vm577, %v1473, 0
        %v2183 = vsel %vm577, %v1474, 0
        %2185 = vmatprep.subr.bf16.mxu0 0
        %2186 = vmatpush1.bf16.msra.mxu0 %v2135
        %2187 = vmatprep.subr.bf16.mxu0 0
        %2188 = vmatpush1.bf16.msra.mxu0 0
        %2189 = vmatprep.subr.bf16.mxu0 0
        %2190 = vmatpush1.bf16.msra.mxu0 0
        %2191 = vmatprep.subr.bf16.mxu0 0
        %2192 = vmatpush1.bf16.msra.mxu0 0
        %2193 = vmatprep.subr.bf16.mxu0 0
        %2194 = vmatpush1.bf16.msra.mxu0 0
        %2195 = vmatprep.subr.bf16.mxu0 0
        %2196 = vmatpush1.bf16.msra.mxu0 0
        %2197 = vmatprep.subr.bf16.mxu0 0
        %2198 = vmatpush1.bf16.msra.mxu0 0
        %2199 = vmatprep.subr.bf16.mxu0 0
        %2200 = vmatpush1.bf16.msra.mxu0 0
        %2201 = vmatprep.subr.bf16.mxu0 0
        %2202 = vmatpush1.bf16.msra.mxu0 0
        %2203 = vmatprep.subr.bf16.mxu0 0
        %2204 = vmatpush1.bf16.msra.mxu0 0
        %2205 = vmatprep.subr.bf16.mxu0 0
        %2206 = vmatpush1.bf16.msra.mxu0 0
        %2207 = vmatprep.subr.bf16.mxu0 0
        %2208 = vmatpush1.bf16.msra.mxu0 0
        %2209 = vmatprep.subr.bf16.mxu0 0
        %2210 = vmatpush1.bf16.msra.mxu0 0
        %2211 = vmatprep.subr.bf16.mxu0 0
        %2212 = vmatpush1.bf16.msra.mxu0 0
        %2213 = vmatprep.subr.bf16.mxu0 0
        %2214 = vmatpush1.bf16.msra.mxu0 0
        %2215 = vmatprep.subr.bf16.mxu0 0
        %2216 = vmatpush1.bf16.msra.mxu0 0
        %2217 = vmatprep.mubr.bf16.mxu0 0
        %2218 = vmatmul.mubr.bf16.gmra.mrb[0].mxu0 %v2138
        %v2219 = vpop.f32.mrb[0].mxu0
        %v2220 = vadd.f32 0.0, %v2219
        %v2221 = vpop.f32.mrb[0].mxu0
        %v2222 = vpop.f32.mrb[0].mxu0
        %v2223 = vadd.f32 0.0, %v2222
        %v2224 = vpop.f32.mrb[0].mxu0
        %2225 = vmatprep.mubr.bf16.mxu0 0
        %2226 = vmatmul.mubr.bf16.gmra.mrb[0].mxu0 %v2141
        %v2227 = vpop.f32.mrb[0].mxu0
        %v2228 = vadd.f32 0.0, %v2227
        %v2229 = vpop.f32.mrb[0].mxu0
        %v2230 = vpop.f32.mrb[0].mxu0
        %v2231 = vadd.f32 0.0, %v2230
        %v2232 = vpop.f32.mrb[0].mxu0
        %2233 = vmatprep.mubr.bf16.mxu0 0
        %2234 = vmatmul.mubr.bf16.gmra.mrb[0].mxu0 %v2144
        %v2235 = vpop.f32.mrb[0].mxu0
        %v2236 = vadd.f32 0.0, %v2235
        %v2237 = vpop.f32.mrb[0].mxu0
        %v2238 = vpop.f32.mrb[0].mxu0
        %v2239 = vadd.f32 0.0, %v2238
        %v2240 = vpop.f32.mrb[0].mxu0
        %2241 = vmatprep.mubr.bf16.mxu0 0
        %2242 = vmatmul.mubr.bf16.gmra.mrb[0].mxu0 %v2147
        %v2243 = vpop.f32.mrb[0].mxu0
        %v2244 = vadd.f32 0.0, %v2243
        %v2245 = vpop.f32.mrb[0].mxu0
        %v2246 = vpop.f32.mrb[0].mxu0
        %v2247 = vadd.f32 0.0, %v2246
        %v2248 = vpop.f32.mrb[0].mxu0
        %2249 = vmatprep.mubr.bf16.mxu0 0
        %2250 = vmatmul.mubr.bf16.gmra.mrb[0].mxu0 %v2150
        %v2251 = vpop.f32.mrb[0].mxu0
        %v2252 = vadd.f32 0.0, %v2251
        %v2253 = vpop.f32.mrb[0].mxu0
        %v2254 = vpop.f32.mrb[0].mxu0
        %v2255 = vadd.f32 0.0, %v2254
        %v2256 = vpop.f32.mrb[0].mxu0
        %2257 = vmatprep.mubr.bf16.mxu0 0
        %2258 = vmatmul.mubr.bf16.gmra.mrb[0].mxu0 %v2153
        %v2259 = vpop.f32.mrb[0].mxu0
        %v2260 = vadd.f32 0.0, %v2259
        %v2261 = vpop.f32.mrb[0].mxu0
        %v2262 = vpop.f32.mrb[0].mxu0
        %v2263 = vadd.f32 0.0, %v2262
        %v2264 = vpop.f32.mrb[0].mxu0
        %2265 = vmatprep.mubr.bf16.mxu0 0
        %2266 = vmatmul.mubr.bf16.gmra.mrb[0].mxu0 %v2156
        %v2267 = vpop.f32.mrb[0].mxu0
        %v2268 = vadd.f32 0.0, %v2267
        %v2269 = vpop.f32.mrb[0].mxu0
        %v2270 = vpop.f32.mrb[0].mxu0
        %v2271 = vadd.f32 0.0, %v2270
        %v2272 = vpop.f32.mrb[0].mxu0
        %2273 = vmatprep.mubr.bf16.mxu0 0
        %2274 = vmatmul.mubr.bf16.gmra.mrb[0].mxu0 %v2159
        %v2275 = vpop.f32.mrb[0].mxu0
        %v2276 = vadd.f32 0.0, %v2275
        %v2277 = vpop.f32.mrb[0].mxu0
        %v2278 = vpop.f32.mrb[0].mxu0
        %v2279 = vadd.f32 0.0, %v2278
        %v2280 = vpop.f32.mrb[0].mxu0
        %2281 = vmatprep.mubr.bf16.mxu0 0
        %2282 = vmatmul.mubr.bf16.gmra.mrb[0].mxu0 %v2162
        %v2283 = vpop.f32.mrb[0].mxu0
        %v2284 = vadd.f32 0.0, %v2283
        %v2285 = vpop.f32.mrb[0].mxu0
        %v2286 = vpop.f32.mrb[0].mxu0
        %v2287 = vadd.f32 0.0, %v2286
        %v2288 = vpop.f32.mrb[0].mxu0
        %2289 = vmatprep.mubr.bf16.mxu0 0
        %2290 = vmatmul.mubr.bf16.gmra.mrb[0].mxu0 %v2165
        %v2291 = vpop.f32.mrb[0].mxu0
        %v2292 = vadd.f32 0.0, %v2291
        %v2293 = vpop.f32.mrb[0].mxu0
        %v2294 = vpop.f32.mrb[0].mxu0
        %v2295 = vadd.f32 0.0, %v2294
        %v2296 = vpop.f32.mrb[0].mxu0
        %2297 = vmatprep.mubr.bf16.mxu0 0
        %2298 = vmatmul.mubr.bf16.gmra.mrb[0].mxu0 %v2168
        %v2299 = vpop.f32.mrb[0].mxu0
        %v2300 = vadd.f32 0.0, %v2299
        %v2301 = vpop.f32.mrb[0].mxu0
        %v2302 = vpop.f32.mrb[0].mxu0
        %v2303 = vadd.f32 0.0, %v2302
        %v2304 = vpop.f32.mrb[0].mxu0
        %2305 = vmatprep.mubr.bf16.mxu0 0
        %2306 = vmatmul.mubr.bf16.gmra.mrb[0].mxu0 %v2171
        %v2307 = vpop.f32.mrb[0].mxu0
        %v2308 = vadd.f32 0.0, %v2307
        %v2309 = vpop.f32.mrb[0].mxu0
        %v2310 = vpop.f32.mrb[0].mxu0
        %v2311 = vadd.f32 0.0, %v2310
        %v2312 = vpop.f32.mrb[0].mxu0
        %2313 = vmatprep.mubr.bf16.mxu0 0
        %2314 = vmatmul.mubr.bf16.gmra.mrb[0].mxu0 %v2174
        %v2315 = vpop.f32.mrb[0].mxu0
        %v2316 = vadd.f32 0.0, %v2315
        %v2317 = vpop.f32.mrb[0].mxu0
        %v2318 = vpop.f32.mrb[0].mxu0
        %v2319 = vadd.f32 0.0, %v2318
        %v2320 = vpop.f32.mrb[0].mxu0
        %2321 = vmatprep.mubr.bf16.mxu0 0
        %2322 = vmatmul.mubr.bf16.gmra.mrb[0].mxu0 %v2177
        %v2323 = vpop.f32.mrb[0].mxu0
        %v2324 = vadd.f32 0.0, %v2323
        %v2325 = vpop.f32.mrb[0].mxu0
        %v2326 = vpop.f32.mrb[0].mxu0
        %v2327 = vadd.f32 0.0, %v2326
        %v2328 = vpop.f32.mrb[0].mxu0
        %2329 = vmatprep.mubr.bf16.mxu0 0
        %2330 = vmatmul.mubr.bf16.gmra.mrb[0].mxu0 %v2180
        %v2331 = vpop.f32.mrb[0].mxu0
        %v2332 = vadd.f32 0.0, %v2331
        %v2333 = vpop.f32.mrb[0].mxu0
        %v2334 = vpop.f32.mrb[0].mxu0
        %v2335 = vadd.f32 0.0, %v2334
        %v2336 = vpop.f32.mrb[0].mxu0
        %2337 = vmatprep.mubr.bf16.mxu0 0
        %2338 = vmatmul.mubr.bf16.gmra.mrb[0].mxu0 %v2183
        %v2339 = vpop.f32.mrb[0].mxu0
        %v2340 = vadd.f32 0.0, %v2339
        %v2341 = vpop.f32.mrb[0].mxu0
        %v2342 = vpop.f32.mrb[0].mxu0
        %v2343 = vadd.f32 0.0, %v2342
        %v2344 = vpop.f32.mrb[0].mxu0
        %2345 = vdwg.mxu0
        %v2348 = vunpack.c.l.b16 %v1699
        %v2349 = vunpack.c.l.b16 %v1700
        %v2350 = vpack.c.b16 %v2349, %v2348
        %v2353 = vsel %vm577, %v1677, 0
        %v2356 = vsel %vm577, %v1678, 0
        %v2359 = vsel %vm577, %v1679, 0
        %v2362 = vsel %vm577, %v1680, 0
        %v2365 = vsel %vm577, %v1681, 0
        %v2368 = vsel %vm577, %v1682, 0
        %v2371 = vsel %vm577, %v1683, 0
        %v2374 = vsel %vm577, %v1684, 0
        %v2377 = vsel %vm577, %v1685, 0
        %v2380 = vsel %vm577, %v1686, 0
        %v2383 = vsel %vm577, %v1687, 0
        %v2386 = vsel %vm577, %v1688, 0
        %v2389 = vsel %vm577, %v1689, 0
        %v2392 = vsel %vm577, %v1690, 0
        %v2395 = vsel %vm577, %v1691, 0
        %v2398 = vsel %vm577, %v1692, 0
        %2400 = vmatprep.subr.bf16.mxu0 0
        %2401 = vmatpush1.bf16.msra.mxu0 %v2350
        %2402 = vmatprep.subr.bf16.mxu0 0
        %2403 = vmatpush1.bf16.msra.mxu0 0
        %2404 = vmatprep.subr.bf16.mxu0 0
        %2405 = vmatpush1.bf16.msra.mxu0 0
        %2406 = vmatprep.subr.bf16.mxu0 0
        %2407 = vmatpush1.bf16.msra.mxu0 0
        %2408 = vmatprep.subr.bf16.mxu0 0
        %2409 = vmatpush1.bf16.msra.mxu0 0
        %2410 = vmatprep.subr.bf16.mxu0 0
        %2411 = vmatpush1.bf16.msra.mxu0 0
        %2412 = vmatprep.subr.bf16.mxu0 0
        %2413 = vmatpush1.bf16.msra.mxu0 0
        %2414 = vmatprep.subr.bf16.mxu0 0
        %2415 = vmatpush1.bf16.msra.mxu0 0
        %2416 = vmatprep.subr.bf16.mxu0 0
        %2417 = vmatpush1.bf16.msra.mxu0 0
        %2418 = vmatprep.subr.bf16.mxu0 0
        %2419 = vmatpush1.bf16.msra.mxu0 0
        %2420 = vmatprep.subr.bf16.mxu0 0
        %2421 = vmatpush1.bf16.msra.mxu0 0
        %2422 = vmatprep.subr.bf16.mxu0 0
        %2423 = vmatpush1.bf16.msra.mxu0 0
        %2424 = vmatprep.subr.bf16.mxu0 0
        %2425 = vmatpush1.bf16.msra.mxu0 0
        %2426 = vmatprep.subr.bf16.mxu0 0
        %2427 = vmatpush1.bf16.msra.mxu0 0
        %2428 = vmatprep.subr.bf16.mxu0 0
        %2429 = vmatpush1.bf16.msra.mxu0 0
        %2430 = vmatprep.subr.bf16.mxu0 0
        %2431 = vmatpush1.bf16.msra.mxu0 0
        %2432 = vmatprep.mubr.bf16.mxu0 0
        %2433 = vmatmul.mubr.bf16.gmra.mrb[0].mxu0 %v2353
        %v2434 = vpop.f32.mrb[0].mxu0
        %v2435 = vadd.f32 0.0, %v2434
        %v2436 = vpop.f32.mrb[0].mxu0
        %v2437 = vpop.f32.mrb[0].mxu0
        %v2438 = vadd.f32 0.0, %v2437
        %v2439 = vpop.f32.mrb[0].mxu0
        %2440 = vmatprep.mubr.bf16.mxu0 0
        %2441 = vmatmul.mubr.bf16.gmra.mrb[0].mxu0 %v2356
        %v2442 = vpop.f32.mrb[0].mxu0
        %v2443 = vadd.f32 0.0, %v2442
        %v2444 = vpop.f32.mrb[0].mxu0
        %v2445 = vpop.f32.mrb[0].mxu0
        %v2446 = vadd.f32 0.0, %v2445
        %v2447 = vpop.f32.mrb[0].mxu0
        %2448 = vmatprep.mubr.bf16.mxu0 0
        %2449 = vmatmul.mubr.bf16.gmra.mrb[0].mxu0 %v2359
        %v2450 = vpop.f32.mrb[0].mxu0
        %v2451 = vadd.f32 0.0, %v2450
        %v2452 = vpop.f32.mrb[0].mxu0
        %v2453 = vpop.f32.mrb[0].mxu0
        %v2454 = vadd.f32 0.0, %v2453
        %v2455 = vpop.f32.mrb[0].mxu0
        %2456 = vmatprep.mubr.bf16.mxu0 0
        %2457 = vmatmul.mubr.bf16.gmra.mrb[0].mxu0 %v2362
        %v2458 = vpop.f32.mrb[0].mxu0
        %v2459 = vadd.f32 0.0, %v2458
        %v2460 = vpop.f32.mrb[0].mxu0
        %v2461 = vpop.f32.mrb[0].mxu0
        %v2462 = vadd.f32 0.0, %v2461
        %v2463 = vpop.f32.mrb[0].mxu0
        %2464 = vmatprep.mubr.bf16.mxu0 0
        %2465 = vmatmul.mubr.bf16.gmra.mrb[0].mxu0 %v2365
        %v2466 = vpop.f32.mrb[0].mxu0
        %v2467 = vadd.f32 0.0, %v2466
        %v2468 = vpop.f32.mrb[0].mxu0
        %v2469 = vpop.f32.mrb[0].mxu0
        %v2470 = vadd.f32 0.0, %v2469
        %v2471 = vpop.f32.mrb[0].mxu0
        %2472 = vmatprep.mubr.bf16.mxu0 0
        %2473 = vmatmul.mubr.bf16.gmra.mrb[0].mxu0 %v2368
        %v2474 = vpop.f32.mrb[0].mxu0
        %v2475 = vadd.f32 0.0, %v2474
        %v2476 = vpop.f32.mrb[0].mxu0
        %v2477 = vpop.f32.mrb[0].mxu0
        %v2478 = vadd.f32 0.0, %v2477
        %v2479 = vpop.f32.mrb[0].mxu0
        %2480 = vmatprep.mubr.bf16.mxu0 0
        %2481 = vmatmul.mubr.bf16.gmra.mrb[0].mxu0 %v2371
        %v2482 = vpop.f32.mrb[0].mxu0
        %v2483 = vadd.f32 0.0, %v2482
        %v2484 = vpop.f32.mrb[0].mxu0
        %v2485 = vpop.f32.mrb[0].mxu0
        %v2486 = vadd.f32 0.0, %v2485
        %v2487 = vpop.f32.mrb[0].mxu0
        %2488 = vmatprep.mubr.bf16.mxu0 0
        %2489 = vmatmul.mubr.bf16.gmra.mrb[0].mxu0 %v2374
        %v2490 = vpop.f32.mrb[0].mxu0
        %v2491 = vadd.f32 0.0, %v2490
        %v2492 = vpop.f32.mrb[0].mxu0
        %v2493 = vpop.f32.mrb[0].mxu0
        %v2494 = vadd.f32 0.0, %v2493
        %v2495 = vpop.f32.mrb[0].mxu0
        %2496 = vmatprep.mubr.bf16.mxu0 0
        %2497 = vmatmul.mubr.bf16.gmra.mrb[0].mxu0 %v2377
        %v2498 = vpop.f32.mrb[0].mxu0
        %v2499 = vadd.f32 0.0, %v2498
        %v2500 = vpop.f32.mrb[0].mxu0
        %v2501 = vpop.f32.mrb[0].mxu0
        %v2502 = vadd.f32 0.0, %v2501
        %v2503 = vpop.f32.mrb[0].mxu0
        %2504 = vmatprep.mubr.bf16.mxu0 0
        %2505 = vmatmul.mubr.bf16.gmra.mrb[0].mxu0 %v2380
        %v2506 = vpop.f32.mrb[0].mxu0
        %v2507 = vadd.f32 0.0, %v2506
        %v2508 = vpop.f32.mrb[0].mxu0
        %v2509 = vpop.f32.mrb[0].mxu0
        %v2510 = vadd.f32 0.0, %v2509
        %v2511 = vpop.f32.mrb[0].mxu0
        %2512 = vmatprep.mubr.bf16.mxu0 0
        %2513 = vmatmul.mubr.bf16.gmra.mrb[0].mxu0 %v2383
        %v2514 = vpop.f32.mrb[0].mxu0
        %v2515 = vadd.f32 0.0, %v2514
        %v2516 = vpop.f32.mrb[0].mxu0
        %v2517 = vpop.f32.mrb[0].mxu0
        %v2518 = vadd.f32 0.0, %v2517
        %v2519 = vpop.f32.mrb[0].mxu0
        %2520 = vmatprep.mubr.bf16.mxu0 0
        %2521 = vmatmul.mubr.bf16.gmra.mrb[0].mxu0 %v2386
        %v2522 = vpop.f32.mrb[0].mxu0
        %v2523 = vadd.f32 0.0, %v2522
        %v2524 = vpop.f32.mrb[0].mxu0
        %v2525 = vpop.f32.mrb[0].mxu0
        %v2526 = vadd.f32 0.0, %v2525
        %v2527 = vpop.f32.mrb[0].mxu0
        %2528 = vmatprep.mubr.bf16.mxu0 0
        %2529 = vmatmul.mubr.bf16.gmra.mrb[0].mxu0 %v2389
        %v2530 = vpop.f32.mrb[0].mxu0
        %v2531 = vadd.f32 0.0, %v2530
        %v2532 = vpop.f32.mrb[0].mxu0
        %v2533 = vpop.f32.mrb[0].mxu0
        %v2534 = vadd.f32 0.0, %v2533
        %v2535 = vpop.f32.mrb[0].mxu0
        %2536 = vmatprep.mubr.bf16.mxu0 0
        %2537 = vmatmul.mubr.bf16.gmra.mrb[0].mxu0 %v2392
        %v2538 = vpop.f32.mrb[0].mxu0
        %v2539 = vadd.f32 0.0, %v2538
        %v2540 = vpop.f32.mrb[0].mxu0
        %v2541 = vpop.f32.mrb[0].mxu0
        %v2542 = vadd.f32 0.0, %v2541
        %v2543 = vpop.f32.mrb[0].mxu0
        %2544 = vmatprep.mubr.bf16.mxu0 0
        %2545 = vmatmul.mubr.bf16.gmra.mrb[0].mxu0 %v2395
        %v2546 = vpop.f32.mrb[0].mxu0
        %v2547 = vadd.f32 0.0, %v2546
        %v2548 = vpop.f32.mrb[0].mxu0
        %v2549 = vpop.f32.mrb[0].mxu0
        %v2550 = vadd.f32 0.0, %v2549
        %v2551 = vpop.f32.mrb[0].mxu0
        %2552 = vmatprep.mubr.bf16.mxu0 0
        %2553 = vmatmul.mubr.bf16.gmra.mrb[0].mxu0 %v2398
        %v2554 = vpop.f32.mrb[0].mxu0
        %v2555 = vadd.f32 0.0, %v2554
        %v2556 = vpop.f32.mrb[0].mxu0
        %v2557 = vpop.f32.mrb[0].mxu0
        %v2558 = vadd.f32 0.0, %v2557
        %v2559 = vpop.f32.mrb[0].mxu0
        %2560 = vdwg.mxu0
        %v2561 = vadd.f32 %v1790, %v2005
        %v2562 = vadd.f32 %v1793, %v2008
        %v2563 = vadd.f32 %v1798, %v2013
        %v2564 = vadd.f32 %v1801, %v2016
        %v2565 = vadd.f32 %v1806, %v2021
        %v2566 = vadd.f32 %v1809, %v2024
        %v2567 = vadd.f32 %v1814, %v2029
        %v2568 = vadd.f32 %v1817, %v2032
        %v2569 = vadd.f32 %v1822, %v2037
        %v2570 = vadd.f32 %v1825, %v2040
        %v2571 = vadd.f32 %v1830, %v2045
        %v2572 = vadd.f32 %v1833, %v2048
        %v2573 = vadd.f32 %v1838, %v2053
        %v2574 = vadd.f32 %v1841, %v2056
        %v2575 = vadd.f32 %v1846, %v2061
        %v2576 = vadd.f32 %v1849, %v2064
        %v2577 = vadd.f32 %v1854, %v2069
        %v2578 = vadd.f32 %v1857, %v2072
        %v2579 = vadd.f32 %v1862, %v2077
        %v2580 = vadd.f32 %v1865, %v2080
        %v2581 = vadd.f32 %v1870, %v2085
        %v2582 = vadd.f32 %v1873, %v2088
        %v2583 = vadd.f32 %v1878, %v2093
        %v2584 = vadd.f32 %v1881, %v2096
        %v2585 = vadd.f32 %v1886, %v2101
        %v2586 = vadd.f32 %v1889, %v2104
        %v2587 = vadd.f32 %v1894, %v2109
        %v2588 = vadd.f32 %v1897, %v2112
        %v2589 = vadd.f32 %v1902, %v2117
        %v2590 = vadd.f32 %v1905, %v2120
        %v2591 = vadd.f32 %v1910, %v2125
        %v2592 = vadd.f32 %v1913, %v2128
        %v2593 = vadd.f32 %v2561, %v2220
        %v2594 = vadd.f32 %v2562, %v2223
        %v2595 = vadd.f32 %v2563, %v2228
        %v2596 = vadd.f32 %v2564, %v2231
        %v2597 = vadd.f32 %v2565, %v2236
        %v2598 = vadd.f32 %v2566, %v2239
        %v2599 = vadd.f32 %v2567, %v2244
        %v2600 = vadd.f32 %v2568, %v2247
        %v2601 = vadd.f32 %v2569, %v2252
        %v2602 = vadd.f32 %v2570, %v2255
        %v2603 = vadd.f32 %v2571, %v2260
        %v2604 = vadd.f32 %v2572, %v2263
        %v2605 = vadd.f32 %v2573, %v2268
        %v2606 = vadd.f32 %v2574, %v2271
        %v2607 = vadd.f32 %v2575, %v2276
        %v2608 = vadd.f32 %v2576, %v2279
        %v2609 = vadd.f32 %v2577, %v2284
        %v2610 = vadd.f32 %v2578, %v2287
        %v2611 = vadd.f32 %v2579, %v2292
        %v2612 = vadd.f32 %v2580, %v2295
        %v2613 = vadd.f32 %v2581, %v2300
        %v2614 = vadd.f32 %v2582, %v2303
        %v2615 = vadd.f32 %v2583, %v2308
        %v2616 = vadd.f32 %v2584, %v2311
        %v2617 = vadd.f32 %v2585, %v2316
        %v2618 = vadd.f32 %v2586, %v2319
        %v2619 = vadd.f32 %v2587, %v2324
        %v2620 = vadd.f32 %v2588, %v2327
        %v2621 = vadd.f32 %v2589, %v2332
        %v2622 = vadd.f32 %v2590, %v2335
        %v2623 = vadd.f32 %v2591, %v2340
        %v2624 = vadd.f32 %v2592, %v2343
        %v2625 = vadd.f32 %v2593, %v2435
        %v2626 = vadd.f32 %v2594, %v2438
        %v2627 = vadd.f32 %v2595, %v2443
        %v2628 = vadd.f32 %v2596, %v2446
        %v2629 = vadd.f32 %v2597, %v2451
        %v2630 = vadd.f32 %v2598, %v2454
        %v2631 = vadd.f32 %v2599, %v2459
        %v2632 = vadd.f32 %v2600, %v2462
        %v2633 = vadd.f32 %v2601, %v2467
        %v2634 = vadd.f32 %v2602, %v2470
        %v2635 = vadd.f32 %v2603, %v2475
        %v2636 = vadd.f32 %v2604, %v2478
        %v2637 = vadd.f32 %v2605, %v2483
        %v2638 = vadd.f32 %v2606, %v2486
        %v2639 = vadd.f32 %v2607, %v2491
        %v2640 = vadd.f32 %v2608, %v2494
        %v2641 = vadd.f32 %v2609, %v2499
        %v2642 = vadd.f32 %v2610, %v2502
        %v2643 = vadd.f32 %v2611, %v2507
        %v2644 = vadd.f32 %v2612, %v2510
        %v2645 = vadd.f32 %v2613, %v2515
        %v2646 = vadd.f32 %v2614, %v2518
        %v2647 = vadd.f32 %v2615, %v2523
        %v2648 = vadd.f32 %v2616, %v2526
        %v2649 = vadd.f32 %v2617, %v2531
        %v2650 = vadd.f32 %v2618, %v2534
        %v2651 = vadd.f32 %v2619, %v2539
        %v2652 = vadd.f32 %v2620, %v2542
        %v2653 = vadd.f32 %v2621, %v2547
        %v2654 = vadd.f32 %v2622, %v2550
        %v2655 = vadd.f32 %v2623, %v2555
        %v2656 = vadd.f32 %v2624, %v2558
        %v2657 = vld [vmem:[%s6] sm:$0x1]
        %v2659 = vlaneseq
        %v2660 = vshrl.u32 %v2659, 7
        %v2661 = vsub.s32 0, %v2660
        %v2662 = vrot.slane %v2657, %v2661
        %v2664 = vadd.f32 %v2625, %v2662
        %v2665 = vadd.f32 %v2626, %v2662
        %v2666 = vadd.f32 %v2627, %v2662
        %v2667 = vadd.f32 %v2628, %v2662
        %v2668 = vadd.f32 %v2629, %v2662
        %v2669 = vadd.f32 %v2630, %v2662
        %v2670 = vadd.f32 %v2631, %v2662
        %v2671 = vadd.f32 %v2632, %v2662
        %v2672 = vadd.f32 %v2633, %v2662
        %v2673 = vadd.f32 %v2634, %v2662
        %v2674 = vadd.f32 %v2635, %v2662
        %v2675 = vadd.f32 %v2636, %v2662
        %v2676 = vadd.f32 %v2637, %v2662
        %v2677 = vadd.f32 %v2638, %v2662
        %v2678 = vadd.f32 %v2639, %v2662
        %v2679 = vadd.f32 %v2640, %v2662
        %v2680 = vadd.f32 %v2641, %v2662
        %v2681 = vadd.f32 %v2642, %v2662
        %v2682 = vadd.f32 %v2643, %v2662
        %v2683 = vadd.f32 %v2644, %v2662
        %v2684 = vadd.f32 %v2645, %v2662
        %v2685 = vadd.f32 %v2646, %v2662
        %v2686 = vadd.f32 %v2647, %v2662
        %v2687 = vadd.f32 %v2648, %v2662
        %v2688 = vadd.f32 %v2649, %v2662
        %v2689 = vadd.f32 %v2650, %v2662
        %v2690 = vadd.f32 %v2651, %v2662
        %v2691 = vadd.f32 %v2652, %v2662
        %v2692 = vadd.f32 %v2653, %v2662
        %v2693 = vadd.f32 %v2654, %v2662
        %v2694 = vadd.f32 %v2655, %v2662
        %v2695 = vadd.f32 %v2656, %v2662
        %2696 = vst.msk [vmem:[%s787 + $0x1] sm:$0xff] %vm577, %v2664
        %2697 = vst.msk [vmem:[%s787 + $0x9] sm:$0xff] %vm577, %v2665
        %2698 = vst.msk [vmem:[%s787 + $0x19] sm:$0xff] %vm577, %v2666
        %2699 = vst.msk [vmem:[%s787 + $0x21] sm:$0xff] %vm577, %v2667
        %2700 = vst.msk [vmem:[%s787 + $0x31] sm:$0xff] %vm577, %v2668
        %2701 = vst.msk [vmem:[%s787 + $0x39] sm:$0xff] %vm577, %v2669
        %2702 = vst.msk [vmem:[%s787 + $0x49] sm:$0xff] %vm577, %v2670
        %2703 = vst.msk [vmem:[%s787 + $0x51] sm:$0xff] %vm577, %v2671
        %2704 = vst.msk [vmem:[%s787 + $0x61] sm:$0xff] %vm577, %v2672
        %2705 = vst.msk [vmem:[%s787 + $0x69] sm:$0xff] %vm577, %v2673
        %2706 = vst.msk [vmem:[%s787 + $0x79] sm:$0xff] %vm577, %v2674
        %2707 = vst.msk [vmem:[%s787 + $0x81] sm:$0xff] %vm577, %v2675
        %2708 = vst.msk [vmem:[%s787 + $0x91] sm:$0xff] %vm577, %v2676
        %2709 = vst.msk [vmem:[%s787 + $0x99] sm:$0xff] %vm577, %v2677
        %2710 = vst.msk [vmem:[%s787 + $0xa9] sm:$0xff] %vm577, %v2678
        %2711 = vst.msk [vmem:[%s787 + $0xb1] sm:$0xff] %vm577, %v2679
        %2712 = vst.msk [vmem:[%s787 + $0xc1] sm:$0xff] %vm577, %v2680
        %2713 = vst.msk [vmem:[%s787 + $0xc9] sm:$0xff] %vm577, %v2681
        %2714 = vst.msk [vmem:[%s787 + $0xd9] sm:$0xff] %vm577, %v2682
        %2715 = vst.msk [vmem:[%s787 + $0xe1] sm:$0xff] %vm577, %v2683
        %2716 = vst.msk [vmem:[%s787 + $0xf1] sm:$0xff] %vm577, %v2684
        %2717 = vst.msk [vmem:[%s787 + $0xf9] sm:$0xff] %vm577, %v2685
        %2718 = vst.msk [vmem:[%s787 + $0x109] sm:$0xff] %vm577, %v2686
        %2719 = vst.msk [vmem:[%s787 + $0x111] sm:$0xff] %vm577, %v2687
        %2720 = vst.msk [vmem:[%s787 + $0x121] sm:$0xff] %vm577, %v2688
        %2721 = vst.msk [vmem:[%s787 + $0x129] sm:$0xff] %vm577, %v2689
        %2722 = vst.msk [vmem:[%s787 + $0x139] sm:$0xff] %vm577, %v2690
        %2723 = vst.msk [vmem:[%s787 + $0x141] sm:$0xff] %vm577, %v2691
        %2724 = vst.msk [vmem:[%s787 + $0x151] sm:$0xff] %vm577, %v2692
        %2725 = vst.msk [vmem:[%s787 + $0x159] sm:$0xff] %vm577, %v2693
        %2726 = vst.msk [vmem:[%s787 + $0x169] sm:$0xff] %vm577, %v2694
        %2727 = vst.msk [vmem:[%s787 + $0x171] sm:$0xff] %vm577, %v2695
        %v2728 = vld [vmem:[#allocation2 + $0x1] sm:$0xff]
        %v2729 = vld [vmem:[#allocation2 + $0x9] sm:$0xff]
        %v2730 = vld [vmem:[#allocation2 + $0x19] sm:$0xff]
        %v2731 = vld [vmem:[#allocation2 + $0x21] sm:$0xff]
        %v2732 = vld [vmem:[#allocation2 + $0x31] sm:$0xff]
        %v2733 = vld [vmem:[#allocation2 + $0x39] sm:$0xff]
        %v2734 = vld [vmem:[#allocation2 + $0x49] sm:$0xff]
        %v2735 = vld [vmem:[#allocation2 + $0x51] sm:$0xff]
        %v2736 = vld [vmem:[#allocation2 + $0x61] sm:$0xff]
        %v2737 = vld [vmem:[#allocation2 + $0x69] sm:$0xff]
        %v2738 = vld [vmem:[#allocation2 + $0x79] sm:$0xff]
        %v2739 = vld [vmem:[#allocation2 + $0x81] sm:$0xff]
        %v2740 = vld [vmem:[#allocation2 + $0x91] sm:$0xff]
        %v2741 = vld [vmem:[#allocation2 + $0x99] sm:$0xff]
        %v2742 = vld [vmem:[#allocation2 + $0xa9] sm:$0xff]
        %v2743 = vld [vmem:[#allocation2 + $0xb1] sm:$0xff]
        %v2744 = vld [vmem:[#allocation2 + $0xc1] sm:$0xff]
        %v2745 = vld [vmem:[#allocation2 + $0xc9] sm:$0xff]
        %v2746 = vld [vmem:[#allocation2 + $0xd9] sm:$0xff]
        %v2747 = vld [vmem:[#allocation2 + $0xe1] sm:$0xff]
        %v2748 = vld [vmem:[#allocation2 + $0xf1] sm:$0xff]
        %v2749 = vld [vmem:[#allocation2 + $0xf9] sm:$0xff]
        %v2750 = vld [vmem:[#allocation2 + $0x109] sm:$0xff]
        %v2751 = vld [vmem:[#allocation2 + $0x111] sm:$0xff]
        %v2752 = vld [vmem:[#allocation2 + $0x121] sm:$0xff]
        %v2753 = vld [vmem:[#allocation2 + $0x129] sm:$0xff]
        %v2754 = vld [vmem:[#allocation2 + $0x139] sm:$0xff]
        %v2755 = vld [vmem:[#allocation2 + $0x141] sm:$0xff]
        %v2756 = vld [vmem:[#allocation2 + $0x151] sm:$0xff]
        %v2757 = vld [vmem:[#allocation2 + $0x159] sm:$0xff]
        %v2758 = vld [vmem:[#allocation2 + $0x169] sm:$0xff]
        %v2759 = vld [vmem:[#allocation2 + $0x171] sm:$0xff]
        %v2760 = vld [vmem:[%s7] sm:$0x1]
        %v2761 = vld [vmem:[%s8] sm:$0x1]
        %v2762 = vlaneseq
        %v2763 = vshrl.u32 %v2762, 7
        %v2764 = vsub.s32 0, %v2763
        %v2765 = vrot.slane %v2760, %v2764
        %v2766 = vmul.f32 %v2728, %v2765
        %v2767 = vmul.f32 %v2729, %v2765
        %v2768 = vmul.f32 %v2730, %v2765
        %v2769 = vmul.f32 %v2731, %v2765
        %v2770 = vmul.f32 %v2732, %v2765
        %v2771 = vmul.f32 %v2733, %v2765
        %v2772 = vmul.f32 %v2734, %v2765
        %v2773 = vmul.f32 %v2735, %v2765
        %v2774 = vmul.f32 %v2736, %v2765
        %v2775 = vmul.f32 %v2737, %v2765
        %v2776 = vmul.f32 %v2738, %v2765
        %v2777 = vmul.f32 %v2739, %v2765
        %v2778 = vmul.f32 %v2740, %v2765
        %v2779 = vmul.f32 %v2741, %v2765
        %v2780 = vmul.f32 %v2742, %v2765
        %v2781 = vmul.f32 %v2743, %v2765
        %v2782 = vmul.f32 %v2744, %v2765
        %v2783 = vmul.f32 %v2745, %v2765
        %v2784 = vmul.f32 %v2746, %v2765
        %v2785 = vmul.f32 %v2747, %v2765
        %v2786 = vmul.f32 %v2748, %v2765
        %v2787 = vmul.f32 %v2749, %v2765
        %v2788 = vmul.f32 %v2750, %v2765
        %v2789 = vmul.f32 %v2751, %v2765
        %v2790 = vmul.f32 %v2752, %v2765
        %v2791 = vmul.f32 %v2753, %v2765
        %v2792 = vmul.f32 %v2754, %v2765
        %v2793 = vmul.f32 %v2755, %v2765
        %v2794 = vmul.f32 %v2756, %v2765
        %v2795 = vmul.f32 %v2757, %v2765
        %v2796 = vmul.f32 %v2758, %v2765
        %v2797 = vmul.f32 %v2759, %v2765
        %v2798 = vlaneseq
        %v2799 = vshrl.u32 %v2798, 7
        %v2800 = vsub.s32 0, %v2799
        %v2801 = vrot.slane %v2761, %v2800
        %v2802 = vadd.f32 %v2766, %v2801
        %v2803 = vadd.f32 %v2767, %v2801
        %v2804 = vadd.f32 %v2768, %v2801
        %v2805 = vadd.f32 %v2769, %v2801
        %v2806 = vadd.f32 %v2770, %v2801
        %v2807 = vadd.f32 %v2771, %v2801
        %v2808 = vadd.f32 %v2772, %v2801
        %v2809 = vadd.f32 %v2773, %v2801
        %v2810 = vadd.f32 %v2774, %v2801
        %v2811 = vadd.f32 %v2775, %v2801
        %v2812 = vadd.f32 %v2776, %v2801
        %v2813 = vadd.f32 %v2777, %v2801
        %v2814 = vadd.f32 %v2778, %v2801
        %v2815 = vadd.f32 %v2779, %v2801
        %v2816 = vadd.f32 %v2780, %v2801
        %v2817 = vadd.f32 %v2781, %v2801
        %v2818 = vadd.f32 %v2782, %v2801
        %v2819 = vadd.f32 %v2783, %v2801
        %v2820 = vadd.f32 %v2784, %v2801
        %v2821 = vadd.f32 %v2785, %v2801
        %v2822 = vadd.f32 %v2786, %v2801
        %v2823 = vadd.f32 %v2787, %v2801
        %v2824 = vadd.f32 %v2788, %v2801
        %v2825 = vadd.f32 %v2789, %v2801
        %v2826 = vadd.f32 %v2790, %v2801
        %v2827 = vadd.f32 %v2791, %v2801
        %v2828 = vadd.f32 %v2792, %v2801
        %v2829 = vadd.f32 %v2793, %v2801
        %v2830 = vadd.f32 %v2794, %v2801
        %v2831 = vadd.f32 %v2795, %v2801
        %v2832 = vadd.f32 %v2796, %v2801
        %v2833 = vadd.f32 %v2797, %v2801
        %v2834 = vadd.f32 %v2802, %v2664
        %v2835 = vadd.f32 %v2803, %v2665
        %v2836 = vadd.f32 %v2804, %v2666
        %v2837 = vadd.f32 %v2805, %v2667
        %v2838 = vadd.f32 %v2806, %v2668
        %v2839 = vadd.f32 %v2807, %v2669
        %v2840 = vadd.f32 %v2808, %v2670
        %v2841 = vadd.f32 %v2809, %v2671
        %v2842 = vadd.f32 %v2810, %v2672
        %v2843 = vadd.f32 %v2811, %v2673
        %v2844 = vadd.f32 %v2812, %v2674
        %v2845 = vadd.f32 %v2813, %v2675
        %v2846 = vadd.f32 %v2814, %v2676
        %v2847 = vadd.f32 %v2815, %v2677
        %v2848 = vadd.f32 %v2816, %v2678
        %v2849 = vadd.f32 %v2817, %v2679
        %v2850 = vadd.f32 %v2818, %v2680
        %v2851 = vadd.f32 %v2819, %v2681
        %v2852 = vadd.f32 %v2820, %v2682
        %v2853 = vadd.f32 %v2821, %v2683
        %v2854 = vadd.f32 %v2822, %v2684
        %v2855 = vadd.f32 %v2823, %v2685
        %v2856 = vadd.f32 %v2824, %v2686
        %v2857 = vadd.f32 %v2825, %v2687
        %v2858 = vadd.f32 %v2826, %v2688
        %v2859 = vadd.f32 %v2827, %v2689
        %v2860 = vadd.f32 %v2828, %v2690
        %v2861 = vadd.f32 %v2829, %v2691
        %v2862 = vadd.f32 %v2830, %v2692
        %v2863 = vadd.f32 %v2831, %v2693
        %v2864 = vadd.f32 %v2832, %v2694
        %v2865 = vadd.f32 %v2833, %v2695
        %v2866 = vmax.f32 %v2834, 0.0
        %v2867 = vmax.f32 %v2835, 0.0
        %v2868 = vmax.f32 %v2836, 0.0
        %v2869 = vmax.f32 %v2837, 0.0
        %v2870 = vmax.f32 %v2838, 0.0
        %v2871 = vmax.f32 %v2839, 0.0
        %v2872 = vmax.f32 %v2840, 0.0
        %v2873 = vmax.f32 %v2841, 0.0
        %v2874 = vmax.f32 %v2842, 0.0
        %v2875 = vmax.f32 %v2843, 0.0
        %v2876 = vmax.f32 %v2844, 0.0
        %v2877 = vmax.f32 %v2845, 0.0
        %v2878 = vmax.f32 %v2846, 0.0
        %v2879 = vmax.f32 %v2847, 0.0
        %v2880 = vmax.f32 %v2848, 0.0
        %v2881 = vmax.f32 %v2849, 0.0
        %v2882 = vmax.f32 %v2850, 0.0
        %v2883 = vmax.f32 %v2851, 0.0
        %v2884 = vmax.f32 %v2852, 0.0
        %v2885 = vmax.f32 %v2853, 0.0
        %v2886 = vmax.f32 %v2854, 0.0
        %v2887 = vmax.f32 %v2855, 0.0
        %v2888 = vmax.f32 %v2856, 0.0
        %v2889 = vmax.f32 %v2857, 0.0
        %v2890 = vmax.f32 %v2858, 0.0
        %v2891 = vmax.f32 %v2859, 0.0
        %v2892 = vmax.f32 %v2860, 0.0
        %v2893 = vmax.f32 %v2861, 0.0
        %v2894 = vmax.f32 %v2862, 0.0
        %v2895 = vmax.f32 %v2863, 0.0
        %v2896 = vmax.f32 %v2864, 0.0
        %v2897 = vmax.f32 %v2865, 0.0
        %v2898 = vsel %vm446, %v2866, %v2664
        %v2899 = vsel %vm447, %v2867, %v2665
        %v2900 = vsel %vm448, %v2868, %v2666
        %v2901 = vsel %vm449, %v2869, %v2667
        %v2902 = vsel %vm450, %v2870, %v2668
        %v2903 = vsel %vm451, %v2871, %v2669
        %v2904 = vsel %vm452, %v2872, %v2670
        %v2905 = vsel %vm453, %v2873, %v2671
        %v2906 = vsel %vm454, %v2874, %v2672
        %v2907 = vsel %vm455, %v2875, %v2673
        %v2908 = vsel %vm456, %v2876, %v2674
        %v2909 = vsel %vm457, %v2877, %v2675
        %v2910 = vsel %vm458, %v2878, %v2676
        %v2911 = vsel %vm459, %v2879, %v2677
        %v2912 = vsel %vm460, %v2880, %v2678
        %v2913 = vsel %vm461, %v2881, %v2679
        %v2914 = vsel %vm462, %v2882, %v2680
        %v2915 = vsel %vm463, %v2883, %v2681
        %v2916 = vsel %vm464, %v2884, %v2682
        %v2917 = vsel %vm465, %v2885, %v2683
        %v2918 = vsel %vm466, %v2886, %v2684
        %v2919 = vsel %vm467, %v2887, %v2685
        %v2920 = vsel %vm468, %v2888, %v2686
        %v2921 = vsel %vm469, %v2889, %v2687
        %v2922 = vsel %vm470, %v2890, %v2688
        %v2923 = vsel %vm471, %v2891, %v2689
        %v2924 = vsel %vm472, %v2892, %v2690
        %v2925 = vsel %vm473, %v2893, %v2691
        %v2926 = vsel %vm474, %v2894, %v2692
        %v2927 = vsel %vm475, %v2895, %v2693
        %v2928 = vsel %vm476, %v2896, %v2694
        %v2929 = vsel %vm477, %v2897, %v2695
        %v2930 = vpack.c.bf16 %v2899, %v2898
        %v2931 = vpack.c.bf16 %v2901, %v2900
        %v2932 = vpack.c.bf16 %v2903, %v2902
        %v2933 = vpack.c.bf16 %v2905, %v2904
        %v2934 = vpack.c.bf16 %v2907, %v2906
        %v2935 = vpack.c.bf16 %v2909, %v2908
        %v2936 = vpack.c.bf16 %v2911, %v2910
        %v2937 = vpack.c.bf16 %v2913, %v2912
        %v2938 = vpack.c.bf16 %v2915, %v2914
        %v2939 = vpack.c.bf16 %v2917, %v2916
        %v2940 = vpack.c.bf16 %v2919, %v2918
        %v2941 = vpack.c.bf16 %v2921, %v2920
        %v2942 = vpack.c.bf16 %v2923, %v2922
        %v2943 = vpack.c.bf16 %v2925, %v2924
        %v2944 = vpack.c.bf16 %v2927, %v2926
        %v2945 = vpack.c.bf16 %v2929, %v2928
        %v2946 = vld [vmem:[%s787 + $0x2] sm:$0xff]
        %v2947 = vld [vmem:[%s787 + $0xa] sm:$0xff]
        %v2948 = vld [vmem:[%s787 + $0x1a] sm:$0xff]
        %v2949 = vld [vmem:[%s787 + $0x22] sm:$0xff]
        %v2950 = vld [vmem:[%s787 + $0x32] sm:$0xff]
        %v2951 = vld [vmem:[%s787 + $0x3a] sm:$0xff]
        %v2952 = vld [vmem:[%s787 + $0x4a] sm:$0xff]
        %v2953 = vld [vmem:[%s787 + $0x52] sm:$0xff]
        %v2954 = vld [vmem:[%s787 + $0x62] sm:$0xff]
        %v2955 = vld [vmem:[%s787 + $0x6a] sm:$0xff]
        %v2956 = vld [vmem:[%s787 + $0x7a] sm:$0xff]
        %v2957 = vld [vmem:[%s787 + $0x82] sm:$0xff]
        %v2958 = vld [vmem:[%s787 + $0x92] sm:$0xff]
        %v2959 = vld [vmem:[%s787 + $0x9a] sm:$0xff]
        %v2960 = vld [vmem:[%s787 + $0xaa] sm:$0xff]
        %v2961 = vld [vmem:[%s787 + $0xb2] sm:$0xff]
        %v2962 = vld [vmem:[%s787 + $0xc2] sm:$0xff]
        %v2963 = vld [vmem:[%s787 + $0xca] sm:$0xff]
        %v2964 = vld [vmem:[%s787 + $0xda] sm:$0xff]
        %v2965 = vld [vmem:[%s787 + $0xe2] sm:$0xff]
        %v2966 = vld [vmem:[%s787 + $0xf2] sm:$0xff]
        %v2967 = vld [vmem:[%s787 + $0xfa] sm:$0xff]
        %v2968 = vld [vmem:[%s787 + $0x10a] sm:$0xff]
        %v2969 = vld [vmem:[%s787 + $0x112] sm:$0xff]
        %v2970 = vld [vmem:[%s787 + $0x122] sm:$0xff]
        %v2971 = vld [vmem:[%s787 + $0x12a] sm:$0xff]
        %v2972 = vld [vmem:[%s787 + $0x13a] sm:$0xff]
        %v2973 = vld [vmem:[%s787 + $0x142] sm:$0xff]
        %v2974 = vld [vmem:[%s787 + $0x152] sm:$0xff]
        %v2975 = vld [vmem:[%s787 + $0x15a] sm:$0xff]
        %v2976 = vld [vmem:[%s787 + $0x16a] sm:$0xff]
        %v2977 = vld [vmem:[%s787 + $0x172] sm:$0xff]
        %v2978 = vld [vmem:[%s7 + $0x1] sm:$0x1]
        %v2979 = vld [vmem:[%s8 + $0x1] sm:$0x1]
        %v2980 = vlaneseq
        %v2981 = vshrl.u32 %v2980, 7
        %v2982 = vsub.s32 0, %v2981
        %v2983 = vrot.slane %v2978, %v2982
        %v2984 = vmul.f32 %v2946, %v2983
        %v2985 = vmul.f32 %v2947, %v2983
        %v2986 = vmul.f32 %v2948, %v2983
        %v2987 = vmul.f32 %v2949, %v2983
        %v2988 = vmul.f32 %v2950, %v2983
        %v2989 = vmul.f32 %v2951, %v2983
        %v2990 = vmul.f32 %v2952, %v2983
        %v2991 = vmul.f32 %v2953, %v2983
        %v2992 = vmul.f32 %v2954, %v2983
        %v2993 = vmul.f32 %v2955, %v2983
        %v2994 = vmul.f32 %v2956, %v2983
        %v2995 = vmul.f32 %v2957, %v2983
        %v2996 = vmul.f32 %v2958, %v2983
        %v2997 = vmul.f32 %v2959, %v2983
        %v2998 = vmul.f32 %v2960, %v2983
        %v2999 = vmul.f32 %v2961, %v2983
        %v3000 = vmul.f32 %v2962, %v2983
        %v3001 = vmul.f32 %v2963, %v2983
        %v3002 = vmul.f32 %v2964, %v2983
        %v3003 = vmul.f32 %v2965, %v2983
        %v3004 = vmul.f32 %v2966, %v2983
        %v3005 = vmul.f32 %v2967, %v2983
        %v3006 = vmul.f32 %v2968, %v2983
        %v3007 = vmul.f32 %v2969, %v2983
        %v3008 = vmul.f32 %v2970, %v2983
        %v3009 = vmul.f32 %v2971, %v2983
        %v3010 = vmul.f32 %v2972, %v2983
        %v3011 = vmul.f32 %v2973, %v2983
        %v3012 = vmul.f32 %v2974, %v2983
        %v3013 = vmul.f32 %v2975, %v2983
        %v3014 = vmul.f32 %v2976, %v2983
        %v3015 = vmul.f32 %v2977, %v2983
        %v3016 = vlaneseq
        %v3017 = vshrl.u32 %v3016, 7
        %v3018 = vsub.s32 0, %v3017
        %v3019 = vrot.slane %v2979, %v3018
        %v3020 = vadd.f32 %v2984, %v3019
        %v3021 = vadd.f32 %v2985, %v3019
        %v3022 = vadd.f32 %v2986, %v3019
        %v3023 = vadd.f32 %v2987, %v3019
        %v3024 = vadd.f32 %v2988, %v3019
        %v3025 = vadd.f32 %v2989, %v3019
        %v3026 = vadd.f32 %v2990, %v3019
        %v3027 = vadd.f32 %v2991, %v3019
        %v3028 = vadd.f32 %v2992, %v3019
        %v3029 = vadd.f32 %v2993, %v3019
        %v3030 = vadd.f32 %v2994, %v3019
        %v3031 = vadd.f32 %v2995, %v3019
        %v3032 = vadd.f32 %v2996, %v3019
        %v3033 = vadd.f32 %v2997, %v3019
        %v3034 = vadd.f32 %v2998, %v3019
        %v3035 = vadd.f32 %v2999, %v3019
        %v3036 = vadd.f32 %v3000, %v3019
        %v3037 = vadd.f32 %v3001, %v3019
        %v3038 = vadd.f32 %v3002, %v3019
        %v3039 = vadd.f32 %v3003, %v3019
        %v3040 = vadd.f32 %v3004, %v3019
        %v3041 = vadd.f32 %v3005, %v3019
        %v3042 = vadd.f32 %v3006, %v3019
        %v3043 = vadd.f32 %v3007, %v3019
        %v3044 = vadd.f32 %v3008, %v3019
        %v3045 = vadd.f32 %v3009, %v3019
        %v3046 = vadd.f32 %v3010, %v3019
        %v3047 = vadd.f32 %v3011, %v3019
        %v3048 = vadd.f32 %v3012, %v3019
        %v3049 = vadd.f32 %v3013, %v3019
        %v3050 = vadd.f32 %v3014, %v3019
        %v3051 = vadd.f32 %v3015, %v3019
        %v3052 = vadd.f32 %v3020, %v2664
        %v3053 = vadd.f32 %v3021, %v2665
        %v3054 = vadd.f32 %v3022, %v2666
        %v3055 = vadd.f32 %v3023, %v2667
        %v3056 = vadd.f32 %v3024, %v2668
        %v3057 = vadd.f32 %v3025, %v2669
        %v3058 = vadd.f32 %v3026, %v2670
        %v3059 = vadd.f32 %v3027, %v2671
        %v3060 = vadd.f32 %v3028, %v2672
        %v3061 = vadd.f32 %v3029, %v2673
        %v3062 = vadd.f32 %v3030, %v2674
        %v3063 = vadd.f32 %v3031, %v2675
        %v3064 = vadd.f32 %v3032, %v2676
        %v3065 = vadd.f32 %v3033, %v2677
        %v3066 = vadd.f32 %v3034, %v2678
        %v3067 = vadd.f32 %v3035, %v2679
        %v3068 = vadd.f32 %v3036, %v2680
        %v3069 = vadd.f32 %v3037, %v2681
        %v3070 = vadd.f32 %v3038, %v2682
        %v3071 = vadd.f32 %v3039, %v2683
        %v3072 = vadd.f32 %v3040, %v2684
        %v3073 = vadd.f32 %v3041, %v2685
        %v3074 = vadd.f32 %v3042, %v2686
        %v3075 = vadd.f32 %v3043, %v2687
        %v3076 = vadd.f32 %v3044, %v2688
        %v3077 = vadd.f32 %v3045, %v2689
        %v3078 = vadd.f32 %v3046, %v2690
        %v3079 = vadd.f32 %v3047, %v2691
        %v3080 = vadd.f32 %v3048, %v2692
        %v3081 = vadd.f32 %v3049, %v2693
        %v3082 = vadd.f32 %v3050, %v2694
        %v3083 = vadd.f32 %v3051, %v2695
        %v3084 = vmax.f32 %v3052, 0.0
        %v3085 = vmax.f32 %v3053, 0.0
        %v3086 = vmax.f32 %v3054, 0.0
        %v3087 = vmax.f32 %v3055, 0.0
        %v3088 = vmax.f32 %v3056, 0.0
        %v3089 = vmax.f32 %v3057, 0.0
        %v3090 = vmax.f32 %v3058, 0.0
        %v3091 = vmax.f32 %v3059, 0.0
        %v3092 = vmax.f32 %v3060, 0.0
        %v3093 = vmax.f32 %v3061, 0.0
        %v3094 = vmax.f32 %v3062, 0.0
        %v3095 = vmax.f32 %v3063, 0.0
        %v3096 = vmax.f32 %v3064, 0.0
        %v3097 = vmax.f32 %v3065, 0.0
        %v3098 = vmax.f32 %v3066, 0.0
        %v3099 = vmax.f32 %v3067, 0.0
        %v3100 = vmax.f32 %v3068, 0.0
        %v3101 = vmax.f32 %v3069, 0.0
        %v3102 = vmax.f32 %v3070, 0.0
        %v3103 = vmax.f32 %v3071, 0.0
        %v3104 = vmax.f32 %v3072, 0.0
        %v3105 = vmax.f32 %v3073, 0.0
        %v3106 = vmax.f32 %v3074, 0.0
        %v3107 = vmax.f32 %v3075, 0.0
        %v3108 = vmax.f32 %v3076, 0.0
        %v3109 = vmax.f32 %v3077, 0.0
        %v3110 = vmax.f32 %v3078, 0.0
        %v3111 = vmax.f32 %v3079, 0.0
        %v3112 = vmax.f32 %v3080, 0.0
        %v3113 = vmax.f32 %v3081, 0.0
        %v3114 = vmax.f32 %v3082, 0.0
        %v3115 = vmax.f32 %v3083, 0.0
        %v3116 = vsel %vm478, %v3084, %v2664
        %v3117 = vsel %vm479, %v3085, %v2665
        %v3118 = vsel %vm478, %v3086, %v2666
        %v3119 = vsel %vm479, %v3087, %v2667
        %v3120 = vsel %vm478, %v3088, %v2668
        %v3121 = vsel %vm479, %v3089, %v2669
        %v3122 = vsel %vm478, %v3090, %v2670
        %v3123 = vsel %vm479, %v3091, %v2671
        %v3124 = vsel %vm478, %v3092, %v2672
        %v3125 = vsel %vm479, %v3093, %v2673
        %v3126 = vsel %vm478, %v3094, %v2674
        %v3127 = vsel %vm479, %v3095, %v2675
        %v3128 = vsel %vm478, %v3096, %v2676
        %v3129 = vsel %vm479, %v3097, %v2677
        %v3130 = vsel %vm478, %v3098, %v2678
        %v3131 = vsel %vm479, %v3099, %v2679
        %v3132 = vsel %vm478, %v3100, %v2680
        %v3133 = vsel %vm479, %v3101, %v2681
        %v3134 = vsel %vm478, %v3102, %v2682
        %v3135 = vsel %vm479, %v3103, %v2683
        %v3136 = vsel %vm478, %v3104, %v2684
        %v3137 = vsel %vm479, %v3105, %v2685
        %v3138 = vsel %vm478, %v3106, %v2686
        %v3139 = vsel %vm479, %v3107, %v2687
        %v3140 = vsel %vm478, %v3108, %v2688
        %v3141 = vsel %vm479, %v3109, %v2689
        %v3142 = vsel %vm478, %v3110, %v2690
        %v3143 = vsel %vm479, %v3111, %v2691
        %v3144 = vsel %vm478, %v3112, %v2692
        %v3145 = vsel %vm479, %v3113, %v2693
        %v3146 = vsel %vm478, %v3114, %v2694
        %v3147 = vsel %vm479, %v3115, %v2695
        %v3148 = vpack.c.bf16 %v3117, %v3116
        %v3149 = vpack.c.bf16 %v3119, %v3118
        %v3150 = vpack.c.bf16 %v3121, %v3120
        %v3151 = vpack.c.bf16 %v3123, %v3122
        %v3152 = vpack.c.bf16 %v3125, %v3124
        %v3153 = vpack.c.bf16 %v3127, %v3126
        %v3154 = vpack.c.bf16 %v3129, %v3128
        %v3155 = vpack.c.bf16 %v3131, %v3130
        %v3156 = vpack.c.bf16 %v3133, %v3132
        %v3157 = vpack.c.bf16 %v3135, %v3134
        %v3158 = vpack.c.bf16 %v3137, %v3136
        %v3159 = vpack.c.bf16 %v3139, %v3138
        %v3160 = vpack.c.bf16 %v3141, %v3140
        %v3161 = vpack.c.bf16 %v3143, %v3142
        %v3162 = vpack.c.bf16 %v3145, %v3144
        %v3163 = vpack.c.bf16 %v3147, %v3146
        %v3164 = vld [vmem:[%s1256 + $0x1] sm:$0xff]
        %v3165 = vld [vmem:[%s1256 + $0x9] sm:$0xff]
        %v3166 = vld [vmem:[%s1256 + $0x19] sm:$0xff]
        %v3167 = vld [vmem:[%s1256 + $0x21] sm:$0xff]
        %v3168 = vld [vmem:[%s1256 + $0x31] sm:$0xff]
        %v3169 = vld [vmem:[%s1256 + $0x39] sm:$0xff]
        %v3170 = vld [vmem:[%s1256 + $0x49] sm:$0xff]
        %v3171 = vld [vmem:[%s1256 + $0x51] sm:$0xff]
        %v3172 = vld [vmem:[%s1256 + $0x61] sm:$0xff]
        %v3173 = vld [vmem:[%s1256 + $0x69] sm:$0xff]
        %v3174 = vld [vmem:[%s1256 + $0x79] sm:$0xff]
        %v3175 = vld [vmem:[%s1256 + $0x81] sm:$0xff]
        %v3176 = vld [vmem:[%s1256 + $0x91] sm:$0xff]
        %v3177 = vld [vmem:[%s1256 + $0x99] sm:$0xff]
        %v3178 = vld [vmem:[%s1256 + $0xa9] sm:$0xff]
        %v3179 = vld [vmem:[%s1256 + $0xb1] sm:$0xff]
        %v3180 = vld [vmem:[%s1256 + $0xc1] sm:$0xff]
        %v3181 = vld [vmem:[%s1256 + $0xc9] sm:$0xff]
        %v3182 = vld [vmem:[%s1256 + $0xd9] sm:$0xff]
        %v3183 = vld [vmem:[%s1256 + $0xe1] sm:$0xff]
        %v3184 = vld [vmem:[%s1256 + $0xf1] sm:$0xff]
        %v3185 = vld [vmem:[%s1256 + $0xf9] sm:$0xff]
        %v3186 = vld [vmem:[%s1256 + $0x109] sm:$0xff]
        %v3187 = vld [vmem:[%s1256 + $0x111] sm:$0xff]
        %v3188 = vld [vmem:[%s1256 + $0x121] sm:$0xff]
        %v3189 = vld [vmem:[%s1256 + $0x129] sm:$0xff]
        %v3190 = vld [vmem:[%s1256 + $0x139] sm:$0xff]
        %v3191 = vld [vmem:[%s1256 + $0x141] sm:$0xff]
        %v3192 = vld [vmem:[%s1256 + $0x151] sm:$0xff]
        %v3193 = vld [vmem:[%s1256 + $0x159] sm:$0xff]
        %v3194 = vld [vmem:[%s1256 + $0x169] sm:$0xff]
        %v3195 = vld [vmem:[%s1256 + $0x171] sm:$0xff]
        %v3196 = vld [vmem:[%s7 + $0x2] sm:$0x1]
        %v3197 = vld [vmem:[%s8 + $0x2] sm:$0x1]
        %v3198 = vlaneseq
        %v3199 = vshrl.u32 %v3198, 7
        %v3200 = vsub.s32 0, %v3199
        %v3201 = vrot.slane %v3196, %v3200
        %v3202 = vmul.f32 %v3164, %v3201
        %v3203 = vmul.f32 %v3165, %v3201
        %v3204 = vmul.f32 %v3166, %v3201
        %v3205 = vmul.f32 %v3167, %v3201
        %v3206 = vmul.f32 %v3168, %v3201
        %v3207 = vmul.f32 %v3169, %v3201
        %v3208 = vmul.f32 %v3170, %v3201
        %v3209 = vmul.f32 %v3171, %v3201
        %v3210 = vmul.f32 %v3172, %v3201
        %v3211 = vmul.f32 %v3173, %v3201
        %v3212 = vmul.f32 %v3174, %v3201
        %v3213 = vmul.f32 %v3175, %v3201
        %v3214 = vmul.f32 %v3176, %v3201
        %v3215 = vmul.f32 %v3177, %v3201
        %v3216 = vmul.f32 %v3178, %v3201
        %v3217 = vmul.f32 %v3179, %v3201
        %v3218 = vmul.f32 %v3180, %v3201
        %v3219 = vmul.f32 %v3181, %v3201
        %v3220 = vmul.f32 %v3182, %v3201
        %v3221 = vmul.f32 %v3183, %v3201
        %v3222 = vmul.f32 %v3184, %v3201
        %v3223 = vmul.f32 %v3185, %v3201
        %v3224 = vmul.f32 %v3186, %v3201
        %v3225 = vmul.f32 %v3187, %v3201
        %v3226 = vmul.f32 %v3188, %v3201
        %v3227 = vmul.f32 %v3189, %v3201
        %v3228 = vmul.f32 %v3190, %v3201
        %v3229 = vmul.f32 %v3191, %v3201
        %v3230 = vmul.f32 %v3192, %v3201
        %v3231 = vmul.f32 %v3193, %v3201
        %v3232 = vmul.f32 %v3194, %v3201
        %v3233 = vmul.f32 %v3195, %v3201
        %v3234 = vlaneseq
        %v3235 = vshrl.u32 %v3234, 7
        %v3236 = vsub.s32 0, %v3235
        %v3237 = vrot.slane %v3197, %v3236
        %v3238 = vadd.f32 %v3202, %v3237
        %v3239 = vadd.f32 %v3203, %v3237
        %v3240 = vadd.f32 %v3204, %v3237
        %v3241 = vadd.f32 %v3205, %v3237
        %v3242 = vadd.f32 %v3206, %v3237
        %v3243 = vadd.f32 %v3207, %v3237
        %v3244 = vadd.f32 %v3208, %v3237
        %v3245 = vadd.f32 %v3209, %v3237
        %v3246 = vadd.f32 %v3210, %v3237
        %v3247 = vadd.f32 %v3211, %v3237
        %v3248 = vadd.f32 %v3212, %v3237
        %v3249 = vadd.f32 %v3213, %v3237
        %v3250 = vadd.f32 %v3214, %v3237
        %v3251 = vadd.f32 %v3215, %v3237
        %v3252 = vadd.f32 %v3216, %v3237
        %v3253 = vadd.f32 %v3217, %v3237
        %v3254 = vadd.f32 %v3218, %v3237
        %v3255 = vadd.f32 %v3219, %v3237
        %v3256 = vadd.f32 %v3220, %v3237
        %v3257 = vadd.f32 %v3221, %v3237
        %v3258 = vadd.f32 %v3222, %v3237
        %v3259 = vadd.f32 %v3223, %v3237
        %v3260 = vadd.f32 %v3224, %v3237
        %v3261 = vadd.f32 %v3225, %v3237
        %v3262 = vadd.f32 %v3226, %v3237
        %v3263 = vadd.f32 %v3227, %v3237
        %v3264 = vadd.f32 %v3228, %v3237
        %v3265 = vadd.f32 %v3229, %v3237
        %v3266 = vadd.f32 %v3230, %v3237
        %v3267 = vadd.f32 %v3231, %v3237
        %v3268 = vadd.f32 %v3232, %v3237
        %v3269 = vadd.f32 %v3233, %v3237
        %v3270 = vadd.f32 %v3238, %v2664
        %v3271 = vadd.f32 %v3239, %v2665
        %v3272 = vadd.f32 %v3240, %v2666
        %v3273 = vadd.f32 %v3241, %v2667
        %v3274 = vadd.f32 %v3242, %v2668
        %v3275 = vadd.f32 %v3243, %v2669
        %v3276 = vadd.f32 %v3244, %v2670
        %v3277 = vadd.f32 %v3245, %v2671
        %v3278 = vadd.f32 %v3246, %v2672
        %v3279 = vadd.f32 %v3247, %v2673
        %v3280 = vadd.f32 %v3248, %v2674
        %v3281 = vadd.f32 %v3249, %v2675
        %v3282 = vadd.f32 %v3250, %v2676
        %v3283 = vadd.f32 %v3251, %v2677
        %v3284 = vadd.f32 %v3252, %v2678
        %v3285 = vadd.f32 %v3253, %v2679
        %v3286 = vadd.f32 %v3254, %v2680
        %v3287 = vadd.f32 %v3255, %v2681
        %v3288 = vadd.f32 %v3256, %v2682
        %v3289 = vadd.f32 %v3257, %v2683
        %v3290 = vadd.f32 %v3258, %v2684
        %v3291 = vadd.f32 %v3259, %v2685
        %v3292 = vadd.f32 %v3260, %v2686
        %v3293 = vadd.f32 %v3261, %v2687
        %v3294 = vadd.f32 %v3262, %v2688
        %v3295 = vadd.f32 %v3263, %v2689
        %v3296 = vadd.f32 %v3264, %v2690
        %v3297 = vadd.f32 %v3265, %v2691
        %v3298 = vadd.f32 %v3266, %v2692
        %v3299 = vadd.f32 %v3267, %v2693
        %v3300 = vadd.f32 %v3268, %v2694
        %v3301 = vadd.f32 %v3269, %v2695
        %v3302 = vmax.f32 %v3270, 0.0
        %v3303 = vmax.f32 %v3271, 0.0
        %v3304 = vmax.f32 %v3272, 0.0
        %v3305 = vmax.f32 %v3273, 0.0
        %v3306 = vmax.f32 %v3274, 0.0
        %v3307 = vmax.f32 %v3275, 0.0
        %v3308 = vmax.f32 %v3276, 0.0
        %v3309 = vmax.f32 %v3277, 0.0
        %v3310 = vmax.f32 %v3278, 0.0
        %v3311 = vmax.f32 %v3279, 0.0
        %v3312 = vmax.f32 %v3280, 0.0
        %v3313 = vmax.f32 %v3281, 0.0
        %v3314 = vmax.f32 %v3282, 0.0
        %v3315 = vmax.f32 %v3283, 0.0
        %v3316 = vmax.f32 %v3284, 0.0
        %v3317 = vmax.f32 %v3285, 0.0
        %v3318 = vmax.f32 %v3286, 0.0
        %v3319 = vmax.f32 %v3287, 0.0
        %v3320 = vmax.f32 %v3288, 0.0
        %v3321 = vmax.f32 %v3289, 0.0
        %v3322 = vmax.f32 %v3290, 0.0
        %v3323 = vmax.f32 %v3291, 0.0
        %v3324 = vmax.f32 %v3292, 0.0
        %v3325 = vmax.f32 %v3293, 0.0
        %v3326 = vmax.f32 %v3294, 0.0
        %v3327 = vmax.f32 %v3295, 0.0
        %v3328 = vmax.f32 %v3296, 0.0
        %v3329 = vmax.f32 %v3297, 0.0
        %v3330 = vmax.f32 %v3298, 0.0
        %v3331 = vmax.f32 %v3299, 0.0
        %v3332 = vmax.f32 %v3300, 0.0
        %v3333 = vmax.f32 %v3301, 0.0
        %v3334 = vsel %vm480, %v3302, %v2664
        %v3335 = vsel %vm481, %v3303, %v2665
        %v3336 = vsel %vm482, %v3304, %v2666
        %v3337 = vsel %vm483, %v3305, %v2667
        %v3338 = vsel %vm484, %v3306, %v2668
        %v3339 = vsel %vm485, %v3307, %v2669
        %v3340 = vsel %vm486, %v3308, %v2670
        %v3341 = vsel %vm487, %v3309, %v2671
        %v3342 = vsel %vm488, %v3310, %v2672
        %v3343 = vsel %vm489, %v3311, %v2673
        %v3344 = vsel %vm490, %v3312, %v2674
        %v3345 = vsel %vm491, %v3313, %v2675
        %v3346 = vsel %vm492, %v3314, %v2676
        %v3347 = vsel %vm493, %v3315, %v2677
        %v3348 = vsel %vm494, %v3316, %v2678
        %v3349 = vsel %vm495, %v3317, %v2679
        %v3350 = vsel %vm496, %v3318, %v2680
        %v3351 = vsel %vm497, %v3319, %v2681
        %v3352 = vsel %vm498, %v3320, %v2682
        %v3353 = vsel %vm499, %v3321, %v2683
        %v3354 = vsel %vm500, %v3322, %v2684
        %v3355 = vsel %vm501, %v3323, %v2685
        %v3356 = vsel %vm502, %v3324, %v2686
        %v3357 = vsel %vm503, %v3325, %v2687
        %v3358 = vsel %vm504, %v3326, %v2688
        %v3359 = vsel %vm505, %v3327, %v2689
        %v3360 = vsel %vm506, %v3328, %v2690
        %v3361 = vsel %vm507, %v3329, %v2691
        %v3362 = vsel %vm508, %v3330, %v2692
        %v3363 = vsel %vm509, %v3331, %v2693
        %v3364 = vsel %vm510, %v3332, %v2694
        %v3365 = vsel %vm511, %v3333, %v2695
        %v3366 = vpack.c.bf16 %v3335, %v3334
        %v3367 = vpack.c.bf16 %v3337, %v3336
        %v3368 = vpack.c.bf16 %v3339, %v3338
        %v3369 = vpack.c.bf16 %v3341, %v3340
        %v3370 = vpack.c.bf16 %v3343, %v3342
        %v3371 = vpack.c.bf16 %v3345, %v3344
        %v3372 = vpack.c.bf16 %v3347, %v3346
        %v3373 = vpack.c.bf16 %v3349, %v3348
        %v3374 = vpack.c.bf16 %v3351, %v3350
        %v3375 = vpack.c.bf16 %v3353, %v3352
        %v3376 = vpack.c.bf16 %v3355, %v3354
        %v3377 = vpack.c.bf16 %v3357, %v3356
        %v3378 = vpack.c.bf16 %v3359, %v3358
        %v3379 = vpack.c.bf16 %v3361, %v3360
        %v3380 = vpack.c.bf16 %v3363, %v3362
        %v3381 = vpack.c.bf16 %v3365, %v3364
        %v3382 = vld [vmem:[%s787] sm:$0xff]
        %v3383 = vld [vmem:[%s787 + $0x8] sm:$0xff]
        %v3384 = vld [vmem:[%s787 + $0x18] sm:$0xff]
        %v3385 = vld [vmem:[%s787 + $0x20] sm:$0xff]
        %v3386 = vld [vmem:[%s787 + $0x30] sm:$0xff]
        %v3387 = vld [vmem:[%s787 + $0x38] sm:$0xff]
        %v3388 = vld [vmem:[%s787 + $0x48] sm:$0xff]
        %v3389 = vld [vmem:[%s787 + $0x50] sm:$0xff]
        %v3390 = vld [vmem:[%s787 + $0x60] sm:$0xff]
        %v3391 = vld [vmem:[%s787 + $0x68] sm:$0xff]
        %v3392 = vld [vmem:[%s787 + $0x78] sm:$0xff]
        %v3393 = vld [vmem:[%s787 + $0x80] sm:$0xff]
        %v3394 = vld [vmem:[%s787 + $0x90] sm:$0xff]
        %v3395 = vld [vmem:[%s787 + $0x98] sm:$0xff]
        %v3396 = vld [vmem:[%s787 + $0xa8] sm:$0xff]
        %v3397 = vld [vmem:[%s787 + $0xb0] sm:$0xff]
        %v3398 = vld [vmem:[%s787 + $0xc0] sm:$0xff]
        %v3399 = vld [vmem:[%s787 + $0xc8] sm:$0xff]
        %v3400 = vld [vmem:[%s787 + $0xd8] sm:$0xff]
        %v3401 = vld [vmem:[%s787 + $0xe0] sm:$0xff]
        %v3402 = vld [vmem:[%s787 + $0xf0] sm:$0xff]
        %v3403 = vld [vmem:[%s787 + $0xf8] sm:$0xff]
        %v3404 = vld [vmem:[%s787 + $0x108] sm:$0xff]
        %v3405 = vld [vmem:[%s787 + $0x110] sm:$0xff]
        %v3406 = vld [vmem:[%s787 + $0x120] sm:$0xff]
        %v3407 = vld [vmem:[%s787 + $0x128] sm:$0xff]
        %v3408 = vld [vmem:[%s787 + $0x138] sm:$0xff]
        %v3409 = vld [vmem:[%s787 + $0x140] sm:$0xff]
        %v3410 = vld [vmem:[%s787 + $0x150] sm:$0xff]
        %v3411 = vld [vmem:[%s787 + $0x158] sm:$0xff]
        %v3412 = vld [vmem:[%s787 + $0x168] sm:$0xff]
        %v3413 = vld [vmem:[%s787 + $0x170] sm:$0xff]
        %v3414 = vld [vmem:[%s7 + $0x3] sm:$0x1]
        %v3415 = vld [vmem:[%s8 + $0x3] sm:$0x1]
        %v3416 = vlaneseq
        %v3417 = vshrl.u32 %v3416, 7
        %v3418 = vsub.s32 0, %v3417
        %v3419 = vrot.slane %v3414, %v3418
        %v3420 = vmul.f32 %v3382, %v3419
        %v3421 = vmul.f32 %v3383, %v3419
        %v3422 = vmul.f32 %v3384, %v3419
        %v3423 = vmul.f32 %v3385, %v3419
        %v3424 = vmul.f32 %v3386, %v3419
        %v3425 = vmul.f32 %v3387, %v3419
        %v3426 = vmul.f32 %v3388, %v3419
        %v3427 = vmul.f32 %v3389, %v3419
        %v3428 = vmul.f32 %v3390, %v3419
        %v3429 = vmul.f32 %v3391, %v3419
        %v3430 = vmul.f32 %v3392, %v3419
        %v3431 = vmul.f32 %v3393, %v3419
        %v3432 = vmul.f32 %v3394, %v3419
        %v3433 = vmul.f32 %v3395, %v3419
        %v3434 = vmul.f32 %v3396, %v3419
        %v3435 = vmul.f32 %v3397, %v3419
        %v3436 = vmul.f32 %v3398, %v3419
        %v3437 = vmul.f32 %v3399, %v3419
        %v3438 = vmul.f32 %v3400, %v3419
        %v3439 = vmul.f32 %v3401, %v3419
        %v3440 = vmul.f32 %v3402, %v3419
        %v3441 = vmul.f32 %v3403, %v3419
        %v3442 = vmul.f32 %v3404, %v3419
        %v3443 = vmul.f32 %v3405, %v3419
        %v3444 = vmul.f32 %v3406, %v3419
        %v3445 = vmul.f32 %v3407, %v3419
        %v3446 = vmul.f32 %v3408, %v3419
        %v3447 = vmul.f32 %v3409, %v3419
        %v3448 = vmul.f32 %v3410, %v3419
        %v3449 = vmul.f32 %v3411, %v3419
        %v3450 = vmul.f32 %v3412, %v3419
        %v3451 = vmul.f32 %v3413, %v3419
        %v3452 = vlaneseq
        %v3453 = vshrl.u32 %v3452, 7
        %v3454 = vsub.s32 0, %v3453
        %v3455 = vrot.slane %v3415, %v3454
        %v3456 = vadd.f32 %v3420, %v3455
        %v3457 = vadd.f32 %v3421, %v3455
        %v3458 = vadd.f32 %v3422, %v3455
        %v3459 = vadd.f32 %v3423, %v3455
        %v3460 = vadd.f32 %v3424, %v3455
        %v3461 = vadd.f32 %v3425, %v3455
        %v3462 = vadd.f32 %v3426, %v3455
        %v3463 = vadd.f32 %v3427, %v3455
        %v3464 = vadd.f32 %v3428, %v3455
        %v3465 = vadd.f32 %v3429, %v3455
        %v3466 = vadd.f32 %v3430, %v3455
        %v3467 = vadd.f32 %v3431, %v3455
        %v3468 = vadd.f32 %v3432, %v3455
        %v3469 = vadd.f32 %v3433, %v3455
        %v3470 = vadd.f32 %v3434, %v3455
        %v3471 = vadd.f32 %v3435, %v3455
        %v3472 = vadd.f32 %v3436, %v3455
        %v3473 = vadd.f32 %v3437, %v3455
        %v3474 = vadd.f32 %v3438, %v3455
        %v3475 = vadd.f32 %v3439, %v3455
        %v3476 = vadd.f32 %v3440, %v3455
        %v3477 = vadd.f32 %v3441, %v3455
        %v3478 = vadd.f32 %v3442, %v3455
        %v3479 = vadd.f32 %v3443, %v3455
        %v3480 = vadd.f32 %v3444, %v3455
        %v3481 = vadd.f32 %v3445, %v3455
        %v3482 = vadd.f32 %v3446, %v3455
        %v3483 = vadd.f32 %v3447, %v3455
        %v3484 = vadd.f32 %v3448, %v3455
        %v3485 = vadd.f32 %v3449, %v3455
        %v3486 = vadd.f32 %v3450, %v3455
        %v3487 = vadd.f32 %v3451, %v3455
        %v3488 = vadd.f32 %v3456, %v2664
        %v3489 = vadd.f32 %v3457, %v2665
        %v3490 = vadd.f32 %v3458, %v2666
        %v3491 = vadd.f32 %v3459, %v2667
        %v3492 = vadd.f32 %v3460, %v2668
        %v3493 = vadd.f32 %v3461, %v2669
        %v3494 = vadd.f32 %v3462, %v2670
        %v3495 = vadd.f32 %v3463, %v2671
        %v3496 = vadd.f32 %v3464, %v2672
        %v3497 = vadd.f32 %v3465, %v2673
        %v3498 = vadd.f32 %v3466, %v2674
        %v3499 = vadd.f32 %v3467, %v2675
        %v3500 = vadd.f32 %v3468, %v2676
        %v3501 = vadd.f32 %v3469, %v2677
        %v3502 = vadd.f32 %v3470, %v2678
        %v3503 = vadd.f32 %v3471, %v2679
        %v3504 = vadd.f32 %v3472, %v2680
        %v3505 = vadd.f32 %v3473, %v2681
        %v3506 = vadd.f32 %v3474, %v2682
        %v3507 = vadd.f32 %v3475, %v2683
        %v3508 = vadd.f32 %v3476, %v2684
        %v3509 = vadd.f32 %v3477, %v2685
        %v3510 = vadd.f32 %v3478, %v2686
        %v3511 = vadd.f32 %v3479, %v2687
        %v3512 = vadd.f32 %v3480, %v2688
        %v3513 = vadd.f32 %v3481, %v2689
        %v3514 = vadd.f32 %v3482, %v2690
        %v3515 = vadd.f32 %v3483, %v2691
        %v3516 = vadd.f32 %v3484, %v2692
        %v3517 = vadd.f32 %v3485, %v2693
        %v3518 = vadd.f32 %v3486, %v2694
        %v3519 = vadd.f32 %v3487, %v2695
        %v3520 = vmax.f32 %v3488, 0.0
        %v3521 = vmax.f32 %v3489, 0.0
        %v3522 = vmax.f32 %v3490, 0.0
        %v3523 = vmax.f32 %v3491, 0.0
        %v3524 = vmax.f32 %v3492, 0.0
        %v3525 = vmax.f32 %v3493, 0.0
        %v3526 = vmax.f32 %v3494, 0.0
        %v3527 = vmax.f32 %v3495, 0.0
        %v3528 = vmax.f32 %v3496, 0.0
        %v3529 = vmax.f32 %v3497, 0.0
        %v3530 = vmax.f32 %v3498, 0.0
        %v3531 = vmax.f32 %v3499, 0.0
        %v3532 = vmax.f32 %v3500, 0.0
        %v3533 = vmax.f32 %v3501, 0.0
        %v3534 = vmax.f32 %v3502, 0.0
        %v3535 = vmax.f32 %v3503, 0.0
        %v3536 = vmax.f32 %v3504, 0.0
        %v3537 = vmax.f32 %v3505, 0.0
        %v3538 = vmax.f32 %v3506, 0.0
        %v3539 = vmax.f32 %v3507, 0.0
        %v3540 = vmax.f32 %v3508, 0.0
        %v3541 = vmax.f32 %v3509, 0.0
        %v3542 = vmax.f32 %v3510, 0.0
        %v3543 = vmax.f32 %v3511, 0.0
        %v3544 = vmax.f32 %v3512, 0.0
        %v3545 = vmax.f32 %v3513, 0.0
        %v3546 = vmax.f32 %v3514, 0.0
        %v3547 = vmax.f32 %v3515, 0.0
        %v3548 = vmax.f32 %v3516, 0.0
        %v3549 = vmax.f32 %v3517, 0.0
        %v3550 = vmax.f32 %v3518, 0.0
        %v3551 = vmax.f32 %v3519, 0.0
        %v3552 = vsel %vm512, %v3520, %v2664
        %v3553 = vsel %vm513, %v3521, %v2665
        %v3554 = vsel %vm512, %v3522, %v2666
        %v3555 = vsel %vm513, %v3523, %v2667
        %v3556 = vsel %vm512, %v3524, %v2668
        %v3557 = vsel %vm513, %v3525, %v2669
        %v3558 = vsel %vm512, %v3526, %v2670
        %v3559 = vsel %vm513, %v3527, %v2671
        %v3560 = vsel %vm512, %v3528, %v2672
        %v3561 = vsel %vm513, %v3529, %v2673
        %v3562 = vsel %vm512, %v3530, %v2674
        %v3563 = vsel %vm513, %v3531, %v2675
        %v3564 = vsel %vm512, %v3532, %v2676
        %v3565 = vsel %vm513, %v3533, %v2677
        %v3566 = vsel %vm512, %v3534, %v2678
        %v3567 = vsel %vm513, %v3535, %v2679
        %v3568 = vsel %vm512, %v3536, %v2680
        %v3569 = vsel %vm513, %v3537, %v2681
        %v3570 = vsel %vm512, %v3538, %v2682
        %v3571 = vsel %vm513, %v3539, %v2683
        %v3572 = vsel %vm512, %v3540, %v2684
        %v3573 = vsel %vm513, %v3541, %v2685
        %v3574 = vsel %vm512, %v3542, %v2686
        %v3575 = vsel %vm513, %v3543, %v2687
        %v3576 = vsel %vm512, %v3544, %v2688
        %v3577 = vsel %vm513, %v3545, %v2689
        %v3578 = vsel %vm512, %v3546, %v2690
        %v3579 = vsel %vm513, %v3547, %v2691
        %v3580 = vsel %vm512, %v3548, %v2692
        %v3581 = vsel %vm513, %v3549, %v2693
        %v3582 = vsel %vm512, %v3550, %v2694
        %v3583 = vsel %vm513, %v3551, %v2695
        %v3584 = vpack.c.bf16 %v3553, %v3552
        %v3585 = vpack.c.bf16 %v3555, %v3554
        %v3586 = vpack.c.bf16 %v3557, %v3556
        %v3587 = vpack.c.bf16 %v3559, %v3558
        %v3588 = vpack.c.bf16 %v3561, %v3560
        %v3589 = vpack.c.bf16 %v3563, %v3562
        %v3590 = vpack.c.bf16 %v3565, %v3564
        %v3591 = vpack.c.bf16 %v3567, %v3566
        %v3592 = vpack.c.bf16 %v3569, %v3568
        %v3593 = vpack.c.bf16 %v3571, %v3570
        %v3594 = vpack.c.bf16 %v3573, %v3572
        %v3595 = vpack.c.bf16 %v3575, %v3574
        %v3596 = vpack.c.bf16 %v3577, %v3576
        %v3597 = vpack.c.bf16 %v3579, %v3578
        %v3598 = vpack.c.bf16 %v3581, %v3580
        %v3599 = vpack.c.bf16 %v3583, %v3582
        %v3600 = vld [vmem:[%s9] sm:$0xf]
        %v3601 = vld [vmem:[%s9 + $0x4] sm:$0xf]
        %v3602 = vld [vmem:[%s9 + $0x8] sm:$0xf]
        %v3603 = vld [vmem:[%s9 + $0xc] sm:$0xf]
        %v3604 = vld [vmem:[%s9 + $0x10] sm:$0xf]
        %v3605 = vld [vmem:[%s9 + $0x14] sm:$0xf]
        %v3606 = vld [vmem:[%s9 + $0x18] sm:$0xf]
        %v3607 = vld [vmem:[%s9 + $0x1c] sm:$0xf]
        %v3610 = vunpack.c.l.b16 %v3600
        %v3611 = vunpack.c.l.b16 %v3601
        %v3612 = vpack.c.b16 %v3611, %v3610
        %v3615 = vsel %vm577, %v2930, 0
        %v3618 = vsel %vm577, %v2931, 0
        %v3621 = vsel %vm577, %v2932, 0
        %v3624 = vsel %vm577, %v2933, 0
        %v3627 = vsel %vm577, %v2934, 0
        %v3630 = vsel %vm577, %v2935, 0
        %v3633 = vsel %vm577, %v2936, 0
        %v3636 = vsel %vm577, %v2937, 0
        %v3639 = vsel %vm577, %v2938, 0
        %v3642 = vsel %vm577, %v2939, 0
        %v3645 = vsel %vm577, %v2940, 0
        %v3648 = vsel %vm577, %v2941, 0
        %v3651 = vsel %vm577, %v2942, 0
        %v3654 = vsel %vm577, %v2943, 0
        %v3657 = vsel %vm577, %v2944, 0
        %v3660 = vsel %vm577, %v2945, 0
        %3662 = vmatprep.subr.bf16.mxu0 0
        %3663 = vmatpush1.bf16.msra.mxu0 %v3612
        %3664 = vmatprep.subr.bf16.mxu0 0
        %3665 = vmatpush1.bf16.msra.mxu0 0
        %3666 = vmatprep.subr.bf16.mxu0 0
        %3667 = vmatpush1.bf16.msra.mxu0 0
        %3668 = vmatprep.subr.bf16.mxu0 0
        %3669 = vmatpush1.bf16.msra.mxu0 0
        %3670 = vmatprep.subr.bf16.mxu0 0
        %3671 = vmatpush1.bf16.msra.mxu0 0
        %3672 = vmatprep.subr.bf16.mxu0 0
        %3673 = vmatpush1.bf16.msra.mxu0 0
        %3674 = vmatprep.subr.bf16.mxu0 0
        %3675 = vmatpush1.bf16.msra.mxu0 0
        %3676 = vmatprep.subr.bf16.mxu0 0
        %3677 = vmatpush1.bf16.msra.mxu0 0
        %3678 = vmatprep.subr.bf16.mxu0 0
        %3679 = vmatpush1.bf16.msra.mxu0 0
        %3680 = vmatprep.subr.bf16.mxu0 0
        %3681 = vmatpush1.bf16.msra.mxu0 0
        %3682 = vmatprep.subr.bf16.mxu0 0
        %3683 = vmatpush1.bf16.msra.mxu0 0
        %3684 = vmatprep.subr.bf16.mxu0 0
        %3685 = vmatpush1.bf16.msra.mxu0 0
        %3686 = vmatprep.subr.bf16.mxu0 0
        %3687 = vmatpush1.bf16.msra.mxu0 0
        %3688 = vmatprep.subr.bf16.mxu0 0
        %3689 = vmatpush1.bf16.msra.mxu0 0
        %3690 = vmatprep.subr.bf16.mxu0 0
        %3691 = vmatpush1.bf16.msra.mxu0 0
        %3692 = vmatprep.subr.bf16.mxu0 0
        %3693 = vmatpush1.bf16.msra.mxu0 0
        %3694 = vmatprep.mubr.bf16.mxu0 0
        %3695 = vmatmul.mubr.bf16.gmra.mrb[0].mxu0 %v3615
        %v3696 = vpop.f32.mrb[0].mxu0
        %v3697 = vadd.f32 0.0, %v3696
        %v3698 = vpop.f32.mrb[0].mxu0
        %v3699 = vpop.f32.mrb[0].mxu0
        %v3700 = vadd.f32 0.0, %v3699
        %v3701 = vpop.f32.mrb[0].mxu0
        %3702 = vmatprep.mubr.bf16.mxu0 0
        %3703 = vmatmul.mubr.bf16.gmra.mrb[0].mxu0 %v3618
        %v3704 = vpop.f32.mrb[0].mxu0
        %v3705 = vadd.f32 0.0, %v3704
        %v3706 = vpop.f32.mrb[0].mxu0
        %v3707 = vpop.f32.mrb[0].mxu0
        %v3708 = vadd.f32 0.0, %v3707
        %v3709 = vpop.f32.mrb[0].mxu0
        %3710 = vmatprep.mubr.bf16.mxu0 0
        %3711 = vmatmul.mubr.bf16.gmra.mrb[0].mxu0 %v3621
        %v3712 = vpop.f32.mrb[0].mxu0
        %v3713 = vadd.f32 0.0, %v3712
        %v3714 = vpop.f32.mrb[0].mxu0
        %v3715 = vpop.f32.mrb[0].mxu0
        %v3716 = vadd.f32 0.0, %v3715
        %v3717 = vpop.f32.mrb[0].mxu0
        %3718 = vmatprep.mubr.bf16.mxu0 0
        %3719 = vmatmul.mubr.bf16.gmra.mrb[0].mxu0 %v3624
        %v3720 = vpop.f32.mrb[0].mxu0
        %v3721 = vadd.f32 0.0, %v3720
        %v3722 = vpop.f32.mrb[0].mxu0
        %v3723 = vpop.f32.mrb[0].mxu0
        %v3724 = vadd.f32 0.0, %v3723
        %v3725 = vpop.f32.mrb[0].mxu0
        %3726 = vmatprep.mubr.bf16.mxu0 0
        %3727 = vmatmul.mubr.bf16.gmra.mrb[0].mxu0 %v3627
        %v3728 = vpop.f32.mrb[0].mxu0
        %v3729 = vadd.f32 0.0, %v3728
        %v3730 = vpop.f32.mrb[0].mxu0
        %v3731 = vpop.f32.mrb[0].mxu0
        %v3732 = vadd.f32 0.0, %v3731
        %v3733 = vpop.f32.mrb[0].mxu0
        %3734 = vmatprep.mubr.bf16.mxu0 0
        %3735 = vmatmul.mubr.bf16.gmra.mrb[0].mxu0 %v3630
        %v3736 = vpop.f32.mrb[0].mxu0
        %v3737 = vadd.f32 0.0, %v3736
        %v3738 = vpop.f32.mrb[0].mxu0
        %v3739 = vpop.f32.mrb[0].mxu0
        %v3740 = vadd.f32 0.0, %v3739
        %v3741 = vpop.f32.mrb[0].mxu0
        %3742 = vmatprep.mubr.bf16.mxu0 0
        %3743 = vmatmul.mubr.bf16.gmra.mrb[0].mxu0 %v3633
        %v3744 = vpop.f32.mrb[0].mxu0
        %v3745 = vadd.f32 0.0, %v3744
        %v3746 = vpop.f32.mrb[0].mxu0
        %v3747 = vpop.f32.mrb[0].mxu0
        %v3748 = vadd.f32 0.0, %v3747
        %v3749 = vpop.f32.mrb[0].mxu0
        %3750 = vmatprep.mubr.bf16.mxu0 0
        %3751 = vmatmul.mubr.bf16.gmra.mrb[0].mxu0 %v3636
        %v3752 = vpop.f32.mrb[0].mxu0
        %v3753 = vadd.f32 0.0, %v3752
        %v3754 = vpop.f32.mrb[0].mxu0
        %v3755 = vpop.f32.mrb[0].mxu0
        %v3756 = vadd.f32 0.0, %v3755
        %v3757 = vpop.f32.mrb[0].mxu0
        %3758 = vmatprep.mubr.bf16.mxu0 0
        %3759 = vmatmul.mubr.bf16.gmra.mrb[0].mxu0 %v3639
        %v3760 = vpop.f32.mrb[0].mxu0
        %v3761 = vadd.f32 0.0, %v3760
        %v3762 = vpop.f32.mrb[0].mxu0
        %v3763 = vpop.f32.mrb[0].mxu0
        %v3764 = vadd.f32 0.0, %v3763
        %v3765 = vpop.f32.mrb[0].mxu0
        %3766 = vmatprep.mubr.bf16.mxu0 0
        %3767 = vmatmul.mubr.bf16.gmra.mrb[0].mxu0 %v3642
        %v3768 = vpop.f32.mrb[0].mxu0
        %v3769 = vadd.f32 0.0, %v3768
        %v3770 = vpop.f32.mrb[0].mxu0
        %v3771 = vpop.f32.mrb[0].mxu0
        %v3772 = vadd.f32 0.0, %v3771
        %v3773 = vpop.f32.mrb[0].mxu0
        %3774 = vmatprep.mubr.bf16.mxu0 0
        %3775 = vmatmul.mubr.bf16.gmra.mrb[0].mxu0 %v3645
        %v3776 = vpop.f32.mrb[0].mxu0
        %v3777 = vadd.f32 0.0, %v3776
        %v3778 = vpop.f32.mrb[0].mxu0
        %v3779 = vpop.f32.mrb[0].mxu0
        %v3780 = vadd.f32 0.0, %v3779
        %v3781 = vpop.f32.mrb[0].mxu0
        %3782 = vmatprep.mubr.bf16.mxu0 0
        %3783 = vmatmul.mubr.bf16.gmra.mrb[0].mxu0 %v3648
        %v3784 = vpop.f32.mrb[0].mxu0
        %v3785 = vadd.f32 0.0, %v3784
        %v3786 = vpop.f32.mrb[0].mxu0
        %v3787 = vpop.f32.mrb[0].mxu0
        %v3788 = vadd.f32 0.0, %v3787
        %v3789 = vpop.f32.mrb[0].mxu0
        %3790 = vmatprep.mubr.bf16.mxu0 0
        %3791 = vmatmul.mubr.bf16.gmra.mrb[0].mxu0 %v3651
        %v3792 = vpop.f32.mrb[0].mxu0
        %v3793 = vadd.f32 0.0, %v3792
        %v3794 = vpop.f32.mrb[0].mxu0
        %v3795 = vpop.f32.mrb[0].mxu0
        %v3796 = vadd.f32 0.0, %v3795
        %v3797 = vpop.f32.mrb[0].mxu0
        %3798 = vmatprep.mubr.bf16.mxu0 0
        %3799 = vmatmul.mubr.bf16.gmra.mrb[0].mxu0 %v3654
        %v3800 = vpop.f32.mrb[0].mxu0
        %v3801 = vadd.f32 0.0, %v3800
        %v3802 = vpop.f32.mrb[0].mxu0
        %v3803 = vpop.f32.mrb[0].mxu0
        %v3804 = vadd.f32 0.0, %v3803
        %v3805 = vpop.f32.mrb[0].mxu0
        %3806 = vmatprep.mubr.bf16.mxu0 0
        %3807 = vmatmul.mubr.bf16.gmra.mrb[0].mxu0 %v3657
        %v3808 = vpop.f32.mrb[0].mxu0
        %v3809 = vadd.f32 0.0, %v3808
        %v3810 = vpop.f32.mrb[0].mxu0
        %v3811 = vpop.f32.mrb[0].mxu0
        %v3812 = vadd.f32 0.0, %v3811
        %v3813 = vpop.f32.mrb[0].mxu0
        %3814 = vmatprep.mubr.bf16.mxu0 0
        %3815 = vmatmul.mubr.bf16.gmra.mrb[0].mxu0 %v3660
        %v3816 = vpop.f32.mrb[0].mxu0
        %v3817 = vadd.f32 0.0, %v3816
        %v3818 = vpop.f32.mrb[0].mxu0
        %v3819 = vpop.f32.mrb[0].mxu0
        %v3820 = vadd.f32 0.0, %v3819
        %v3821 = vpop.f32.mrb[0].mxu0
        %3822 = vdwg.mxu0
        %v3825 = vunpack.c.l.b16 %v3602
        %v3826 = vunpack.c.l.b16 %v3603
        %v3827 = vpack.c.b16 %v3826, %v3825
        %v3830 = vsel %vm577, %v3148, 0
        %v3833 = vsel %vm577, %v3149, 0
        %v3836 = vsel %vm577, %v3150, 0
        %v3839 = vsel %vm577, %v3151, 0
        %v3842 = vsel %vm577, %v3152, 0
        %v3845 = vsel %vm577, %v3153, 0
        %v3848 = vsel %vm577, %v3154, 0
        %v3851 = vsel %vm577, %v3155, 0
        %v3854 = vsel %vm577, %v3156, 0
        %v3857 = vsel %vm577, %v3157, 0
        %v3860 = vsel %vm577, %v3158, 0
        %v3863 = vsel %vm577, %v3159, 0
        %v3866 = vsel %vm577, %v3160, 0
        %v3869 = vsel %vm577, %v3161, 0
        %v3872 = vsel %vm577, %v3162, 0
        %v3875 = vsel %vm577, %v3163, 0
        %3877 = vmatprep.subr.bf16.mxu0 0
        %3878 = vmatpush1.bf16.msra.mxu0 %v3827
        %3879 = vmatprep.subr.bf16.mxu0 0
        %3880 = vmatpush1.bf16.msra.mxu0 0
        %3881 = vmatprep.subr.bf16.mxu0 0
        %3882 = vmatpush1.bf16.msra.mxu0 0
        %3883 = vmatprep.subr.bf16.mxu0 0
        %3884 = vmatpush1.bf16.msra.mxu0 0
        %3885 = vmatprep.subr.bf16.mxu0 0
        %3886 = vmatpush1.bf16.msra.mxu0 0
        %3887 = vmatprep.subr.bf16.mxu0 0
        %3888 = vmatpush1.bf16.msra.mxu0 0
        %3889 = vmatprep.subr.bf16.mxu0 0
        %3890 = vmatpush1.bf16.msra.mxu0 0
        %3891 = vmatprep.subr.bf16.mxu0 0
        %3892 = vmatpush1.bf16.msra.mxu0 0
        %3893 = vmatprep.subr.bf16.mxu0 0
        %3894 = vmatpush1.bf16.msra.mxu0 0
        %3895 = vmatprep.subr.bf16.mxu0 0
        %3896 = vmatpush1.bf16.msra.mxu0 0
        %3897 = vmatprep.subr.bf16.mxu0 0
        %3898 = vmatpush1.bf16.msra.mxu0 0
        %3899 = vmatprep.subr.bf16.mxu0 0
        %3900 = vmatpush1.bf16.msra.mxu0 0
        %3901 = vmatprep.subr.bf16.mxu0 0
        %3902 = vmatpush1.bf16.msra.mxu0 0
        %3903 = vmatprep.subr.bf16.mxu0 0
        %3904 = vmatpush1.bf16.msra.mxu0 0
        %3905 = vmatprep.subr.bf16.mxu0 0
        %3906 = vmatpush1.bf16.msra.mxu0 0
        %3907 = vmatprep.subr.bf16.mxu0 0
        %3908 = vmatpush1.bf16.msra.mxu0 0
        %3909 = vmatprep.mubr.bf16.mxu0 0
        %3910 = vmatmul.mubr.bf16.gmra.mrb[0].mxu0 %v3830
        %v3911 = vpop.f32.mrb[0].mxu0
        %v3912 = vadd.f32 0.0, %v3911
        %v3913 = vpop.f32.mrb[0].mxu0
        %v3914 = vpop.f32.mrb[0].mxu0
        %v3915 = vadd.f32 0.0, %v3914
        %v3916 = vpop.f32.mrb[0].mxu0
        %3917 = vmatprep.mubr.bf16.mxu0 0
        %3918 = vmatmul.mubr.bf16.gmra.mrb[0].mxu0 %v3833
        %v3919 = vpop.f32.mrb[0].mxu0
        %v3920 = vadd.f32 0.0, %v3919
        %v3921 = vpop.f32.mrb[0].mxu0
        %v3922 = vpop.f32.mrb[0].mxu0
        %v3923 = vadd.f32 0.0, %v3922
        %v3924 = vpop.f32.mrb[0].mxu0
        %3925 = vmatprep.mubr.bf16.mxu0 0
        %3926 = vmatmul.mubr.bf16.gmra.mrb[0].mxu0 %v3836
        %v3927 = vpop.f32.mrb[0].mxu0
        %v3928 = vadd.f32 0.0, %v3927
        %v3929 = vpop.f32.mrb[0].mxu0
        %v3930 = vpop.f32.mrb[0].mxu0
        %v3931 = vadd.f32 0.0, %v3930
        %v3932 = vpop.f32.mrb[0].mxu0
        %3933 = vmatprep.mubr.bf16.mxu0 0
        %3934 = vmatmul.mubr.bf16.gmra.mrb[0].mxu0 %v3839
        %v3935 = vpop.f32.mrb[0].mxu0
        %v3936 = vadd.f32 0.0, %v3935
        %v3937 = vpop.f32.mrb[0].mxu0
        %v3938 = vpop.f32.mrb[0].mxu0
        %v3939 = vadd.f32 0.0, %v3938
        %v3940 = vpop.f32.mrb[0].mxu0
        %3941 = vmatprep.mubr.bf16.mxu0 0
        %3942 = vmatmul.mubr.bf16.gmra.mrb[0].mxu0 %v3842
        %v3943 = vpop.f32.mrb[0].mxu0
        %v3944 = vadd.f32 0.0, %v3943
        %v3945 = vpop.f32.mrb[0].mxu0
        %v3946 = vpop.f32.mrb[0].mxu0
        %v3947 = vadd.f32 0.0, %v3946
        %v3948 = vpop.f32.mrb[0].mxu0
        %3949 = vmatprep.mubr.bf16.mxu0 0
        %3950 = vmatmul.mubr.bf16.gmra.mrb[0].mxu0 %v3845
        %v3951 = vpop.f32.mrb[0].mxu0
        %v3952 = vadd.f32 0.0, %v3951
        %v3953 = vpop.f32.mrb[0].mxu0
        %v3954 = vpop.f32.mrb[0].mxu0
        %v3955 = vadd.f32 0.0, %v3954
        %v3956 = vpop.f32.mrb[0].mxu0
        %3957 = vmatprep.mubr.bf16.mxu0 0
        %3958 = vmatmul.mubr.bf16.gmra.mrb[0].mxu0 %v3848
        %v3959 = vpop.f32.mrb[0].mxu0
        %v3960 = vadd.f32 0.0, %v3959
        %v3961 = vpop.f32.mrb[0].mxu0
        %v3962 = vpop.f32.mrb[0].mxu0
        %v3963 = vadd.f32 0.0, %v3962
        %v3964 = vpop.f32.mrb[0].mxu0
        %3965 = vmatprep.mubr.bf16.mxu0 0
        %3966 = vmatmul.mubr.bf16.gmra.mrb[0].mxu0 %v3851
        %v3967 = vpop.f32.mrb[0].mxu0
        %v3968 = vadd.f32 0.0, %v3967
        %v3969 = vpop.f32.mrb[0].mxu0
        %v3970 = vpop.f32.mrb[0].mxu0
        %v3971 = vadd.f32 0.0, %v3970
        %v3972 = vpop.f32.mrb[0].mxu0
        %3973 = vmatprep.mubr.bf16.mxu0 0
        %3974 = vmatmul.mubr.bf16.gmra.mrb[0].mxu0 %v3854
        %v3975 = vpop.f32.mrb[0].mxu0
        %v3976 = vadd.f32 0.0, %v3975
        %v3977 = vpop.f32.mrb[0].mxu0
        %v3978 = vpop.f32.mrb[0].mxu0
        %v3979 = vadd.f32 0.0, %v3978
        %v3980 = vpop.f32.mrb[0].mxu0
        %3981 = vmatprep.mubr.bf16.mxu0 0
        %3982 = vmatmul.mubr.bf16.gmra.mrb[0].mxu0 %v3857
        %v3983 = vpop.f32.mrb[0].mxu0
        %v3984 = vadd.f32 0.0, %v3983
        %v3985 = vpop.f32.mrb[0].mxu0
        %v3986 = vpop.f32.mrb[0].mxu0
        %v3987 = vadd.f32 0.0, %v3986
        %v3988 = vpop.f32.mrb[0].mxu0
        %3989 = vmatprep.mubr.bf16.mxu0 0
        %3990 = vmatmul.mubr.bf16.gmra.mrb[0].mxu0 %v3860
        %v3991 = vpop.f32.mrb[0].mxu0
        %v3992 = vadd.f32 0.0, %v3991
        %v3993 = vpop.f32.mrb[0].mxu0
        %v3994 = vpop.f32.mrb[0].mxu0
        %v3995 = vadd.f32 0.0, %v3994
        %v3996 = vpop.f32.mrb[0].mxu0
        %3997 = vmatprep.mubr.bf16.mxu0 0
        %3998 = vmatmul.mubr.bf16.gmra.mrb[0].mxu0 %v3863
        %v3999 = vpop.f32.mrb[0].mxu0
        %v4000 = vadd.f32 0.0, %v3999
        %v4001 = vpop.f32.mrb[0].mxu0
        %v4002 = vpop.f32.mrb[0].mxu0
        %v4003 = vadd.f32 0.0, %v4002
        %v4004 = vpop.f32.mrb[0].mxu0
        %4005 = vmatprep.mubr.bf16.mxu0 0
        %4006 = vmatmul.mubr.bf16.gmra.mrb[0].mxu0 %v3866
        %v4007 = vpop.f32.mrb[0].mxu0
        %v4008 = vadd.f32 0.0, %v4007
        %v4009 = vpop.f32.mrb[0].mxu0
        %v4010 = vpop.f32.mrb[0].mxu0
        %v4011 = vadd.f32 0.0, %v4010
        %v4012 = vpop.f32.mrb[0].mxu0
        %4013 = vmatprep.mubr.bf16.mxu0 0
        %4014 = vmatmul.mubr.bf16.gmra.mrb[0].mxu0 %v3869
        %v4015 = vpop.f32.mrb[0].mxu0
        %v4016 = vadd.f32 0.0, %v4015
        %v4017 = vpop.f32.mrb[0].mxu0
        %v4018 = vpop.f32.mrb[0].mxu0
        %v4019 = vadd.f32 0.0, %v4018
        %v4020 = vpop.f32.mrb[0].mxu0
        %4021 = vmatprep.mubr.bf16.mxu0 0
        %4022 = vmatmul.mubr.bf16.gmra.mrb[0].mxu0 %v3872
        %v4023 = vpop.f32.mrb[0].mxu0
        %v4024 = vadd.f32 0.0, %v4023
        %v4025 = vpop.f32.mrb[0].mxu0
        %v4026 = vpop.f32.mrb[0].mxu0
        %v4027 = vadd.f32 0.0, %v4026
        %v4028 = vpop.f32.mrb[0].mxu0
        %4029 = vmatprep.mubr.bf16.mxu0 0
        %4030 = vmatmul.mubr.bf16.gmra.mrb[0].mxu0 %v3875
        %v4031 = vpop.f32.mrb[0].mxu0
        %v4032 = vadd.f32 0.0, %v4031
        %v4033 = vpop.f32.mrb[0].mxu0
        %v4034 = vpop.f32.mrb[0].mxu0
        %v4035 = vadd.f32 0.0, %v4034
        %v4036 = vpop.f32.mrb[0].mxu0
        %4037 = vdwg.mxu0
        %v4040 = vunpack.c.l.b16 %v3604
        %v4041 = vunpack.c.l.b16 %v3605
        %v4042 = vpack.c.b16 %v4041, %v4040
        %v4045 = vsel %vm577, %v3366, 0
        %v4048 = vsel %vm577, %v3367, 0
        %v4051 = vsel %vm577, %v3368, 0
        %v4054 = vsel %vm577, %v3369, 0
        %v4057 = vsel %vm577, %v3370, 0
        %v4060 = vsel %vm577, %v3371, 0
        %v4063 = vsel %vm577, %v3372, 0
        %v4066 = vsel %vm577, %v3373, 0
        %v4069 = vsel %vm577, %v3374, 0
        %v4072 = vsel %vm577, %v3375, 0
        %v4075 = vsel %vm577, %v3376, 0
        %v4078 = vsel %vm577, %v3377, 0
        %v4081 = vsel %vm577, %v3378, 0
        %v4084 = vsel %vm577, %v3379, 0
        %v4087 = vsel %vm577, %v3380, 0
        %v4090 = vsel %vm577, %v3381, 0
        %4092 = vmatprep.subr.bf16.mxu0 0
        %4093 = vmatpush1.bf16.msra.mxu0 %v4042
        %4094 = vmatprep.subr.bf16.mxu0 0
        %4095 = vmatpush1.bf16.msra.mxu0 0
        %4096 = vmatprep.subr.bf16.mxu0 0
        %4097 = vmatpush1.bf16.msra.mxu0 0
        %4098 = vmatprep.subr.bf16.mxu0 0
        %4099 = vmatpush1.bf16.msra.mxu0 0
        %4100 = vmatprep.subr.bf16.mxu0 0
        %4101 = vmatpush1.bf16.msra.mxu0 0
        %4102 = vmatprep.subr.bf16.mxu0 0
        %4103 = vmatpush1.bf16.msra.mxu0 0
        %4104 = vmatprep.subr.bf16.mxu0 0
        %4105 = vmatpush1.bf16.msra.mxu0 0
        %4106 = vmatprep.subr.bf16.mxu0 0
        %4107 = vmatpush1.bf16.msra.mxu0 0
        %4108 = vmatprep.subr.bf16.mxu0 0
        %4109 = vmatpush1.bf16.msra.mxu0 0
        %4110 = vmatprep.subr.bf16.mxu0 0
        %4111 = vmatpush1.bf16.msra.mxu0 0
        %4112 = vmatprep.subr.bf16.mxu0 0
        %4113 = vmatpush1.bf16.msra.mxu0 0
        %4114 = vmatprep.subr.bf16.mxu0 0
        %4115 = vmatpush1.bf16.msra.mxu0 0
        %4116 = vmatprep.subr.bf16.mxu0 0
        %4117 = vmatpush1.bf16.msra.mxu0 0
        %4118 = vmatprep.subr.bf16.mxu0 0
        %4119 = vmatpush1.bf16.msra.mxu0 0
        %4120 = vmatprep.subr.bf16.mxu0 0
        %4121 = vmatpush1.bf16.msra.mxu0 0
        %4122 = vmatprep.subr.bf16.mxu0 0
        %4123 = vmatpush1.bf16.msra.mxu0 0
        %4124 = vmatprep.mubr.bf16.mxu0 0
        %4125 = vmatmul.mubr.bf16.gmra.mrb[0].mxu0 %v4045
        %v4126 = vpop.f32.mrb[0].mxu0
        %v4127 = vadd.f32 0.0, %v4126
        %v4128 = vpop.f32.mrb[0].mxu0
        %v4129 = vpop.f32.mrb[0].mxu0
        %v4130 = vadd.f32 0.0, %v4129
        %v4131 = vpop.f32.mrb[0].mxu0
        %4132 = vmatprep.mubr.bf16.mxu0 0
        %4133 = vmatmul.mubr.bf16.gmra.mrb[0].mxu0 %v4048
        %v4134 = vpop.f32.mrb[0].mxu0
        %v4135 = vadd.f32 0.0, %v4134
        %v4136 = vpop.f32.mrb[0].mxu0
        %v4137 = vpop.f32.mrb[0].mxu0
        %v4138 = vadd.f32 0.0, %v4137
        %v4139 = vpop.f32.mrb[0].mxu0
        %4140 = vmatprep.mubr.bf16.mxu0 0
        %4141 = vmatmul.mubr.bf16.gmra.mrb[0].mxu0 %v4051
        %v4142 = vpop.f32.mrb[0].mxu0
        %v4143 = vadd.f32 0.0, %v4142
        %v4144 = vpop.f32.mrb[0].mxu0
        %v4145 = vpop.f32.mrb[0].mxu0
        %v4146 = vadd.f32 0.0, %v4145
        %v4147 = vpop.f32.mrb[0].mxu0
        %4148 = vmatprep.mubr.bf16.mxu0 0
        %4149 = vmatmul.mubr.bf16.gmra.mrb[0].mxu0 %v4054
        %v4150 = vpop.f32.mrb[0].mxu0
        %v4151 = vadd.f32 0.0, %v4150
        %v4152 = vpop.f32.mrb[0].mxu0
        %v4153 = vpop.f32.mrb[0].mxu0
        %v4154 = vadd.f32 0.0, %v4153
        %v4155 = vpop.f32.mrb[0].mxu0
        %4156 = vmatprep.mubr.bf16.mxu0 0
        %4157 = vmatmul.mubr.bf16.gmra.mrb[0].mxu0 %v4057
        %v4158 = vpop.f32.mrb[0].mxu0
        %v4159 = vadd.f32 0.0, %v4158
        %v4160 = vpop.f32.mrb[0].mxu0
        %v4161 = vpop.f32.mrb[0].mxu0
        %v4162 = vadd.f32 0.0, %v4161
        %v4163 = vpop.f32.mrb[0].mxu0
        %4164 = vmatprep.mubr.bf16.mxu0 0
        %4165 = vmatmul.mubr.bf16.gmra.mrb[0].mxu0 %v4060
        %v4166 = vpop.f32.mrb[0].mxu0
        %v4167 = vadd.f32 0.0, %v4166
        %v4168 = vpop.f32.mrb[0].mxu0
        %v4169 = vpop.f32.mrb[0].mxu0
        %v4170 = vadd.f32 0.0, %v4169
        %v4171 = vpop.f32.mrb[0].mxu0
        %4172 = vmatprep.mubr.bf16.mxu0 0
        %4173 = vmatmul.mubr.bf16.gmra.mrb[0].mxu0 %v4063
        %v4174 = vpop.f32.mrb[0].mxu0
        %v4175 = vadd.f32 0.0, %v4174
        %v4176 = vpop.f32.mrb[0].mxu0
        %v4177 = vpop.f32.mrb[0].mxu0
        %v4178 = vadd.f32 0.0, %v4177
        %v4179 = vpop.f32.mrb[0].mxu0
        %4180 = vmatprep.mubr.bf16.mxu0 0
        %4181 = vmatmul.mubr.bf16.gmra.mrb[0].mxu0 %v4066
        %v4182 = vpop.f32.mrb[0].mxu0
        %v4183 = vadd.f32 0.0, %v4182
        %v4184 = vpop.f32.mrb[0].mxu0
        %v4185 = vpop.f32.mrb[0].mxu0
        %v4186 = vadd.f32 0.0, %v4185
        %v4187 = vpop.f32.mrb[0].mxu0
        %4188 = vmatprep.mubr.bf16.mxu0 0
        %4189 = vmatmul.mubr.bf16.gmra.mrb[0].mxu0 %v4069
        %v4190 = vpop.f32.mrb[0].mxu0
        %v4191 = vadd.f32 0.0, %v4190
        %v4192 = vpop.f32.mrb[0].mxu0
        %v4193 = vpop.f32.mrb[0].mxu0
        %v4194 = vadd.f32 0.0, %v4193
        %v4195 = vpop.f32.mrb[0].mxu0
        %4196 = vmatprep.mubr.bf16.mxu0 0
        %4197 = vmatmul.mubr.bf16.gmra.mrb[0].mxu0 %v4072
        %v4198 = vpop.f32.mrb[0].mxu0
        %v4199 = vadd.f32 0.0, %v4198
        %v4200 = vpop.f32.mrb[0].mxu0
        %v4201 = vpop.f32.mrb[0].mxu0
        %v4202 = vadd.f32 0.0, %v4201
        %v4203 = vpop.f32.mrb[0].mxu0
        %4204 = vmatprep.mubr.bf16.mxu0 0
        %4205 = vmatmul.mubr.bf16.gmra.mrb[0].mxu0 %v4075
        %v4206 = vpop.f32.mrb[0].mxu0
        %v4207 = vadd.f32 0.0, %v4206
        %v4208 = vpop.f32.mrb[0].mxu0
        %v4209 = vpop.f32.mrb[0].mxu0
        %v4210 = vadd.f32 0.0, %v4209
        %v4211 = vpop.f32.mrb[0].mxu0
        %4212 = vmatprep.mubr.bf16.mxu0 0
        %4213 = vmatmul.mubr.bf16.gmra.mrb[0].mxu0 %v4078
        %v4214 = vpop.f32.mrb[0].mxu0
        %v4215 = vadd.f32 0.0, %v4214
        %v4216 = vpop.f32.mrb[0].mxu0
        %v4217 = vpop.f32.mrb[0].mxu0
        %v4218 = vadd.f32 0.0, %v4217
        %v4219 = vpop.f32.mrb[0].mxu0
        %4220 = vmatprep.mubr.bf16.mxu0 0
        %4221 = vmatmul.mubr.bf16.gmra.mrb[0].mxu0 %v4081
        %v4222 = vpop.f32.mrb[0].mxu0
        %v4223 = vadd.f32 0.0, %v4222
        %v4224 = vpop.f32.mrb[0].mxu0
        %v4225 = vpop.f32.mrb[0].mxu0
        %v4226 = vadd.f32 0.0, %v4225
        %v4227 = vpop.f32.mrb[0].mxu0
        %4228 = vmatprep.mubr.bf16.mxu0 0
        %4229 = vmatmul.mubr.bf16.gmra.mrb[0].mxu0 %v4084
        %v4230 = vpop.f32.mrb[0].mxu0
        %v4231 = vadd.f32 0.0, %v4230
        %v4232 = vpop.f32.mrb[0].mxu0
        %v4233 = vpop.f32.mrb[0].mxu0
        %v4234 = vadd.f32 0.0, %v4233
        %v4235 = vpop.f32.mrb[0].mxu0
        %4236 = vmatprep.mubr.bf16.mxu0 0
        %4237 = vmatmul.mubr.bf16.gmra.mrb[0].mxu0 %v4087
        %v4238 = vpop.f32.mrb[0].mxu0
        %v4239 = vadd.f32 0.0, %v4238
        %v4240 = vpop.f32.mrb[0].mxu0
        %v4241 = vpop.f32.mrb[0].mxu0
        %v4242 = vadd.f32 0.0, %v4241
        %v4243 = vpop.f32.mrb[0].mxu0
        %4244 = vmatprep.mubr.bf16.mxu0 0
        %4245 = vmatmul.mubr.bf16.gmra.mrb[0].mxu0 %v4090
        %v4246 = vpop.f32.mrb[0].mxu0
        %v4247 = vadd.f32 0.0, %v4246
        %v4248 = vpop.f32.mrb[0].mxu0
        %v4249 = vpop.f32.mrb[0].mxu0
        %v4250 = vadd.f32 0.0, %v4249
        %v4251 = vpop.f32.mrb[0].mxu0
        %4252 = vdwg.mxu0
        %v4255 = vunpack.c.l.b16 %v3606
        %v4256 = vunpack.c.l.b16 %v3607
        %v4257 = vpack.c.b16 %v4256, %v4255
        %v4260 = vsel %vm577, %v3584, 0
        %v4263 = vsel %vm577, %v3585, 0
        %v4266 = vsel %vm577, %v3586, 0
        %v4269 = vsel %vm577, %v3587, 0
        %v4272 = vsel %vm577, %v3588, 0
        %v4275 = vsel %vm577, %v3589, 0
        %v4278 = vsel %vm577, %v3590, 0
        %v4281 = vsel %vm577, %v3591, 0
        %v4284 = vsel %vm577, %v3592, 0
        %v4287 = vsel %vm577, %v3593, 0
        %v4290 = vsel %vm577, %v3594, 0
        %v4293 = vsel %vm577, %v3595, 0
        %v4296 = vsel %vm577, %v3596, 0
        %v4299 = vsel %vm577, %v3597, 0
        %v4302 = vsel %vm577, %v3598, 0
        %v4305 = vsel %vm577, %v3599, 0
        %4307 = vmatprep.subr.bf16.mxu0 0
        %4308 = vmatpush1.bf16.msra.mxu0 %v4257
        %4309 = vmatprep.subr.bf16.mxu0 0
        %4310 = vmatpush1.bf16.msra.mxu0 0
        %4311 = vmatprep.subr.bf16.mxu0 0
        %4312 = vmatpush1.bf16.msra.mxu0 0
        %4313 = vmatprep.subr.bf16.mxu0 0
        %4314 = vmatpush1.bf16.msra.mxu0 0
        %4315 = vmatprep.subr.bf16.mxu0 0
        %4316 = vmatpush1.bf16.msra.mxu0 0
        %4317 = vmatprep.subr.bf16.mxu0 0
        %4318 = vmatpush1.bf16.msra.mxu0 0
        %4319 = vmatprep.subr.bf16.mxu0 0
        %4320 = vmatpush1.bf16.msra.mxu0 0
        %4321 = vmatprep.subr.bf16.mxu0 0
        %4322 = vmatpush1.bf16.msra.mxu0 0
        %4323 = vmatprep.subr.bf16.mxu0 0
        %4324 = vmatpush1.bf16.msra.mxu0 0
        %4325 = vmatprep.subr.bf16.mxu0 0
        %4326 = vmatpush1.bf16.msra.mxu0 0
        %4327 = vmatprep.subr.bf16.mxu0 0
        %4328 = vmatpush1.bf16.msra.mxu0 0
        %4329 = vmatprep.subr.bf16.mxu0 0
        %4330 = vmatpush1.bf16.msra.mxu0 0
        %4331 = vmatprep.subr.bf16.mxu0 0
        %4332 = vmatpush1.bf16.msra.mxu0 0
        %4333 = vmatprep.subr.bf16.mxu0 0
        %4334 = vmatpush1.bf16.msra.mxu0 0
        %4335 = vmatprep.subr.bf16.mxu0 0
        %4336 = vmatpush1.bf16.msra.mxu0 0
        %4337 = vmatprep.subr.bf16.mxu0 0
        %4338 = vmatpush1.bf16.msra.mxu0 0
        %4339 = vmatprep.mubr.bf16.mxu0 0
        %4340 = vmatmul.mubr.bf16.gmra.mrb[0].mxu0 %v4260
        %v4341 = vpop.f32.mrb[0].mxu0
        %v4342 = vadd.f32 0.0, %v4341
        %v4343 = vpop.f32.mrb[0].mxu0
        %v4344 = vpop.f32.mrb[0].mxu0
        %v4345 = vadd.f32 0.0, %v4344
        %v4346 = vpop.f32.mrb[0].mxu0
        %4347 = vmatprep.mubr.bf16.mxu0 0
        %4348 = vmatmul.mubr.bf16.gmra.mrb[0].mxu0 %v4263
        %v4349 = vpop.f32.mrb[0].mxu0
        %v4350 = vadd.f32 0.0, %v4349
        %v4351 = vpop.f32.mrb[0].mxu0
        %v4352 = vpop.f32.mrb[0].mxu0
        %v4353 = vadd.f32 0.0, %v4352
        %v4354 = vpop.f32.mrb[0].mxu0
        %4355 = vmatprep.mubr.bf16.mxu0 0
        %4356 = vmatmul.mubr.bf16.gmra.mrb[0].mxu0 %v4266
        %v4357 = vpop.f32.mrb[0].mxu0
        %v4358 = vadd.f32 0.0, %v4357
        %v4359 = vpop.f32.mrb[0].mxu0
        %v4360 = vpop.f32.mrb[0].mxu0
        %v4361 = vadd.f32 0.0, %v4360
        %v4362 = vpop.f32.mrb[0].mxu0
        %4363 = vmatprep.mubr.bf16.mxu0 0
        %4364 = vmatmul.mubr.bf16.gmra.mrb[0].mxu0 %v4269
        %v4365 = vpop.f32.mrb[0].mxu0
        %v4366 = vadd.f32 0.0, %v4365
        %v4367 = vpop.f32.mrb[0].mxu0
        %v4368 = vpop.f32.mrb[0].mxu0
        %v4369 = vadd.f32 0.0, %v4368
        %v4370 = vpop.f32.mrb[0].mxu0
        %4371 = vmatprep.mubr.bf16.mxu0 0
        %4372 = vmatmul.mubr.bf16.gmra.mrb[0].mxu0 %v4272
        %v4373 = vpop.f32.mrb[0].mxu0
        %v4374 = vadd.f32 0.0, %v4373
        %v4375 = vpop.f32.mrb[0].mxu0
        %v4376 = vpop.f32.mrb[0].mxu0
        %v4377 = vadd.f32 0.0, %v4376
        %v4378 = vpop.f32.mrb[0].mxu0
        %4379 = vmatprep.mubr.bf16.mxu0 0
        %4380 = vmatmul.mubr.bf16.gmra.mrb[0].mxu0 %v4275
        %v4381 = vpop.f32.mrb[0].mxu0
        %v4382 = vadd.f32 0.0, %v4381
        %v4383 = vpop.f32.mrb[0].mxu0
        %v4384 = vpop.f32.mrb[0].mxu0
        %v4385 = vadd.f32 0.0, %v4384
        %v4386 = vpop.f32.mrb[0].mxu0
        %4387 = vmatprep.mubr.bf16.mxu0 0
        %4388 = vmatmul.mubr.bf16.gmra.mrb[0].mxu0 %v4278
        %v4389 = vpop.f32.mrb[0].mxu0
        %v4390 = vadd.f32 0.0, %v4389
        %v4391 = vpop.f32.mrb[0].mxu0
        %v4392 = vpop.f32.mrb[0].mxu0
        %v4393 = vadd.f32 0.0, %v4392
        %v4394 = vpop.f32.mrb[0].mxu0
        %4395 = vmatprep.mubr.bf16.mxu0 0
        %4396 = vmatmul.mubr.bf16.gmra.mrb[0].mxu0 %v4281
        %v4397 = vpop.f32.mrb[0].mxu0
        %v4398 = vadd.f32 0.0, %v4397
        %v4399 = vpop.f32.mrb[0].mxu0
        %v4400 = vpop.f32.mrb[0].mxu0
        %v4401 = vadd.f32 0.0, %v4400
        %v4402 = vpop.f32.mrb[0].mxu0
        %4403 = vmatprep.mubr.bf16.mxu0 0
        %4404 = vmatmul.mubr.bf16.gmra.mrb[0].mxu0 %v4284
        %v4405 = vpop.f32.mrb[0].mxu0
        %v4406 = vadd.f32 0.0, %v4405
        %v4407 = vpop.f32.mrb[0].mxu0
        %v4408 = vpop.f32.mrb[0].mxu0
        %v4409 = vadd.f32 0.0, %v4408
        %v4410 = vpop.f32.mrb[0].mxu0
        %4411 = vmatprep.mubr.bf16.mxu0 0
        %4412 = vmatmul.mubr.bf16.gmra.mrb[0].mxu0 %v4287
        %v4413 = vpop.f32.mrb[0].mxu0
        %v4414 = vadd.f32 0.0, %v4413
        %v4415 = vpop.f32.mrb[0].mxu0
        %v4416 = vpop.f32.mrb[0].mxu0
        %v4417 = vadd.f32 0.0, %v4416
        %v4418 = vpop.f32.mrb[0].mxu0
        %4419 = vmatprep.mubr.bf16.mxu0 0
        %4420 = vmatmul.mubr.bf16.gmra.mrb[0].mxu0 %v4290
        %v4421 = vpop.f32.mrb[0].mxu0
        %v4422 = vadd.f32 0.0, %v4421
        %v4423 = vpop.f32.mrb[0].mxu0
        %v4424 = vpop.f32.mrb[0].mxu0
        %v4425 = vadd.f32 0.0, %v4424
        %v4426 = vpop.f32.mrb[0].mxu0
        %4427 = vmatprep.mubr.bf16.mxu0 0
        %4428 = vmatmul.mubr.bf16.gmra.mrb[0].mxu0 %v4293
        %v4429 = vpop.f32.mrb[0].mxu0
        %v4430 = vadd.f32 0.0, %v4429
        %v4431 = vpop.f32.mrb[0].mxu0
        %v4432 = vpop.f32.mrb[0].mxu0
        %v4433 = vadd.f32 0.0, %v4432
        %v4434 = vpop.f32.mrb[0].mxu0
        %4435 = vmatprep.mubr.bf16.mxu0 0
        %4436 = vmatmul.mubr.bf16.gmra.mrb[0].mxu0 %v4296
        %v4437 = vpop.f32.mrb[0].mxu0
        %v4438 = vadd.f32 0.0, %v4437
        %v4439 = vpop.f32.mrb[0].mxu0
        %v4440 = vpop.f32.mrb[0].mxu0
        %v4441 = vadd.f32 0.0, %v4440
        %v4442 = vpop.f32.mrb[0].mxu0
        %4443 = vmatprep.mubr.bf16.mxu0 0
        %4444 = vmatmul.mubr.bf16.gmra.mrb[0].mxu0 %v4299
        %v4445 = vpop.f32.mrb[0].mxu0
        %v4446 = vadd.f32 0.0, %v4445
        %v4447 = vpop.f32.mrb[0].mxu0
        %v4448 = vpop.f32.mrb[0].mxu0
        %v4449 = vadd.f32 0.0, %v4448
        %v4450 = vpop.f32.mrb[0].mxu0
        %4451 = vmatprep.mubr.bf16.mxu0 0
        %4452 = vmatmul.mubr.bf16.gmra.mrb[0].mxu0 %v4302
        %v4453 = vpop.f32.mrb[0].mxu0
        %v4454 = vadd.f32 0.0, %v4453
        %v4455 = vpop.f32.mrb[0].mxu0
        %v4456 = vpop.f32.mrb[0].mxu0
        %v4457 = vadd.f32 0.0, %v4456
        %v4458 = vpop.f32.mrb[0].mxu0
        %4459 = vmatprep.mubr.bf16.mxu0 0
        %4460 = vmatmul.mubr.bf16.gmra.mrb[0].mxu0 %v4305
        %v4461 = vpop.f32.mrb[0].mxu0
        %v4462 = vadd.f32 0.0, %v4461
        %v4463 = vpop.f32.mrb[0].mxu0
        %v4464 = vpop.f32.mrb[0].mxu0
        %v4465 = vadd.f32 0.0, %v4464
        %v4466 = vpop.f32.mrb[0].mxu0
        %4467 = vdwg.mxu0
        %v4468 = vadd.f32 %v3697, %v3912
        %v4469 = vadd.f32 %v3700, %v3915
        %v4470 = vadd.f32 %v3705, %v3920
        %v4471 = vadd.f32 %v3708, %v3923
        %v4472 = vadd.f32 %v3713, %v3928
        %v4473 = vadd.f32 %v3716, %v3931
        %v4474 = vadd.f32 %v3721, %v3936
        %v4475 = vadd.f32 %v3724, %v3939
        %v4476 = vadd.f32 %v3729, %v3944
        %v4477 = vadd.f32 %v3732, %v3947
        %v4478 = vadd.f32 %v3737, %v3952
        %v4479 = vadd.f32 %v3740, %v3955
        %v4480 = vadd.f32 %v3745, %v3960
        %v4481 = vadd.f32 %v3748, %v3963
        %v4482 = vadd.f32 %v3753, %v3968
        %v4483 = vadd.f32 %v3756, %v3971
        %v4484 = vadd.f32 %v3761, %v3976
        %v4485 = vadd.f32 %v3764, %v3979
        %v4486 = vadd.f32 %v3769, %v3984
        %v4487 = vadd.f32 %v3772, %v3987
        %v4488 = vadd.f32 %v3777, %v3992
        %v4489 = vadd.f32 %v3780, %v3995
        %v4490 = vadd.f32 %v3785, %v4000
        %v4491 = vadd.f32 %v3788, %v4003
        %v4492 = vadd.f32 %v3793, %v4008
        %v4493 = vadd.f32 %v3796, %v4011
        %v4494 = vadd.f32 %v3801, %v4016
        %v4495 = vadd.f32 %v3804, %v4019
        %v4496 = vadd.f32 %v3809, %v4024
        %v4497 = vadd.f32 %v3812, %v4027
        %v4498 = vadd.f32 %v3817, %v4032
        %v4499 = vadd.f32 %v3820, %v4035
        %v4500 = vadd.f32 %v4468, %v4127
        %v4501 = vadd.f32 %v4469, %v4130
        %v4502 = vadd.f32 %v4470, %v4135
        %v4503 = vadd.f32 %v4471, %v4138
        %v4504 = vadd.f32 %v4472, %v4143
        %v4505 = vadd.f32 %v4473, %v4146
        %v4506 = vadd.f32 %v4474, %v4151
        %v4507 = vadd.f32 %v4475, %v4154
        %v4508 = vadd.f32 %v4476, %v4159
        %v4509 = vadd.f32 %v4477, %v4162
        %v4510 = vadd.f32 %v4478, %v4167
        %v4511 = vadd.f32 %v4479, %v4170
        %v4512 = vadd.f32 %v4480, %v4175
        %v4513 = vadd.f32 %v4481, %v4178
        %v4514 = vadd.f32 %v4482, %v4183
        %v4515 = vadd.f32 %v4483, %v4186
        %v4516 = vadd.f32 %v4484, %v4191
        %v4517 = vadd.f32 %v4485, %v4194
        %v4518 = vadd.f32 %v4486, %v4199
        %v4519 = vadd.f32 %v4487, %v4202
        %v4520 = vadd.f32 %v4488, %v4207
        %v4521 = vadd.f32 %v4489, %v4210
        %v4522 = vadd.f32 %v4490, %v4215
        %v4523 = vadd.f32 %v4491, %v4218
        %v4524 = vadd.f32 %v4492, %v4223
        %v4525 = vadd.f32 %v4493, %v4226
        %v4526 = vadd.f32 %v4494, %v4231
        %v4527 = vadd.f32 %v4495, %v4234
        %v4528 = vadd.f32 %v4496, %v4239
        %v4529 = vadd.f32 %v4497, %v4242
        %v4530 = vadd.f32 %v4498, %v4247
        %v4531 = vadd.f32 %v4499, %v4250
        %v4532 = vadd.f32 %v4500, %v4342
        %v4533 = vadd.f32 %v4501, %v4345
        %v4534 = vadd.f32 %v4502, %v4350
        %v4535 = vadd.f32 %v4503, %v4353
        %v4536 = vadd.f32 %v4504, %v4358
        %v4537 = vadd.f32 %v4505, %v4361
        %v4538 = vadd.f32 %v4506, %v4366
        %v4539 = vadd.f32 %v4507, %v4369
        %v4540 = vadd.f32 %v4508, %v4374
        %v4541 = vadd.f32 %v4509, %v4377
        %v4542 = vadd.f32 %v4510, %v4382
        %v4543 = vadd.f32 %v4511, %v4385
        %v4544 = vadd.f32 %v4512, %v4390
        %v4545 = vadd.f32 %v4513, %v4393
        %v4546 = vadd.f32 %v4514, %v4398
        %v4547 = vadd.f32 %v4515, %v4401
        %v4548 = vadd.f32 %v4516, %v4406
        %v4549 = vadd.f32 %v4517, %v4409
        %v4550 = vadd.f32 %v4518, %v4414
        %v4551 = vadd.f32 %v4519, %v4417
        %v4552 = vadd.f32 %v4520, %v4422
        %v4553 = vadd.f32 %v4521, %v4425
        %v4554 = vadd.f32 %v4522, %v4430
        %v4555 = vadd.f32 %v4523, %v4433
        %v4556 = vadd.f32 %v4524, %v4438
        %v4557 = vadd.f32 %v4525, %v4441
        %v4558 = vadd.f32 %v4526, %v4446
        %v4559 = vadd.f32 %v4527, %v4449
        %v4560 = vadd.f32 %v4528, %v4454
        %v4561 = vadd.f32 %v4529, %v4457
        %v4562 = vadd.f32 %v4530, %v4462
        %v4563 = vadd.f32 %v4531, %v4465
        %v4564 = vld [vmem:[%s10] sm:$0x1]
        %v4566 = vlaneseq
        %v4567 = vshrl.u32 %v4566, 7
        %v4568 = vsub.s32 0, %v4567
        %v4569 = vrot.slane %v4564, %v4568
        %v4571 = vadd.f32 %v4532, %v4569
        %v4572 = vadd.f32 %v4533, %v4569
        %v4573 = vadd.f32 %v4534, %v4569
        %v4574 = vadd.f32 %v4535, %v4569
        %v4575 = vadd.f32 %v4536, %v4569
        %v4576 = vadd.f32 %v4537, %v4569
        %v4577 = vadd.f32 %v4538, %v4569
        %v4578 = vadd.f32 %v4539, %v4569
        %v4579 = vadd.f32 %v4540, %v4569
        %v4580 = vadd.f32 %v4541, %v4569
        %v4581 = vadd.f32 %v4542, %v4569
        %v4582 = vadd.f32 %v4543, %v4569
        %v4583 = vadd.f32 %v4544, %v4569
        %v4584 = vadd.f32 %v4545, %v4569
        %v4585 = vadd.f32 %v4546, %v4569
        %v4586 = vadd.f32 %v4547, %v4569
        %v4587 = vadd.f32 %v4548, %v4569
        %v4588 = vadd.f32 %v4549, %v4569
        %v4589 = vadd.f32 %v4550, %v4569
        %v4590 = vadd.f32 %v4551, %v4569
        %v4591 = vadd.f32 %v4552, %v4569
        %v4592 = vadd.f32 %v4553, %v4569
        %v4593 = vadd.f32 %v4554, %v4569
        %v4594 = vadd.f32 %v4555, %v4569
        %v4595 = vadd.f32 %v4556, %v4569
        %v4596 = vadd.f32 %v4557, %v4569
        %v4597 = vadd.f32 %v4558, %v4569
        %v4598 = vadd.f32 %v4559, %v4569
        %v4599 = vadd.f32 %v4560, %v4569
        %v4600 = vadd.f32 %v4561, %v4569
        %v4601 = vadd.f32 %v4562, %v4569
        %v4602 = vadd.f32 %v4563, %v4569
        %v4603 = vmax.f32 %v4571, 0.0
        %v4604 = vmax.f32 %v4572, 0.0
        %v4605 = vmax.f32 %v4573, 0.0
        %v4606 = vmax.f32 %v4574, 0.0
        %v4607 = vmax.f32 %v4575, 0.0
        %v4608 = vmax.f32 %v4576, 0.0
        %v4609 = vmax.f32 %v4577, 0.0
        %v4610 = vmax.f32 %v4578, 0.0
        %v4611 = vmax.f32 %v4579, 0.0
        %v4612 = vmax.f32 %v4580, 0.0
        %v4613 = vmax.f32 %v4581, 0.0
        %v4614 = vmax.f32 %v4582, 0.0
        %v4615 = vmax.f32 %v4583, 0.0
        %v4616 = vmax.f32 %v4584, 0.0
        %v4617 = vmax.f32 %v4585, 0.0
        %v4618 = vmax.f32 %v4586, 0.0
        %v4619 = vmax.f32 %v4587, 0.0
        %v4620 = vmax.f32 %v4588, 0.0
        %v4621 = vmax.f32 %v4589, 0.0
        %v4622 = vmax.f32 %v4590, 0.0
        %v4623 = vmax.f32 %v4591, 0.0
        %v4624 = vmax.f32 %v4592, 0.0
        %v4625 = vmax.f32 %v4593, 0.0
        %v4626 = vmax.f32 %v4594, 0.0
        %v4627 = vmax.f32 %v4595, 0.0
        %v4628 = vmax.f32 %v4596, 0.0
        %v4629 = vmax.f32 %v4597, 0.0
        %v4630 = vmax.f32 %v4598, 0.0
        %v4631 = vmax.f32 %v4599, 0.0
        %v4632 = vmax.f32 %v4600, 0.0
        %v4633 = vmax.f32 %v4601, 0.0
        %v4634 = vmax.f32 %v4602, 0.0
        %v4635 = vld [vmem:[%s11] sm:$0x1]
        %v4637 = vsel %vm577, %v4635, 0
        %v4640 = vsel %vm577, %v4603, 0
        %v4643 = vsel %vm577, %v4604, 0
        %v4646 = vsel %vm577, %v4605, 0
        %v4649 = vsel %vm577, %v4606, 0
        %v4652 = vsel %vm577, %v4607, 0
        %v4655 = vsel %vm577, %v4608, 0
        %v4658 = vsel %vm577, %v4609, 0
        %v4661 = vsel %vm577, %v4610, 0
        %v4664 = vsel %vm577, %v4611, 0
        %v4667 = vsel %vm577, %v4612, 0
        %v4670 = vsel %vm577, %v4613, 0
        %v4673 = vsel %vm577, %v4614, 0
        %v4676 = vsel %vm577, %v4615, 0
        %v4679 = vsel %vm577, %v4616, 0
        %v4682 = vsel %vm577, %v4617, 0
        %v4685 = vsel %vm577, %v4618, 0
        %v4688 = vsel %vm577, %v4619, 0
        %v4691 = vsel %vm577, %v4620, 0
        %v4694 = vsel %vm577, %v4621, 0
        %v4697 = vsel %vm577, %v4622, 0
        %v4700 = vsel %vm577, %v4623, 0
        %v4703 = vsel %vm577, %v4624, 0
        %v4706 = vsel %vm577, %v4625, 0
        %v4709 = vsel %vm577, %v4626, 0
        %v4712 = vsel %vm577, %v4627, 0
        %v4715 = vsel %vm577, %v4628, 0
        %v4718 = vsel %vm577, %v4629, 0
        %v4721 = vsel %vm577, %v4630, 0
        %v4724 = vsel %vm577, %v4631, 0
        %v4727 = vsel %vm577, %v4632, 0
        %v4730 = vsel %vm577, %v4633, 0
        %v4733 = vsel %vm577, %v4634, 0
        %4735 = vmatprep.subr.mxu0 0.0
        %4736 = vmatpush1.xpose.msra.mxu0 %v4640
        %4737 = vmatprep.subr.mxu0 0.0
        %4738 = vmatpush1.xpose.msra.mxu0 %v4643
        %4739 = vmatprep.subr.mxu0 0.0
        %4740 = vmatpush1.xpose.msra.mxu0 %v4646
        %4741 = vmatprep.subr.mxu0 0.0
        %4742 = vmatpush1.xpose.msra.mxu0 %v4649
        %4743 = vmatprep.subr.mxu0 0.0
        %4744 = vmatpush1.xpose.msra.mxu0 %v4652
        %4745 = vmatprep.subr.mxu0 0.0
        %4746 = vmatpush1.xpose.msra.mxu0 %v4655
        %4747 = vmatprep.subr.mxu0 0.0
        %4748 = vmatpush1.xpose.msra.mxu0 %v4658
        %4749 = vmatprep.subr.mxu0 0.0
        %4750 = vmatpush1.xpose.msra.mxu0 %v4661
        %4751 = vmatprep.subr.mxu0 0.0
        %4752 = vmatpush1.xpose.msra.mxu0 %v4664
        %4753 = vmatprep.subr.mxu0 0.0
        %4754 = vmatpush1.xpose.msra.mxu0 %v4667
        %4755 = vmatprep.subr.mxu0 0.0
        %4756 = vmatpush1.xpose.msra.mxu0 %v4670
        %4757 = vmatprep.subr.mxu0 0.0
        %4758 = vmatpush1.xpose.msra.mxu0 %v4673
        %4759 = vmatprep.subr.mxu0 0.0
        %4760 = vmatpush1.xpose.msra.mxu0 %v4676
        %4761 = vmatprep.subr.mxu0 0.0
        %4762 = vmatpush1.xpose.msra.mxu0 %v4679
        %4763 = vmatprep.subr.mxu0 0.0
        %4764 = vmatpush1.xpose.msra.mxu0 %v4682
        %4765 = vmatprep.subr.mxu0 0.0
        %4766 = vmatpush1.xpose.msra.mxu0 %v4685
        %4767 = vmatprep.subr.mxu0 0.0
        %4768 = vmatpush1.xpose.msra.mxu0 %v4688
        %4769 = vmatprep.subr.mxu0 0.0
        %4770 = vmatpush1.xpose.msra.mxu0 %v4691
        %4771 = vmatprep.subr.mxu0 0.0
        %4772 = vmatpush1.xpose.msra.mxu0 %v4694
        %4773 = vmatprep.subr.mxu0 0.0
        %4774 = vmatpush1.xpose.msra.mxu0 %v4697
        %4775 = vmatprep.subr.mxu0 0.0
        %4776 = vmatpush1.xpose.msra.mxu0 %v4700
        %4777 = vmatprep.subr.mxu0 0.0
        %4778 = vmatpush1.xpose.msra.mxu0 %v4703
        %4779 = vmatprep.subr.mxu0 0.0
        %4780 = vmatpush1.xpose.msra.mxu0 %v4706
        %4781 = vmatprep.subr.mxu0 0.0
        %4782 = vmatpush1.xpose.msra.mxu0 %v4709
        %4783 = vmatprep.subr.mxu0 0.0
        %4784 = vmatpush1.xpose.msra.mxu0 %v4712
        %4785 = vmatprep.subr.mxu0 0.0
        %4786 = vmatpush1.xpose.msra.mxu0 %v4715
        %4787 = vmatprep.subr.mxu0 0.0
        %4788 = vmatpush1.xpose.msra.mxu0 %v4718
        %4789 = vmatprep.subr.mxu0 0.0
        %4790 = vmatpush1.xpose.msra.mxu0 %v4721
        %4791 = vmatprep.subr.mxu0 0.0
        %4792 = vmatpush1.xpose.msra.mxu0 %v4724
        %4793 = vmatprep.subr.mxu0 0.0
        %4794 = vmatpush1.xpose.msra.mxu0 %v4727
        %4795 = vmatprep.subr.mxu0 0.0
        %4796 = vmatpush1.xpose.msra.mxu0 %v4730
        %4797 = vmatprep.subr.mxu0 0.0
        %4798 = vmatpush1.xpose.msra.mxu0 %v4733
        %4799 = vmatprep.mubr.f32.mxu0 0.0
        %4800 = vmatmul.mubr.f32.gmra.mrb[0].mxu0 %v4637
        %v4801 = vpop.f32.mrb[0].mxu0
        %v4802 = vadd.f32 0.0, %v4801
        %v4803 = vpop.f32.mrb[0].mxu0
        %v4804 = vadd.f32 0.0, %v4803
        %4805 = vdwg.mxu0
        %v4806 = vsub.f32 0.0, %v4802
        %v4807 = vsub.f32 0.0, %v4804
        %v4808 = vmul.f32 %v4806, 1.442695
        %v4809 = vpow.pop %v4808
        %v4810 = vmul.f32 %v4807, 1.442695
        %v4811 = vpow.pop %v4810
        %v4812 = vadd.f32 %v4809, 1.0
        %v4813 = vadd.f32 %v4811, 1.0
        %v4814 = vrcp.pop %v4812
        %v4815 = vmul.f32 1.0, %v4814
        %v4816 = vrcp.pop %v4813
        %v4817 = vmul.f32 1.0, %v4816
        %v4820 = vcombine.low %v4815, %v4817
        %v4822 = vunpack.c.l.s4 1966171168
        %v4823 = vunpack.c.0.s8 %v4822
        %v4824 = vlaneseq
        %v4825 = vshrl.u32 %v4824, 7
        %v4826 = vsub.s32 %v4823, %v4825
        %v4827 = vrot.slane %v4820, %v4826
        %v4829 = vunpack.c.l.s4 1966171168
        %v4830 = vunpack.c.0.s8 %v4829
        %v4831 = vlaneseq
        %v4832 = vshrl.u32 %v4831, 7
        %v4833 = vsub.s32 %v4830, %v4832
        %v4834 = vrot.slane %v4827, %v4833
        %v4836 = vlaneseq
        %vm4837 = vcmp.ge.s32.totalorder %v4836, 0
        %vm4838 = vcmp.lt.s32.totalorder %v4836, 256
        %vm4839 = vmand %vm4837, %vm4838
        %4840 = vst.msk [vmem:[%s406] sm:$0x3] %vm4839, %v4834
        %s4841 = sand.u32 %s291, 1
        %s4842 = scalar_lea.sflag [#allocation4], %s4841
        %s4843 = sand.u32 %s291, 1
        %s4844 = smul.addr %s4843, 2
        %s4845 = scalar_lea.vmem [#allocation3], %s4844
        // Predicated region
        $region69: #{tpu_custom_call.1} parent=67 // pred_check
          %p4846 = pneg %p301
        $region70: #{tpu_custom_call.1} parent=67 // pred_check_branch
          %4848 = sbr.rel (%p4846) target = $region72
        $region71: #{tpu_custom_call.1} parent=67 // pred_region
          %s4850 = ssub.s32 32, 32
          %4851 = vsyncadd %s4842, %s4850
          %s4852 = smul.addr %s26, 2
          %s4853 = smul.addr %s4852, 16
          %s4854 = scalar_lea.hbm %s12, %s4853
          %s4856 = sshll.u32 %s4845, 4
          %s4857 = int_to_ptr.vmem [resolvable:$true] %s4856
          %4859 = dma.vmem_to_hbm [thread:$0]  %s4857, 32, %s4854, %s4842
        $region72: #{tpu_custom_call.1} parent=67 // pred_fallthru
          _
      $region68: #{tpu_custom_call.1} parent=5 // pred_fallthru
        _
      %p4860 = scmp.le.s32.totalorder 2, %s21
      // Predicated region
      $region73: #{tpu_custom_call.1} parent=5 // pred_check
        %p4861 = pneg %p4860
      $region74: #{tpu_custom_call.1} parent=5 // pred_check_branch
        %4863 = sbr.rel (%p4861) target = $region76
      $region75: #{tpu_custom_call.1} parent=5 // pred_region
        %s4864 = ssub.s32 %s21, 2
        // Predicated region
        $region77: #{tpu_custom_call.1} parent=75 // pred_check
          %p4865 = pneg %p307
        $region78: #{tpu_custom_call.1} parent=75 // pred_check_branch
          %4867 = sbr.rel (%p4865) target = $region80
        $region79: #{tpu_custom_call.1} parent=75 // pred_region
          %s4868 = sand.u32 %s292, 1
          %s4869 = scalar_lea.sflag [#allocation4], %s4868
          %s4870 = sand.u32 %s292, 1
          %s4871 = smul.addr %s4870, 2
          %s4872 = scalar_lea.vmem [#allocation3], %s4871
          %4873 = dma.done %s4869, 32
        $region80: #{tpu_custom_call.1} parent=75 // pred_fallthru
          _
      $region76: #{tpu_custom_call.1} parent=5 // pred_fallthru
        _
    $region6: #{tpu_custom_call.1} parent=1 // loop_footer
      %s25 = sadd.s32 1, %s21
    $region7: #{tpu_custom_call.1} parent=1 // loop_footer_branch
      %20 = sbr.rel target = $region3
    $region8: #{tpu_custom_call.1} parent=1 // loop_exit
      _
    %4874 = vsyncpa [#allocation4], 1
    %s4875 = scalar_lea.sflag [#allocation4], 1
    %4876 = vsyncpa %s4875, 1

</llo_original>
